<compile_context>
chip_gen: v7x
topology: tpu7x:2x2x1
jax: 0.10.0
libtpu: 0.0.40
codegen_flags: <defaults>
</compile_context>

<pallas_src>
import math

import jax
import jax.numpy as jnp
import numpy as np
from jax import lax
from jax.experimental import pallas as pl
from jax.experimental.pallas import tpu as pltpu

_INV_SQRT2 = 1.0 / math.sqrt(2.0)
_CONV_STRIDES = (2, 1, 2, 1, 2)


def _gelu_exact(x):
    # matches torch.nn.GELU(approximate='none')
    return 0.5 * x * (1.0 + lax.erf(x * _INV_SQRT2))


# ----------------------------- Pallas kernel --------------------------------

def _conv3x3_gelu(act_bf16, r_ref, m_ref, b_ref):
    """One 3x3 / pad=1 conv + exact GELU on a (H, W*Cin) bf16 activation value.

    r_ref: (3, Ho, Hin) 0/1 row-selection (stride + zero row-padding baked in)
    m_ref: (3, Hin*Cin, Wo*Cout) lowered conv weights (kx taps, col stride, zero pad baked in)
    b_ref: (1, Wo*Cout) bias tiled over output columns (f32)
    """
    ho = r_ref.shape[1]
    n_out = m_ref.shape[2]
    acc = jnp.zeros((ho, n_out), jnp.float32)
    for ky in range(3):
        rows = jnp.dot(r_ref[ky], act_bf16, preferred_element_type=jnp.float32)
        acc = acc + jnp.dot(rows.astype(jnp.bfloat16), m_ref[ky],
                            preferred_element_type=jnp.float32)
    acc = acc + b_ref[...]
    return _gelu_exact(acc).astype(jnp.bfloat16)


def _encoder_kernel(*refs):
    # refs = [x, (R, M, b) * n_conv, WL, bL, z_out]
    n_conv = (len(refs) - 4) // 3
    x_ref = refs[0]
    conv_refs = [(refs[1 + 3 * i], refs[2 + 3 * i], refs[3 + 3 * i]) for i in range(n_conv)]
    wl_ref = refs[1 + 3 * n_conv]      # (Hf, Wf*Cf, latent) bf16, pre-permuted for NCHW flatten
    bl_ref = refs[2 + 3 * n_conv]      # (1, latent) f32
    z_ref = refs[3 + 3 * n_conv]       # (1, 1, latent)

    act = x_ref[0].astype(jnp.bfloat16)              # (H, W*Cin)
    for r_ref, m_ref, b_ref in conv_refs:
        act = _conv3x3_gelu(act, r_ref, m_ref, b_ref)

    # Final Linear: z = bias + sum_h act[h, :] @ WL[h]   (flatten folded into WL)
    z = bl_ref[...]                                   # (1, latent) f32
    for h in range(act.shape[0]):
        p = jnp.dot(act, wl_ref[h], preferred_element_type=jnp.float32)  # (Hf, latent)
        z = z + p[h:h + 1, :]
    z_ref[0] = z.astype(z_ref.dtype)


# --------------------------- host-side packing --------------------------------

def init_encoder_params(key, num_input_channels, base_channel_size, latent_dim):
    c_hid = base_channel_size
    conv_io = [
        (num_input_channels, c_hid),      # stride 2
        (c_hid, c_hid),                   # stride 1
        (c_hid, 2 * c_hid),               # stride 2
        (2 * c_hid, 2 * c_hid),           # stride 1
        (2 * c_hid, 2 * c_hid),           # stride 2
    ]
    params = {}
    keys = jax.random.split(key, len(conv_io) + 1)
    for i, (cin, cout) in enumerate(conv_io):
        fan_in = 9 * cin
        w = jax.random.normal(keys[i], (3, 3, cin, cout), jnp.float32) / math.sqrt(fan_in)
        b = 0.01 * jax.random.normal(jax.random.fold_in(keys[i], 1), (cout,), jnp.float32)
        params[f"conv{i}"] = (w, b)
    lin_in = 4 * 4 * 2 * c_hid
    # Linear weight in PyTorch nn.Flatten (NCHW) row order: row index = c*H*W + h*W + w.
    wl = jax.random.normal(keys[-1], (lin_in, latent_dim), jnp.float32) / math.sqrt(lin_in)
    bl = 0.01 * jax.random.normal(jax.random.fold_in(keys[-1], 1), (latent_dim,), jnp.float32)
    params["linear"] = (wl, bl)
    return params


def pack_params(params, image_size=32):
    """Lower conv weights to (R, M, b_tiled) GEMM form and pre-permute the Linear weight."""
    convs = []
    h_in = image_size
    for i, s in enumerate(_CONV_STRIDES):
        w = np.asarray(params[f"conv{i}"][0], np.float32)      # (3,3,Cin,Cout) HWIO
        b = np.asarray(params[f"conv{i}"][1], np.float32)
        cin, cout = w.shape[2], w.shape[3]
        h_out = (h_in - 1) // s + 1                            # k=3, pad=1
        R = np.zeros((3, h_out, h_in), np.float32)
        M = np.zeros((3, h_in * cin, h_out * cout), np.float32)
        for ky in range(3):
            for ho in range(h_out):
                r = ho * s + ky - 1
                if 0 <= r < h_in:
                    R[ky, ho, r] = 1.0                         # out-of-range rows stay all-zero (= zero pad)
            for wo in range(h_out):
                for kx in range(3):
                    wi = wo * s + kx - 1
                    if 0 <= wi < h_in:
                        M[ky, wi * cin:(wi + 1) * cin, wo * cout:(wo + 1) * cout] = w[ky, kx]
        bflat = np.tile(b, h_out).reshape(1, h_out * cout)
        convs.append((jnp.asarray(R, jnp.bfloat16),
                      jnp.asarray(M, jnp.bfloat16),
                      jnp.asarray(bflat, jnp.float32)))
        h_in = h_out

    wl = np.asarray(params["linear"][0], np.float32)           # (Cf*Hf*Wf, latent), NCHW row order
    bl = np.asarray(params["linear"][1], np.float32)
    c_f = int(params["conv4"][0].shape[3])
    h_f = h_in
    latent = wl.shape[1]
    # Permute rows NCHW -> (h, w*Cf + c) to match the kernel's (H, W*C) activation layout.
    WL = wl.reshape(c_f, h_f, h_f, latent).transpose(1, 2, 0, 3).reshape(h_f, h_f * c_f, latent)
    linear = (jnp.asarray(WL, jnp.bfloat16), jnp.asarray(bl.reshape(1, latent), jnp.float32))
    return {"convs": convs, "linear": linear}


# ------------------------------- forward --------------------------------------

def encoder_forward(x_nchw, packed):
    B, C, H, W = x_nchw.shape
    x2d = jnp.transpose(x_nchw, (0, 2, 3, 1)).reshape(B, H, W * C)   # (B, H, W*C)

    in_arrays = [x2d]
    in_specs = [pl.BlockSpec((1, H, W * C), lambda b: (b, 0, 0))]
    for (R, M, bflat) in packed["convs"]:
        in_arrays += [R, M, bflat]
        in_specs += [
            pl.BlockSpec(R.shape, lambda b: (0, 0, 0)),
            pl.BlockSpec(M.shape, lambda b: (0, 0, 0)),
            pl.BlockSpec(bflat.shape, lambda b: (0, 0)),
        ]
    WL, bl = packed["linear"]
    in_arrays += [WL, bl]
    in_specs += [pl.BlockSpec(WL.shape, lambda b: (0, 0, 0)),
                 pl.BlockSpec(bl.shape, lambda b: (0, 0))]

    latent = bl.shape[1]
    out_shape = jax.ShapeDtypeStruct((B, 1, latent), jnp.float32)
    out_spec = pl.BlockSpec((1, 1, latent), lambda b: (b, 0, 0))

    # Advisory cost estimate for the XLA scheduler.
    flops = 0
    transcendentals = 0
    for (R, M, _bflat) in packed["convs"]:
        ho, hi = R.shape[1], R.shape[2]
        k, n = M.shape[1], M.shape[2]
        flops += 3 * 2 * (ho * hi * k + ho * k * n)
        transcendentals += ho * n
    flops += 2 * WL.shape[0] * WL.shape[0] * WL.shape[1] * WL.shape[2]
    flops *= B
    transcendentals *= B
    bytes_accessed = sum(int(a.size) * a.dtype.itemsize for a in in_arrays) + B * latent * 4
    cost = pl.CostEstimate(flops=int(flops), transcendentals=int(transcendentals),
                           bytes_accessed=int(bytes_accessed))

    z3 = pl.pallas_call(
        _encoder_kernel,
        out_shape=out_shape,
        grid=(B,),
        in_specs=in_specs,
        out_specs=out_spec,
        compiler_params=pltpu.CompilerParams(
            dimension_semantics=("parallel",),
            vmem_limit_bytes=32 * 1024 * 1024),
        cost_estimate=cost,
    )(*in_arrays)
    return z3.reshape(B, latent)


# --------------------------- f32 reference (plain JAX) ------------------------

def _reference_forward(x_nchw, params):
    x = jnp.transpose(x_nchw, (0, 2, 3, 1))
    for i, s in enumerate(_CONV_STRIDES):
        w, b = params[f"conv{i}"]
        cin, cout = w.shape[2], w.shape[3]
        B, H, W, C = x.shape
        xp = jnp.pad(x, ((0, 0), (1, 1), (1, 1), (0, 0)))
        Ho = (H - 1) // s + 1
        Wo = (W - 1) // s + 1
        taps = []
        for ky in range(3):
            for kx in range(3):
                taps.append(xp[:, ky:ky + s * (Ho - 1) + 1:s,
                                  kx:kx + s * (Wo - 1) + 1:s, :])
        col = jnp.stack(taps, axis=3).reshape(B * Ho * Wo, 9 * C)
        y = col @ w.reshape(9 * cin, cout) + b
        y = _gelu_exact(y)
        x = y.reshape(B, Ho, Wo, cout)
    B, H, W, C = x.shape
    flat = jnp.transpose(x, (0, 3, 1, 2)).reshape(B, C * H * W)   # nn.Flatten (NCHW)
    wl, bl = params["linear"]
    return flat @ wl + bl


# ---------------------------------- main -------------------------------------

if __name__ == "__main__":
    # 32x32 input is required by the module (three stride-2 convs -> 4x4 before Linear).
    batch = 2
    num_input_channels = 3
    base_channel_size = 8
    latent_dim = 32

    key = jax.random.PRNGKey(0)
    k_x, k_p = jax.random.split(key)
    x = jax.random.normal(k_x, (batch, num_input_channels, 32, 32), jnp.float32)
    params = init_encoder_params(k_p, num_input_channels, base_channel_size, latent_dim)
    packed = pack_params(params)

    fwd = jax.jit(encoder_forward)
    z = fwd(x, packed)
    jax.block_until_ready(z)

    assert z.shape == (batch, latent_dim), z.shape
    assert bool(jnp.all(jnp.isfinite(z)))

    # Lenient check vs f32 reference (kernel uses bf16 MXU operands with f32 accumulation).
    z_ref = _reference_forward(x, params)
    err = float(jnp.max(jnp.abs(z - z_ref)))
    scale = float(jnp.max(jnp.abs(z_ref)))
    assert err <= 0.1 * scale + 0.05, (err, scale)

    print("KERNEL_OK")
</pallas_src>

<mosaic_0001>
module attributes {stable_mosaic.version = 11 : i64} {
  func.func @_encoder_kernel(%arg0: i32, %arg1: memref<1x32x96xf32, #tpu.memory_space<vmem>>, %arg2: memref<3x16x32xbf16, #tpu.memory_space<vmem>>, %arg3: memref<3x96x128xbf16, #tpu.memory_space<vmem>>, %arg4: memref<1x128xf32, #tpu.memory_space<vmem>>, %arg5: memref<3x16x16xbf16, #tpu.memory_space<vmem>>, %arg6: memref<3x128x128xbf16, #tpu.memory_space<vmem>>, %arg7: memref<1x128xf32, #tpu.memory_space<vmem>>, %arg8: memref<3x8x16xbf16, #tpu.memory_space<vmem>>, %arg9: memref<3x128x128xbf16, #tpu.memory_space<vmem>>, %arg10: memref<1x128xf32, #tpu.memory_space<vmem>>, %arg11: memref<3x8x8xbf16, #tpu.memory_space<vmem>>, %arg12: memref<3x128x128xbf16, #tpu.memory_space<vmem>>, %arg13: memref<1x128xf32, #tpu.memory_space<vmem>>, %arg14: memref<3x4x8xbf16, #tpu.memory_space<vmem>>, %arg15: memref<3x128x64xbf16, #tpu.memory_space<vmem>>, %arg16: memref<1x64xf32, #tpu.memory_space<vmem>>, %arg17: memref<4x64x32xbf16, #tpu.memory_space<vmem>>, %arg18: memref<1x32xf32, #tpu.memory_space<vmem>>, %arg19: memref<1x1x32xf32, #tpu.memory_space<vmem>>) attributes {dimension_semantics = [#tpu.dimension_semantics<parallel>], iteration_bounds = array<i64: 2>, scalar_prefetch = 0 : i64, scratch_operands = 0 : i64, tpu.core_type = #tpu.core_type<tc>, window_params = [{transform_indices = @transform_0, window_bounds = array<i64: 1, 32, 96>}, {pipeline_mode = #tpu.pipeline_mode<synchronous>, transform_indices = @transform_1, window_bounds = array<i64: 3, 16, 32>}, {pipeline_mode = #tpu.pipeline_mode<synchronous>, transform_indices = @transform_2, window_bounds = array<i64: 3, 96, 128>}, {pipeline_mode = #tpu.pipeline_mode<synchronous>, transform_indices = @transform_3, window_bounds = array<i64: 1, 128>}, {pipeline_mode = #tpu.pipeline_mode<synchronous>, transform_indices = @transform_4, window_bounds = array<i64: 3, 16, 16>}, {pipeline_mode = #tpu.pipeline_mode<synchronous>, transform_indices = @transform_5, window_bounds = array<i64: 3, 128, 128>}, {pipeline_mode = #tpu.pipeline_mode<synchronous>, transform_indices = @transform_6, window_bounds = array<i64: 1, 128>}, {pipeline_mode = #tpu.pipeline_mode<synchronous>, transform_indices = @transform_7, window_bounds = array<i64: 3, 8, 16>}, {pipeline_mode = #tpu.pipeline_mode<synchronous>, transform_indices = @transform_8, window_bounds = array<i64: 3, 128, 128>}, {pipeline_mode = #tpu.pipeline_mode<synchronous>, transform_indices = @transform_9, window_bounds = array<i64: 1, 128>}, {pipeline_mode = #tpu.pipeline_mode<synchronous>, transform_indices = @transform_10, window_bounds = array<i64: 3, 8, 8>}, {pipeline_mode = #tpu.pipeline_mode<synchronous>, transform_indices = @transform_11, window_bounds = array<i64: 3, 128, 128>}, {pipeline_mode = #tpu.pipeline_mode<synchronous>, transform_indices = @transform_12, window_bounds = array<i64: 1, 128>}, {pipeline_mode = #tpu.pipeline_mode<synchronous>, transform_indices = @transform_13, window_bounds = array<i64: 3, 4, 8>}, {pipeline_mode = #tpu.pipeline_mode<synchronous>, transform_indices = @transform_14, window_bounds = array<i64: 3, 128, 64>}, {pipeline_mode = #tpu.pipeline_mode<synchronous>, transform_indices = @transform_15, window_bounds = array<i64: 1, 64>}, {pipeline_mode = #tpu.pipeline_mode<synchronous>, transform_indices = @transform_16, window_bounds = array<i64: 4, 64, 32>}, {pipeline_mode = #tpu.pipeline_mode<synchronous>, transform_indices = @transform_17, window_bounds = array<i64: 1, 32>}, {transform_indices = @transform_18, window_bounds = array<i64: 1, 1, 32>}]} {
    %c0 = arith.constant 0 : index
    %c0_0 = arith.constant 0 : index
    %c0_1 = arith.constant 0 : index
    %0 = vector.load %arg1[%c0, %c0_0, %c0_1] : memref<1x32x96xf32, #tpu.memory_space<vmem>>, vector<1x32x96xf32>
    %1 = vector.shape_cast %0 : vector<1x32x96xf32> to vector<32x96xf32>
    %2 = arith.truncf %1 : vector<32x96xf32> to vector<32x96xbf16>
    %cst = arith.constant 0.000000e+00 : f32
    %3 = vector.broadcast %cst : f32 to vector<16x128xf32>
    %c0_2 = arith.constant 0 : index
    %c0_3 = arith.constant 0 : index
    %c0_4 = arith.constant 0 : index
    %4 = vector.load %arg2[%c0_2, %c0_3, %c0_4] : memref<3x16x32xbf16, #tpu.memory_space<vmem>>, vector<1x16x32xbf16>
    %5 = vector.shape_cast %4 : vector<1x16x32xbf16> to vector<16x32xbf16>
    %cst_5 = arith.constant dense<0.000000e+00> : vector<16x96xf32>
    %6 = tpu.matmul %5, %2, %cst_5 {dimension_numbers = #tpu.dot_dimension_numbers<[1], [0], [0], [1], [0, 0, 1, 1], [], []>} : vector<16x32xbf16>, vector<32x96xbf16>, vector<16x96xf32> -> vector<16x96xf32>
    %7 = arith.truncf %6 : vector<16x96xf32> to vector<16x96xbf16>
    %c0_6 = arith.constant 0 : index
    %c0_7 = arith.constant 0 : index
    %c0_8 = arith.constant 0 : index
    %8 = vector.load %arg3[%c0_6, %c0_7, %c0_8] : memref<3x96x128xbf16, #tpu.memory_space<vmem>>, vector<1x96x128xbf16>
    %9 = vector.shape_cast %8 : vector<1x96x128xbf16> to vector<96x128xbf16>
    %cst_9 = arith.constant dense<0.000000e+00> : vector<16x128xf32>
    %10 = tpu.matmul %7, %9, %cst_9 {dimension_numbers = #tpu.dot_dimension_numbers<[1], [0], [0], [1], [0, 0, 1, 1], [], []>} : vector<16x96xbf16>, vector<96x128xbf16>, vector<16x128xf32> -> vector<16x128xf32>
    %11 = arith.addf %3, %10 : vector<16x128xf32>
    %c1 = arith.constant 1 : index
    %c0_10 = arith.constant 0 : index
    %c0_11 = arith.constant 0 : index
    %12 = vector.load %arg2[%c1, %c0_10, %c0_11] : memref<3x16x32xbf16, #tpu.memory_space<vmem>>, vector<1x16x32xbf16>
    %13 = vector.shape_cast %12 : vector<1x16x32xbf16> to vector<16x32xbf16>
    %cst_12 = arith.constant dense<0.000000e+00> : vector<16x96xf32>
    %14 = tpu.matmul %13, %2, %cst_12 {dimension_numbers = #tpu.dot_dimension_numbers<[1], [0], [0], [1], [0, 0, 1, 1], [], []>} : vector<16x32xbf16>, vector<32x96xbf16>, vector<16x96xf32> -> vector<16x96xf32>
    %15 = arith.truncf %14 : vector<16x96xf32> to vector<16x96xbf16>
    %c1_13 = arith.constant 1 : index
    %c0_14 = arith.constant 0 : index
    %c0_15 = arith.constant 0 : index
    %16 = vector.load %arg3[%c1_13, %c0_14, %c0_15] : memref<3x96x128xbf16, #tpu.memory_space<vmem>>, vector<1x96x128xbf16>
    %17 = vector.shape_cast %16 : vector<1x96x128xbf16> to vector<96x128xbf16>
    %cst_16 = arith.constant dense<0.000000e+00> : vector<16x128xf32>
    %18 = tpu.matmul %15, %17, %cst_16 {dimension_numbers = #tpu.dot_dimension_numbers<[1], [0], [0], [1], [0, 0, 1, 1], [], []>} : vector<16x96xbf16>, vector<96x128xbf16>, vector<16x128xf32> -> vector<16x128xf32>
    %19 = arith.addf %11, %18 : vector<16x128xf32>
    %c2 = arith.constant 2 : index
    %c0_17 = arith.constant 0 : index
    %c0_18 = arith.constant 0 : index
    %20 = vector.load %arg2[%c2, %c0_17, %c0_18] : memref<3x16x32xbf16, #tpu.memory_space<vmem>>, vector<1x16x32xbf16>
    %21 = vector.shape_cast %20 : vector<1x16x32xbf16> to vector<16x32xbf16>
    %cst_19 = arith.constant dense<0.000000e+00> : vector<16x96xf32>
    %22 = tpu.matmul %21, %2, %cst_19 {dimension_numbers = #tpu.dot_dimension_numbers<[1], [0], [0], [1], [0, 0, 1, 1], [], []>} : vector<16x32xbf16>, vector<32x96xbf16>, vector<16x96xf32> -> vector<16x96xf32>
    %23 = arith.truncf %22 : vector<16x96xf32> to vector<16x96xbf16>
    %c2_20 = arith.constant 2 : index
    %c0_21 = arith.constant 0 : index
    %c0_22 = arith.constant 0 : index
    %24 = vector.load %arg3[%c2_20, %c0_21, %c0_22] : memref<3x96x128xbf16, #tpu.memory_space<vmem>>, vector<1x96x128xbf16>
    %25 = vector.shape_cast %24 : vector<1x96x128xbf16> to vector<96x128xbf16>
    %cst_23 = arith.constant dense<0.000000e+00> : vector<16x128xf32>
    %26 = tpu.matmul %23, %25, %cst_23 {dimension_numbers = #tpu.dot_dimension_numbers<[1], [0], [0], [1], [0, 0, 1, 1], [], []>} : vector<16x96xbf16>, vector<96x128xbf16>, vector<16x128xf32> -> vector<16x128xf32>
    %27 = arith.addf %19, %26 : vector<16x128xf32>
    %c0_24 = arith.constant 0 : index
    %c0_25 = arith.constant 0 : index
    %28 = vector.load %arg4[%c0_24, %c0_25] : memref<1x128xf32, #tpu.memory_space<vmem>>, vector<1x128xf32>
    %29 = vector.broadcast %28 : vector<1x128xf32> to vector<16x128xf32>
    %30 = arith.addf %27, %29 : vector<16x128xf32>
    %cst_26 = arith.constant 5.000000e-01 : f32
    %31 = vector.broadcast %cst_26 : f32 to vector<16x128xf32>
    %32 = arith.mulf %31, %30 : vector<16x128xf32>
    %cst_27 = arith.constant 0.707106769 : f32
    %33 = vector.broadcast %cst_27 : f32 to vector<16x128xf32>
    %34 = arith.mulf %30, %33 : vector<16x128xf32>
    %35 = math.erf %34 : vector<16x128xf32>
    %cst_28 = arith.constant 1.000000e+00 : f32
    %36 = vector.broadcast %cst_28 : f32 to vector<16x128xf32>
    %37 = arith.addf %36, %35 : vector<16x128xf32>
    %38 = arith.mulf %32, %37 : vector<16x128xf32>
    %39 = arith.truncf %38 : vector<16x128xf32> to vector<16x128xbf16>
    %cst_29 = arith.constant 0.000000e+00 : f32
    %40 = vector.broadcast %cst_29 : f32 to vector<16x128xf32>
    %c0_30 = arith.constant 0 : index
    %c0_31 = arith.constant 0 : index
    %c0_32 = arith.constant 0 : index
    %41 = vector.load %arg5[%c0_30, %c0_31, %c0_32] : memref<3x16x16xbf16, #tpu.memory_space<vmem>>, vector<1x16x16xbf16>
    %42 = vector.shape_cast %41 : vector<1x16x16xbf16> to vector<16x16xbf16>
    %cst_33 = arith.constant dense<0.000000e+00> : vector<16x128xf32>
    %43 = tpu.matmul %42, %39, %cst_33 {dimension_numbers = #tpu.dot_dimension_numbers<[1], [0], [0], [1], [0, 0, 1, 1], [], []>} : vector<16x16xbf16>, vector<16x128xbf16>, vector<16x128xf32> -> vector<16x128xf32>
    %44 = arith.truncf %43 : vector<16x128xf32> to vector<16x128xbf16>
    %c0_34 = arith.constant 0 : index
    %c0_35 = arith.constant 0 : index
    %c0_36 = arith.constant 0 : index
    %45 = vector.load %arg6[%c0_34, %c0_35, %c0_36] : memref<3x128x128xbf16, #tpu.memory_space<vmem>>, vector<1x128x128xbf16>
    %46 = vector.shape_cast %45 : vector<1x128x128xbf16> to vector<128x128xbf16>
    %cst_37 = arith.constant dense<0.000000e+00> : vector<16x128xf32>
    %47 = tpu.matmul %44, %46, %cst_37 {dimension_numbers = #tpu.dot_dimension_numbers<[1], [0], [0], [1], [0, 0, 1, 1], [], []>} : vector<16x128xbf16>, vector<128x128xbf16>, vector<16x128xf32> -> vector<16x128xf32>
    %48 = arith.addf %40, %47 : vector<16x128xf32>
    %c1_38 = arith.constant 1 : index
    %c0_39 = arith.constant 0 : index
    %c0_40 = arith.constant 0 : index
    %49 = vector.load %arg5[%c1_38, %c0_39, %c0_40] : memref<3x16x16xbf16, #tpu.memory_space<vmem>>, vector<1x16x16xbf16>
    %50 = vector.shape_cast %49 : vector<1x16x16xbf16> to vector<16x16xbf16>
    %cst_41 = arith.constant dense<0.000000e+00> : vector<16x128xf32>
    %51 = tpu.matmul %50, %39, %cst_41 {dimension_numbers = #tpu.dot_dimension_numbers<[1], [0], [0], [1], [0, 0, 1, 1], [], []>} : vector<16x16xbf16>, vector<16x128xbf16>, vector<16x128xf32> -> vector<16x128xf32>
    %52 = arith.truncf %51 : vector<16x128xf32> to vector<16x128xbf16>
    %c1_42 = arith.constant 1 : index
    %c0_43 = arith.constant 0 : index
    %c0_44 = arith.constant 0 : index
    %53 = vector.load %arg6[%c1_42, %c0_43, %c0_44] : memref<3x128x128xbf16, #tpu.memory_space<vmem>>, vector<1x128x128xbf16>
    %54 = vector.shape_cast %53 : vector<1x128x128xbf16> to vector<128x128xbf16>
    %cst_45 = arith.constant dense<0.000000e+00> : vector<16x128xf32>
    %55 = tpu.matmul %52, %54, %cst_45 {dimension_numbers = #tpu.dot_dimension_numbers<[1], [0], [0], [1], [0, 0, 1, 1], [], []>} : vector<16x128xbf16>, vector<128x128xbf16>, vector<16x128xf32> -> vector<16x128xf32>
    %56 = arith.addf %48, %55 : vector<16x128xf32>
    %c2_46 = arith.constant 2 : index
    %c0_47 = arith.constant 0 : index
    %c0_48 = arith.constant 0 : index
    %57 = vector.load %arg5[%c2_46, %c0_47, %c0_48] : memref<3x16x16xbf16, #tpu.memory_space<vmem>>, vector<1x16x16xbf16>
    %58 = vector.shape_cast %57 : vector<1x16x16xbf16> to vector<16x16xbf16>
    %cst_49 = arith.constant dense<0.000000e+00> : vector<16x128xf32>
    %59 = tpu.matmul %58, %39, %cst_49 {dimension_numbers = #tpu.dot_dimension_numbers<[1], [0], [0], [1], [0, 0, 1, 1], [], []>} : vector<16x16xbf16>, vector<16x128xbf16>, vector<16x128xf32> -> vector<16x128xf32>
    %60 = arith.truncf %59 : vector<16x128xf32> to vector<16x128xbf16>
    %c2_50 = arith.constant 2 : index
    %c0_51 = arith.constant 0 : index
    %c0_52 = arith.constant 0 : index
    %61 = vector.load %arg6[%c2_50, %c0_51, %c0_52] : memref<3x128x128xbf16, #tpu.memory_space<vmem>>, vector<1x128x128xbf16>
    %62 = vector.shape_cast %61 : vector<1x128x128xbf16> to vector<128x128xbf16>
    %cst_53 = arith.constant dense<0.000000e+00> : vector<16x128xf32>
    %63 = tpu.matmul %60, %62, %cst_53 {dimension_numbers = #tpu.dot_dimension_numbers<[1], [0], [0], [1], [0, 0, 1, 1], [], []>} : vector<16x128xbf16>, vector<128x128xbf16>, vector<16x128xf32> -> vector<16x128xf32>
    %64 = arith.addf %56, %63 : vector<16x128xf32>
    %c0_54 = arith.constant 0 : index
    %c0_55 = arith.constant 0 : index
    %65 = vector.load %arg7[%c0_54, %c0_55] : memref<1x128xf32, #tpu.memory_space<vmem>>, vector<1x128xf32>
    %66 = vector.broadcast %65 : vector<1x128xf32> to vector<16x128xf32>
    %67 = arith.addf %64, %66 : vector<16x128xf32>
    %cst_56 = arith.constant 5.000000e-01 : f32
    %68 = vector.broadcast %cst_56 : f32 to vector<16x128xf32>
    %69 = arith.mulf %68, %67 : vector<16x128xf32>
    %cst_57 = arith.constant 0.707106769 : f32
    %70 = vector.broadcast %cst_57 : f32 to vector<16x128xf32>
    %71 = arith.mulf %67, %70 : vector<16x128xf32>
    %72 = math.erf %71 : vector<16x128xf32>
    %cst_58 = arith.constant 1.000000e+00 : f32
    %73 = vector.broadcast %cst_58 : f32 to vector<16x128xf32>
    %74 = arith.addf %73, %72 : vector<16x128xf32>
    %75 = arith.mulf %69, %74 : vector<16x128xf32>
    %76 = arith.truncf %75 : vector<16x128xf32> to vector<16x128xbf16>
    %cst_59 = arith.constant 0.000000e+00 : f32
    %77 = vector.broadcast %cst_59 : f32 to vector<8x128xf32>
    %c0_60 = arith.constant 0 : index
    %c0_61 = arith.constant 0 : index
    %c0_62 = arith.constant 0 : index
    %78 = vector.load %arg8[%c0_60, %c0_61, %c0_62] : memref<3x8x16xbf16, #tpu.memory_space<vmem>>, vector<1x8x16xbf16>
    %79 = vector.shape_cast %78 : vector<1x8x16xbf16> to vector<8x16xbf16>
    %cst_63 = arith.constant dense<0.000000e+00> : vector<8x128xf32>
    %80 = tpu.matmul %79, %76, %cst_63 {dimension_numbers = #tpu.dot_dimension_numbers<[1], [0], [0], [1], [0, 0, 1, 1], [], []>} : vector<8x16xbf16>, vector<16x128xbf16>, vector<8x128xf32> -> vector<8x128xf32>
    %81 = arith.truncf %80 : vector<8x128xf32> to vector<8x128xbf16>
    %c0_64 = arith.constant 0 : index
    %c0_65 = arith.constant 0 : index
    %c0_66 = arith.constant 0 : index
    %82 = vector.load %arg9[%c0_64, %c0_65, %c0_66] : memref<3x128x128xbf16, #tpu.memory_space<vmem>>, vector<1x128x128xbf16>
    %83 = vector.shape_cast %82 : vector<1x128x128xbf16> to vector<128x128xbf16>
    %cst_67 = arith.constant dense<0.000000e+00> : vector<8x128xf32>
    %84 = tpu.matmul %81, %83, %cst_67 {dimension_numbers = #tpu.dot_dimension_numbers<[1], [0], [0], [1], [0, 0, 1, 1], [], []>} : vector<8x128xbf16>, vector<128x128xbf16>, vector<8x128xf32> -> vector<8x128xf32>
    %85 = arith.addf %77, %84 : vector<8x128xf32>
    %c1_68 = arith.constant 1 : index
    %c0_69 = arith.constant 0 : index
    %c0_70 = arith.constant 0 : index
    %86 = vector.load %arg8[%c1_68, %c0_69, %c0_70] : memref<3x8x16xbf16, #tpu.memory_space<vmem>>, vector<1x8x16xbf16>
    %87 = vector.shape_cast %86 : vector<1x8x16xbf16> to vector<8x16xbf16>
    %cst_71 = arith.constant dense<0.000000e+00> : vector<8x128xf32>
    %88 = tpu.matmul %87, %76, %cst_71 {dimension_numbers = #tpu.dot_dimension_numbers<[1], [0], [0], [1], [0, 0, 1, 1], [], []>} : vector<8x16xbf16>, vector<16x128xbf16>, vector<8x128xf32> -> vector<8x128xf32>
    %89 = arith.truncf %88 : vector<8x128xf32> to vector<8x128xbf16>
    %c1_72 = arith.constant 1 : index
    %c0_73 = arith.constant 0 : index
    %c0_74 = arith.constant 0 : index
    %90 = vector.load %arg9[%c1_72, %c0_73, %c0_74] : memref<3x128x128xbf16, #tpu.memory_space<vmem>>, vector<1x128x128xbf16>
    %91 = vector.shape_cast %90 : vector<1x128x128xbf16> to vector<128x128xbf16>
    %cst_75 = arith.constant dense<0.000000e+00> : vector<8x128xf32>
    %92 = tpu.matmul %89, %91, %cst_75 {dimension_numbers = #tpu.dot_dimension_numbers<[1], [0], [0], [1], [0, 0, 1, 1], [], []>} : vector<8x128xbf16>, vector<128x128xbf16>, vector<8x128xf32> -> vector<8x128xf32>
    %93 = arith.addf %85, %92 : vector<8x128xf32>
    %c2_76 = arith.constant 2 : index
    %c0_77 = arith.constant 0 : index
    %c0_78 = arith.constant 0 : index
    %94 = vector.load %arg8[%c2_76, %c0_77, %c0_78] : memref<3x8x16xbf16, #tpu.memory_space<vmem>>, vector<1x8x16xbf16>
    %95 = vector.shape_cast %94 : vector<1x8x16xbf16> to vector<8x16xbf16>
    %cst_79 = arith.constant dense<0.000000e+00> : vector<8x128xf32>
    %96 = tpu.matmul %95, %76, %cst_79 {dimension_numbers = #tpu.dot_dimension_numbers<[1], [0], [0], [1], [0, 0, 1, 1], [], []>} : vector<8x16xbf16>, vector<16x128xbf16>, vector<8x128xf32> -> vector<8x128xf32>
    %97 = arith.truncf %96 : vector<8x128xf32> to vector<8x128xbf16>
    %c2_80 = arith.constant 2 : index
    %c0_81 = arith.constant 0 : index
    %c0_82 = arith.constant 0 : index
    %98 = vector.load %arg9[%c2_80, %c0_81, %c0_82] : memref<3x128x128xbf16, #tpu.memory_space<vmem>>, vector<1x128x128xbf16>
    %99 = vector.shape_cast %98 : vector<1x128x128xbf16> to vector<128x128xbf16>
    %cst_83 = arith.constant dense<0.000000e+00> : vector<8x128xf32>
    %100 = tpu.matmul %97, %99, %cst_83 {dimension_numbers = #tpu.dot_dimension_numbers<[1], [0], [0], [1], [0, 0, 1, 1], [], []>} : vector<8x128xbf16>, vector<128x128xbf16>, vector<8x128xf32> -> vector<8x128xf32>
    %101 = arith.addf %93, %100 : vector<8x128xf32>
    %c0_84 = arith.constant 0 : index
    %c0_85 = arith.constant 0 : index
    %102 = vector.load %arg10[%c0_84, %c0_85] : memref<1x128xf32, #tpu.memory_space<vmem>>, vector<1x128xf32>
    %103 = vector.broadcast %102 : vector<1x128xf32> to vector<8x128xf32>
    %104 = arith.addf %101, %103 : vector<8x128xf32>
    %cst_86 = arith.constant 5.000000e-01 : f32
    %105 = vector.broadcast %cst_86 : f32 to vector<8x128xf32>
    %106 = arith.mulf %105, %104 : vector<8x128xf32>
    %cst_87 = arith.constant 0.707106769 : f32
    %107 = vector.broadcast %cst_87 : f32 to vector<8x128xf32>
    %108 = arith.mulf %104, %107 : vector<8x128xf32>
    %109 = math.erf %108 : vector<8x128xf32>
    %cst_88 = arith.constant 1.000000e+00 : f32
    %110 = vector.broadcast %cst_88 : f32 to vector<8x128xf32>
    %111 = arith.addf %110, %109 : vector<8x128xf32>
    %112 = arith.mulf %106, %111 : vector<8x128xf32>
    %113 = arith.truncf %112 : vector<8x128xf32> to vector<8x128xbf16>
    %cst_89 = arith.constant 0.000000e+00 : f32
    %114 = vector.broadcast %cst_89 : f32 to vector<8x128xf32>
    %c0_90 = arith.constant 0 : index
    %c0_91 = arith.constant 0 : index
    %c0_92 = arith.constant 0 : index
    %115 = vector.load %arg11[%c0_90, %c0_91, %c0_92] : memref<3x8x8xbf16, #tpu.memory_space<vmem>>, vector<1x8x8xbf16>
    %116 = vector.shape_cast %115 : vector<1x8x8xbf16> to vector<8x8xbf16>
    %cst_93 = arith.constant dense<0.000000e+00> : vector<8x128xf32>
    %117 = tpu.matmul %116, %113, %cst_93 {dimension_numbers = #tpu.dot_dimension_numbers<[1], [0], [0], [1], [0, 0, 1, 1], [], []>} : vector<8x8xbf16>, vector<8x128xbf16>, vector<8x128xf32> -> vector<8x128xf32>
    %118 = arith.truncf %117 : vector<8x128xf32> to vector<8x128xbf16>
    %c0_94 = arith.constant 0 : index
    %c0_95 = arith.constant 0 : index
    %c0_96 = arith.constant 0 : index
    %119 = vector.load %arg12[%c0_94, %c0_95, %c0_96] : memref<3x128x128xbf16, #tpu.memory_space<vmem>>, vector<1x128x128xbf16>
    %120 = vector.shape_cast %119 : vector<1x128x128xbf16> to vector<128x128xbf16>
    %cst_97 = arith.constant dense<0.000000e+00> : vector<8x128xf32>
    %121 = tpu.matmul %118, %120, %cst_97 {dimension_numbers = #tpu.dot_dimension_numbers<[1], [0], [0], [1], [0, 0, 1, 1], [], []>} : vector<8x128xbf16>, vector<128x128xbf16>, vector<8x128xf32> -> vector<8x128xf32>
    %122 = arith.addf %114, %121 : vector<8x128xf32>
    %c1_98 = arith.constant 1 : index
    %c0_99 = arith.constant 0 : index
    %c0_100 = arith.constant 0 : index
    %123 = vector.load %arg11[%c1_98, %c0_99, %c0_100] : memref<3x8x8xbf16, #tpu.memory_space<vmem>>, vector<1x8x8xbf16>
    %124 = vector.shape_cast %123 : vector<1x8x8xbf16> to vector<8x8xbf16>
    %cst_101 = arith.constant dense<0.000000e+00> : vector<8x128xf32>
    %125 = tpu.matmul %124, %113, %cst_101 {dimension_numbers = #tpu.dot_dimension_numbers<[1], [0], [0], [1], [0, 0, 1, 1], [], []>} : vector<8x8xbf16>, vector<8x128xbf16>, vector<8x128xf32> -> vector<8x128xf32>
    %126 = arith.truncf %125 : vector<8x128xf32> to vector<8x128xbf16>
    %c1_102 = arith.constant 1 : index
    %c0_103 = arith.constant 0 : index
    %c0_104 = arith.constant 0 : index
    %127 = vector.load %arg12[%c1_102, %c0_103, %c0_104] : memref<3x128x128xbf16, #tpu.memory_space<vmem>>, vector<1x128x128xbf16>
    %128 = vector.shape_cast %127 : vector<1x128x128xbf16> to vector<128x128xbf16>
    %cst_105 = arith.constant dense<0.000000e+00> : vector<8x128xf32>
    %129 = tpu.matmul %126, %128, %cst_105 {dimension_numbers = #tpu.dot_dimension_numbers<[1], [0], [0], [1], [0, 0, 1, 1], [], []>} : vector<8x128xbf16>, vector<128x128xbf16>, vector<8x128xf32> -> vector<8x128xf32>
    %130 = arith.addf %122, %129 : vector<8x128xf32>
    %c2_106 = arith.constant 2 : index
    %c0_107 = arith.constant 0 : index
    %c0_108 = arith.constant 0 : index
    %131 = vector.load %arg11[%c2_106, %c0_107, %c0_108] : memref<3x8x8xbf16, #tpu.memory_space<vmem>>, vector<1x8x8xbf16>
    %132 = vector.shape_cast %131 : vector<1x8x8xbf16> to vector<8x8xbf16>
    %cst_109 = arith.constant dense<0.000000e+00> : vector<8x128xf32>
    %133 = tpu.matmul %132, %113, %cst_109 {dimension_numbers = #tpu.dot_dimension_numbers<[1], [0], [0], [1], [0, 0, 1, 1], [], []>} : vector<8x8xbf16>, vector<8x128xbf16>, vector<8x128xf32> -> vector<8x128xf32>
    %134 = arith.truncf %133 : vector<8x128xf32> to vector<8x128xbf16>
    %c2_110 = arith.constant 2 : index
    %c0_111 = arith.constant 0 : index
    %c0_112 = arith.constant 0 : index
    %135 = vector.load %arg12[%c2_110, %c0_111, %c0_112] : memref<3x128x128xbf16, #tpu.memory_space<vmem>>, vector<1x128x128xbf16>
    %136 = vector.shape_cast %135 : vector<1x128x128xbf16> to vector<128x128xbf16>
    %cst_113 = arith.constant dense<0.000000e+00> : vector<8x128xf32>
    %137 = tpu.matmul %134, %136, %cst_113 {dimension_numbers = #tpu.dot_dimension_numbers<[1], [0], [0], [1], [0, 0, 1, 1], [], []>} : vector<8x128xbf16>, vector<128x128xbf16>, vector<8x128xf32> -> vector<8x128xf32>
    %138 = arith.addf %130, %137 : vector<8x128xf32>
    %c0_114 = arith.constant 0 : index
    %c0_115 = arith.constant 0 : index
    %139 = vector.load %arg13[%c0_114, %c0_115] : memref<1x128xf32, #tpu.memory_space<vmem>>, vector<1x128xf32>
    %140 = vector.broadcast %139 : vector<1x128xf32> to vector<8x128xf32>
    %141 = arith.addf %138, %140 : vector<8x128xf32>
    %cst_116 = arith.constant 5.000000e-01 : f32
    %142 = vector.broadcast %cst_116 : f32 to vector<8x128xf32>
    %143 = arith.mulf %142, %141 : vector<8x128xf32>
    %cst_117 = arith.constant 0.707106769 : f32
    %144 = vector.broadcast %cst_117 : f32 to vector<8x128xf32>
    %145 = arith.mulf %141, %144 : vector<8x128xf32>
    %146 = math.erf %145 : vector<8x128xf32>
    %cst_118 = arith.constant 1.000000e+00 : f32
    %147 = vector.broadcast %cst_118 : f32 to vector<8x128xf32>
    %148 = arith.addf %147, %146 : vector<8x128xf32>
    %149 = arith.mulf %143, %148 : vector<8x128xf32>
    %150 = arith.truncf %149 : vector<8x128xf32> to vector<8x128xbf16>
    %cst_119 = arith.constant 0.000000e+00 : f32
    %151 = vector.broadcast %cst_119 : f32 to vector<4x64xf32>
    %c0_120 = arith.constant 0 : index
    %c0_121 = arith.constant 0 : index
    %c0_122 = arith.constant 0 : index
    %152 = vector.load %arg14[%c0_120, %c0_121, %c0_122] : memref<3x4x8xbf16, #tpu.memory_space<vmem>>, vector<1x4x8xbf16>
    %153 = vector.shape_cast %152 : vector<1x4x8xbf16> to vector<4x8xbf16>
    %cst_123 = arith.constant dense<0.000000e+00> : vector<4x128xf32>
    %154 = tpu.matmul %153, %150, %cst_123 {dimension_numbers = #tpu.dot_dimension_numbers<[1], [0], [0], [1], [0, 0, 1, 1], [], []>} : vector<4x8xbf16>, vector<8x128xbf16>, vector<4x128xf32> -> vector<4x128xf32>
    %155 = arith.truncf %154 : vector<4x128xf32> to vector<4x128xbf16>
    %c0_124 = arith.constant 0 : index
    %c0_125 = arith.constant 0 : index
    %c0_126 = arith.constant 0 : index
    %156 = vector.load %arg15[%c0_124, %c0_125, %c0_126] : memref<3x128x64xbf16, #tpu.memory_space<vmem>>, vector<1x128x64xbf16>
    %157 = vector.shape_cast %156 : vector<1x128x64xbf16> to vector<128x64xbf16>
    %cst_127 = arith.constant dense<0.000000e+00> : vector<4x64xf32>
    %158 = tpu.matmul %155, %157, %cst_127 {dimension_numbers = #tpu.dot_dimension_numbers<[1], [0], [0], [1], [0, 0, 1, 1], [], []>} : vector<4x128xbf16>, vector<128x64xbf16>, vector<4x64xf32> -> vector<4x64xf32>
    %159 = arith.addf %151, %158 : vector<4x64xf32>
    %c1_128 = arith.constant 1 : index
    %c0_129 = arith.constant 0 : index
    %c0_130 = arith.constant 0 : index
    %160 = vector.load %arg14[%c1_128, %c0_129, %c0_130] : memref<3x4x8xbf16, #tpu.memory_space<vmem>>, vector<1x4x8xbf16>
    %161 = vector.shape_cast %160 : vector<1x4x8xbf16> to vector<4x8xbf16>
    %cst_131 = arith.constant dense<0.000000e+00> : vector<4x128xf32>
    %162 = tpu.matmul %161, %150, %cst_131 {dimension_numbers = #tpu.dot_dimension_numbers<[1], [0], [0], [1], [0, 0, 1, 1], [], []>} : vector<4x8xbf16>, vector<8x128xbf16>, vector<4x128xf32> -> vector<4x128xf32>
    %163 = arith.truncf %162 : vector<4x128xf32> to vector<4x128xbf16>
    %c1_132 = arith.constant 1 : index
    %c0_133 = arith.constant 0 : index
    %c0_134 = arith.constant 0 : index
    %164 = vector.load %arg15[%c1_132, %c0_133, %c0_134] : memref<3x128x64xbf16, #tpu.memory_space<vmem>>, vector<1x128x64xbf16>
    %165 = vector.shape_cast %164 : vector<1x128x64xbf16> to vector<128x64xbf16>
    %cst_135 = arith.constant dense<0.000000e+00> : vector<4x64xf32>
    %166 = tpu.matmul %163, %165, %cst_135 {dimension_numbers = #tpu.dot_dimension_numbers<[1], [0], [0], [1], [0, 0, 1, 1], [], []>} : vector<4x128xbf16>, vector<128x64xbf16>, vector<4x64xf32> -> vector<4x64xf32>
    %167 = arith.addf %159, %166 : vector<4x64xf32>
    %c2_136 = arith.constant 2 : index
    %c0_137 = arith.constant 0 : index
    %c0_138 = arith.constant 0 : index
    %168 = vector.load %arg14[%c2_136, %c0_137, %c0_138] : memref<3x4x8xbf16, #tpu.memory_space<vmem>>, vector<1x4x8xbf16>
    %169 = vector.shape_cast %168 : vector<1x4x8xbf16> to vector<4x8xbf16>
    %cst_139 = arith.constant dense<0.000000e+00> : vector<4x128xf32>
    %170 = tpu.matmul %169, %150, %cst_139 {dimension_numbers = #tpu.dot_dimension_numbers<[1], [0], [0], [1], [0, 0, 1, 1], [], []>} : vector<4x8xbf16>, vector<8x128xbf16>, vector<4x128xf32> -> vector<4x128xf32>
    %171 = arith.truncf %170 : vector<4x128xf32> to vector<4x128xbf16>
    %c2_140 = arith.constant 2 : index
    %c0_141 = arith.constant 0 : index
    %c0_142 = arith.constant 0 : index
    %172 = vector.load %arg15[%c2_140, %c0_141, %c0_142] : memref<3x128x64xbf16, #tpu.memory_space<vmem>>, vector<1x128x64xbf16>
    %173 = vector.shape_cast %172 : vector<1x128x64xbf16> to vector<128x64xbf16>
    %cst_143 = arith.constant dense<0.000000e+00> : vector<4x64xf32>
    %174 = tpu.matmul %171, %173, %cst_143 {dimension_numbers = #tpu.dot_dimension_numbers<[1], [0], [0], [1], [0, 0, 1, 1], [], []>} : vector<4x128xbf16>, vector<128x64xbf16>, vector<4x64xf32> -> vector<4x64xf32>
    %175 = arith.addf %167, %174 : vector<4x64xf32>
    %c0_144 = arith.constant 0 : index
    %c0_145 = arith.constant 0 : index
    %176 = vector.load %arg16[%c0_144, %c0_145] : memref<1x64xf32, #tpu.memory_space<vmem>>, vector<1x64xf32>
    %177 = vector.broadcast %176 : vector<1x64xf32> to vector<4x64xf32>
    %178 = arith.addf %175, %177 : vector<4x64xf32>
    %cst_146 = arith.constant 5.000000e-01 : f32
    %179 = vector.broadcast %cst_146 : f32 to vector<4x64xf32>
    %180 = arith.mulf %179, %178 : vector<4x64xf32>
    %cst_147 = arith.constant 0.707106769 : f32
    %181 = vector.broadcast %cst_147 : f32 to vector<4x64xf32>
    %182 = arith.mulf %178, %181 : vector<4x64xf32>
    %183 = math.erf %182 : vector<4x64xf32>
    %cst_148 = arith.constant 1.000000e+00 : f32
    %184 = vector.broadcast %cst_148 : f32 to vector<4x64xf32>
    %185 = arith.addf %184, %183 : vector<4x64xf32>
    %186 = arith.mulf %180, %185 : vector<4x64xf32>
    %187 = arith.truncf %186 : vector<4x64xf32> to vector<4x64xbf16>
    %c0_149 = arith.constant 0 : index
    %c0_150 = arith.constant 0 : index
    %188 = vector.load %arg18[%c0_149, %c0_150] : memref<1x32xf32, #tpu.memory_space<vmem>>, vector<1x32xf32>
    %c0_151 = arith.constant 0 : index
    %c0_152 = arith.constant 0 : index
    %c0_153 = arith.constant 0 : index
    %189 = vector.load %arg17[%c0_151, %c0_152, %c0_153] : memref<4x64x32xbf16, #tpu.memory_space<vmem>>, vector<1x64x32xbf16>
    %190 = vector.shape_cast %189 : vector<1x64x32xbf16> to vector<64x32xbf16>
    %cst_154 = arith.constant dense<0.000000e+00> : vector<4x32xf32>
    %191 = tpu.matmul %187, %190, %cst_154 {dimension_numbers = #tpu.dot_dimension_numbers<[1], [0], [0], [1], [0, 0, 1, 1], [], []>} : vector<4x64xbf16>, vector<64x32xbf16>, vector<4x32xf32> -> vector<4x32xf32>
    %192 = vector.extract_strided_slice %191 {offsets = [0, 0], sizes = [1, 32], strides = [1, 1]} : vector<4x32xf32> to vector<1x32xf32>
    %193 = arith.addf %188, %192 : vector<1x32xf32>
    %c1_155 = arith.constant 1 : index
    %c0_156 = arith.constant 0 : index
    %c0_157 = arith.constant 0 : index
    %194 = vector.load %arg17[%c1_155, %c0_156, %c0_157] : memref<4x64x32xbf16, #tpu.memory_space<vmem>>, vector<1x64x32xbf16>
    %195 = vector.shape_cast %194 : vector<1x64x32xbf16> to vector<64x32xbf16>
    %cst_158 = arith.constant dense<0.000000e+00> : vector<4x32xf32>
    %196 = tpu.matmul %187, %195, %cst_158 {dimension_numbers = #tpu.dot_dimension_numbers<[1], [0], [0], [1], [0, 0, 1, 1], [], []>} : vector<4x64xbf16>, vector<64x32xbf16>, vector<4x32xf32> -> vector<4x32xf32>
    %197 = vector.extract_strided_slice %196 {offsets = [1, 0], sizes = [1, 32], strides = [1, 1]} : vector<4x32xf32> to vector<1x32xf32>
    %198 = arith.addf %193, %197 : vector<1x32xf32>
    %c2_159 = arith.constant 2 : index
    %c0_160 = arith.constant 0 : index
    %c0_161 = arith.constant 0 : index
    %199 = vector.load %arg17[%c2_159, %c0_160, %c0_161] : memref<4x64x32xbf16, #tpu.memory_space<vmem>>, vector<1x64x32xbf16>
    %200 = vector.shape_cast %199 : vector<1x64x32xbf16> to vector<64x32xbf16>
    %cst_162 = arith.constant dense<0.000000e+00> : vector<4x32xf32>
    %201 = tpu.matmul %187, %200, %cst_162 {dimension_numbers = #tpu.dot_dimension_numbers<[1], [0], [0], [1], [0, 0, 1, 1], [], []>} : vector<4x64xbf16>, vector<64x32xbf16>, vector<4x32xf32> -> vector<4x32xf32>
    %202 = vector.extract_strided_slice %201 {offsets = [2, 0], sizes = [1, 32], strides = [1, 1]} : vector<4x32xf32> to vector<1x32xf32>
    %203 = arith.addf %198, %202 : vector<1x32xf32>
    %c3 = arith.constant 3 : index
    %c0_163 = arith.constant 0 : index
    %c0_164 = arith.constant 0 : index
    %204 = vector.load %arg17[%c3, %c0_163, %c0_164] : memref<4x64x32xbf16, #tpu.memory_space<vmem>>, vector<1x64x32xbf16>
    %205 = vector.shape_cast %204 : vector<1x64x32xbf16> to vector<64x32xbf16>
    %cst_165 = arith.constant dense<0.000000e+00> : vector<4x32xf32>
    %206 = tpu.matmul %187, %205, %cst_165 {dimension_numbers = #tpu.dot_dimension_numbers<[1], [0], [0], [1], [0, 0, 1, 1], [], []>} : vector<4x64xbf16>, vector<64x32xbf16>, vector<4x32xf32> -> vector<4x32xf32>
    %207 = vector.extract_strided_slice %206 {offsets = [3, 0], sizes = [1, 32], strides = [1, 1]} : vector<4x32xf32> to vector<1x32xf32>
    %208 = arith.addf %203, %207 : vector<1x32xf32>
    %c0_166 = arith.constant 0 : index
    %c0_167 = arith.constant 0 : index
    %c0_168 = arith.constant 0 : index
    %209 = vector.load %arg19[%c0_166, %c0_167, %c0_168] : memref<1x1x32xf32, #tpu.memory_space<vmem>>, vector<1x1x32xf32>
    %210 = vector.shape_cast %209 : vector<1x1x32xf32> to vector<1x32xf32>
    %211 = vector.shape_cast %208 : vector<1x32xf32> to vector<1x1x32xf32>
    tpu.vector_store %arg19[%c0_166, %c0_167, %c0_168], %211 {strides = array<i32>} : memref<1x1x32xf32, #tpu.memory_space<vmem>>, vector<1x1x32xf32>,
    return
  }
  func.func @transform_0(%arg0: i32) -> (i32, i32, i32) {
    %c0_i32 = arith.constant 0 : i32
    %c0_i32_0 = arith.constant 0 : i32
    %c0_i32_1 = arith.constant 0 : i32
    return %arg0, %c0_i32, %c0_i32_0 : i32, i32, i32
  }
  func.func @transform_1(%arg0: i32) -> (i32, i32, i32) {
    %c0_i32 = arith.constant 0 : i32
    %c0_i32_0 = arith.constant 0 : i32
    %c0_i32_1 = arith.constant 0 : i32
    %c0_i32_2 = arith.constant 0 : i32
    return %c0_i32, %c0_i32_0, %c0_i32_1 : i32, i32, i32
  }
  func.func @transform_2(%arg0: i32) -> (i32, i32, i32) {
    %c0_i32 = arith.constant 0 : i32
    %c0_i32_0 = arith.constant 0 : i32
    %c0_i32_1 = arith.constant 0 : i32
    %c0_i32_2 = arith.constant 0 : i32
    return %c0_i32, %c0_i32_0, %c0_i32_1 : i32, i32, i32
  }
  func.func @transform_3(%arg0: i32) -> (i32, i32) {
    %c0_i32 = arith.constant 0 : i32
    %c0_i32_0 = arith.constant 0 : i32
    %c0_i32_1 = arith.constant 0 : i32
    return %c0_i32, %c0_i32_0 : i32, i32
  }
  func.func @transform_4(%arg0: i32) -> (i32, i32, i32) {
    %c0_i32 = arith.constant 0 : i32
    %c0_i32_0 = arith.constant 0 : i32
    %c0_i32_1 = arith.constant 0 : i32
    %c0_i32_2 = arith.constant 0 : i32
    return %c0_i32, %c0_i32_0, %c0_i32_1 : i32, i32, i32
  }
  func.func @transform_5(%arg0: i32) -> (i32, i32, i32) {
    %c0_i32 = arith.constant 0 : i32
    %c0_i32_0 = arith.constant 0 : i32
    %c0_i32_1 = arith.constant 0 : i32
    %c0_i32_2 = arith.constant 0 : i32
    return %c0_i32, %c0_i32_0, %c0_i32_1 : i32, i32, i32
  }
  func.func @transform_6(%arg0: i32) -> (i32, i32) {
    %c0_i32 = arith.constant 0 : i32
    %c0_i32_0 = arith.constant 0 : i32
    %c0_i32_1 = arith.constant 0 : i32
    return %c0_i32, %c0_i32_0 : i32, i32
  }
  func.func @transform_7(%arg0: i32) -> (i32, i32, i32) {
    %c0_i32 = arith.constant 0 : i32
    %c0_i32_0 = arith.constant 0 : i32
    %c0_i32_1 = arith.constant 0 : i32
    %c0_i32_2 = arith.constant 0 : i32
    return %c0_i32, %c0_i32_0, %c0_i32_1 : i32, i32, i32
  }
  func.func @transform_8(%arg0: i32) -> (i32, i32, i32) {
    %c0_i32 = arith.constant 0 : i32
    %c0_i32_0 = arith.constant 0 : i32
    %c0_i32_1 = arith.constant 0 : i32
    %c0_i32_2 = arith.constant 0 : i32
    return %c0_i32, %c0_i32_0, %c0_i32_1 : i32, i32, i32
  }
  func.func @transform_9(%arg0: i32) -> (i32, i32) {
    %c0_i32 = arith.constant 0 : i32
    %c0_i32_0 = arith.constant 0 : i32
    %c0_i32_1 = arith.constant 0 : i32
    return %c0_i32, %c0_i32_0 : i32, i32
  }
  func.func @transform_10(%arg0: i32) -> (i32, i32, i32) {
    %c0_i32 = arith.constant 0 : i32
    %c0_i32_0 = arith.constant 0 : i32
    %c0_i32_1 = arith.constant 0 : i32
    %c0_i32_2 = arith.constant 0 : i32
    return %c0_i32, %c0_i32_0, %c0_i32_1 : i32, i32, i32
  }
  func.func @transform_11(%arg0: i32) -> (i32, i32, i32) {
    %c0_i32 = arith.constant 0 : i32
    %c0_i32_0 = arith.constant 0 : i32
    %c0_i32_1 = arith.constant 0 : i32
    %c0_i32_2 = arith.constant 0 : i32
    return %c0_i32, %c0_i32_0, %c0_i32_1 : i32, i32, i32
  }
  func.func @transform_12(%arg0: i32) -> (i32, i32) {
    %c0_i32 = arith.constant 0 : i32
    %c0_i32_0 = arith.constant 0 : i32
    %c0_i32_1 = arith.constant 0 : i32
    return %c0_i32, %c0_i32_0 : i32, i32
  }
  func.func @transform_13(%arg0: i32) -> (i32, i32, i32) {
    %c0_i32 = arith.constant 0 : i32
    %c0_i32_0 = arith.constant 0 : i32
    %c0_i32_1 = arith.constant 0 : i32
    %c0_i32_2 = arith.constant 0 : i32
    return %c0_i32, %c0_i32_0, %c0_i32_1 : i32, i32, i32
  }
  func.func @transform_14(%arg0: i32) -> (i32, i32, i32) {
    %c0_i32 = arith.constant 0 : i32
    %c0_i32_0 = arith.constant 0 : i32
    %c0_i32_1 = arith.constant 0 : i32
    %c0_i32_2 = arith.constant 0 : i32
    return %c0_i32, %c0_i32_0, %c0_i32_1 : i32, i32, i32
  }
  func.func @transform_15(%arg0: i32) -> (i32, i32) {
    %c0_i32 = arith.constant 0 : i32
    %c0_i32_0 = arith.constant 0 : i32
    %c0_i32_1 = arith.constant 0 : i32
    return %c0_i32, %c0_i32_0 : i32, i32
  }
  func.func @transform_16(%arg0: i32) -> (i32, i32, i32) {
    %c0_i32 = arith.constant 0 : i32
    %c0_i32_0 = arith.constant 0 : i32
    %c0_i32_1 = arith.constant 0 : i32
    %c0_i32_2 = arith.constant 0 : i32
    return %c0_i32, %c0_i32_0, %c0_i32_1 : i32, i32, i32
  }
  func.func @transform_17(%arg0: i32) -> (i32, i32) {
    %c0_i32 = arith.constant 0 : i32
    %c0_i32_0 = arith.constant 0 : i32
    %c0_i32_1 = arith.constant 0 : i32
    return %c0_i32, %c0_i32_0 : i32, i32
  }
  func.func @transform_18(%arg0: i32) -> (i32, i32, i32) {
    %c0_i32 = arith.constant 0 : i32
    %c0_i32_0 = arith.constant 0 : i32
    %c0_i32_1 = arith.constant 0 : i32
    return %arg0, %c0_i32, %c0_i32_0 : i32, i32, i32
  }
}

</mosaic_0001>

<llo_original>
// kernel: encoder_forward.1
$region0: #{encoder_forward.1}
  #allocation0 [shape = 'u32[]', space=smem, size = 0x4, offset = 0x4, fixed_abs, tag = 'smem constant byte address 0x4 - core index']
  #allocation1 [shape = 'u32[144,128]{1,0:T(1,128)}', space=vmem, size = 0x12000, scoped, tag = 'internal scratch']
  %s0 = inlined_call_operand.vmem [shape: f32[2,32,96], index: 0, kind: input, shape index: {}]
  %s1 = inlined_call_operand.vmem [shape: bf16[3,16,32], index: 1, kind: input, shape index: {}]
  %s2 = inlined_call_operand.vmem [shape: bf16[3,96,128], index: 2, kind: input, shape index: {}]
  %s3 = inlined_call_operand.vmem [shape: f32[1,128], index: 3, kind: input, shape index: {}]
  %s4 = inlined_call_operand.vmem [shape: bf16[3,16,16], index: 4, kind: input, shape index: {}]
  %s5 = inlined_call_operand.vmem [shape: bf16[3,128,128], index: 5, kind: input, shape index: {}]
  %s6 = inlined_call_operand.vmem [shape: f32[1,128], index: 6, kind: input, shape index: {}]
  %s7 = inlined_call_operand.vmem [shape: bf16[3,8,16], index: 7, kind: input, shape index: {}]
  %s8 = inlined_call_operand.vmem [shape: bf16[3,128,128], index: 8, kind: input, shape index: {}]
  %s9 = inlined_call_operand.vmem [shape: f32[1,128], index: 9, kind: input, shape index: {}]
  %s10 = inlined_call_operand.vmem [shape: bf16[3,8,8], index: 10, kind: input, shape index: {}]
  %s11 = inlined_call_operand.vmem [shape: bf16[3,128,128], index: 11, kind: input, shape index: {}]
  %s12 = inlined_call_operand.vmem [shape: f32[1,128], index: 12, kind: input, shape index: {}]
  %s13 = inlined_call_operand.vmem [shape: bf16[3,4,8], index: 13, kind: input, shape index: {}]
  %s14 = inlined_call_operand.vmem [shape: bf16[3,128,64], index: 14, kind: input, shape index: {}]
  %s15 = inlined_call_operand.vmem [shape: f32[1,64], index: 15, kind: input, shape index: {}]
  %s16 = inlined_call_operand.vmem [shape: bf16[4,64,32], index: 16, kind: input, shape index: {}]
  %s17 = inlined_call_operand.vmem [shape: f32[1,32], index: 17, kind: input, shape index: {}]
  %s18 = inlined_call_operand.hbm [shape: f32[2,1,32], index: 18, kind: output, shape index: {}]
  %s19 = sld [smem:[#allocation0]]
  $region105: #{encoder_forward.1} parent=0
    _
  %s21 = ssub.s32 1, %s19
  %s22 = scalar_select 0, %s21, %s19
  $region1: #{encoder_forward.1} parent=0
    #allocation2 [shape = 'u8[1024]{0}', space=vmem, size = 0x400, scoped, tag = 'output window, operand 0']
    #allocation3 [shape = 's32[2]{0}', space=sflag, size = 0x8, scoped, tag = 'scoped memory for encoder_forward.1']
    %23 = vsyncpa [#allocation3], 0
    %s24 = scalar_lea.sflag [#allocation3], 1
    %25 = vsyncpa %s24, 0
    loop: start=0, step=1, limit=4
    $region2: #{encoder_forward.1} parent=1 // loop_pre_header
      _
    $region3: #{encoder_forward.1} parent=1 // loop_header
      %s27 = sphi 0, %s31
      %p28 = scmp.ge.s32.totalorder %s27, 4
      %s37 = sphi 0, %s39
      %s40 = sphi 0, %s37
      %s41 = sphi 0, %s40
      %s57 = sphi 0, %s41
      %s61 = sphi 0, %s61
      %s63 = sphi 0, %s61
      %s64 = sphi 0, %s63
      %s78 = sphi 0, %s64
      %s82 = sphi 0, %s82
      %s84 = sphi 0, %s82
      %s85 = sphi 0, %s84
      %s99 = sphi 0, %s85
      %s103 = sphi 0, %s103
      %s105 = sphi 0, %s103
      %s106 = sphi 0, %s105
      %s120 = sphi 0, %s106
      %s124 = sphi 0, %s124
      %s126 = sphi 0, %s124
      %s127 = sphi 0, %s126
      %s141 = sphi 0, %s127
      %s145 = sphi 0, %s145
      %s147 = sphi 0, %s145
      %s148 = sphi 0, %s147
      %s162 = sphi 0, %s148
      %s166 = sphi 0, %s166
      %s168 = sphi 0, %s166
      %s169 = sphi 0, %s168
      %s183 = sphi 0, %s169
      %s187 = sphi 0, %s187
      %s189 = sphi 0, %s187
      %s190 = sphi 0, %s189
      %s204 = sphi 0, %s190
      %s208 = sphi 0, %s208
      %s210 = sphi 0, %s208
      %s211 = sphi 0, %s210
      %s225 = sphi 0, %s211
      %s229 = sphi 0, %s229
      %s231 = sphi 0, %s229
      %s232 = sphi 0, %s231
      %s246 = sphi 0, %s232
      %s250 = sphi 0, %s250
      %s252 = sphi 0, %s250
      %s253 = sphi 0, %s252
      %s267 = sphi 0, %s253
      %s271 = sphi 0, %s271
      %s273 = sphi 0, %s271
      %s274 = sphi 0, %s273
      %s288 = sphi 0, %s274
      %s292 = sphi 0, %s292
      %s294 = sphi 0, %s292
      %s295 = sphi 0, %s294
      %s309 = sphi 0, %s295
      %s313 = sphi 0, %s313
      %s315 = sphi 0, %s313
      %s316 = sphi 0, %s315
      %s330 = sphi 0, %s316
      %s334 = sphi 0, %s334
      %s336 = sphi 0, %s334
      %s337 = sphi 0, %s336
      %s351 = sphi 0, %s337
      %s355 = sphi 0, %s355
      %s357 = sphi 0, %s355
      %s358 = sphi 0, %s357
      %s372 = sphi 0, %s358
      %s376 = sphi 0, %s376
      %s378 = sphi 0, %s376
      %s379 = sphi 0, %s378
      %s393 = sphi 0, %s379
      %s397 = sphi 0, %s397
      %s399 = sphi 0, %s397
      %s400 = sphi 0, %s399
      %s414 = sphi 0, %s400
      %s420 = sphi 0, %s422
      %s423 = sphi 0, %s420
      %s424 = sphi 0, %s423
      %s440 = sphi 0, %s424
    $region4: #{encoder_forward.1} parent=1 // loop_header_branch
      %30 = sbr.rel (%p28) target = $region8
    $region5: #{encoder_forward.1} parent=1 // loop_body
      %s32 = ssub.s32 %s27, 1
      %s33 = ssub.s32 %s27, 2
      %s34 = sadd.s32 %s27, 1
      %s35 = ssub.s32 %s27, %s34
      %p36 = scmp.eq.s32.totalorder %s35, 0
      %s38 = sadd.s32 %s37, 1
      %s39 = scalar_select %p36, %s37, %s38
      %p42 = pneg %p36
      %p43 = scmp.eq.s32.totalorder %s27, 1
      %p44 = por %p42, %p43
      %p45 = scmp.ne.s32.totalorder %s37, %s40
      %p46 = scmp.eq.s32.totalorder %s27, 0
      %p47 = por %p45, %p46
      %p48 = scmp.ne.s32.totalorder %s37, %s40
      %p49 = scmp.eq.s32.totalorder %s32, 1
      %p50 = por %p48, %p49
      %p51 = scmp.ne.s32.totalorder %s40, %s41
      %p52 = scmp.eq.s32.totalorder %s32, 0
      %p53 = por %p51, %p52
      %p54 = scmp.ne.s32.totalorder %s40, %s41
      %p55 = scmp.eq.s32.totalorder %s33, 1
      %p56 = por %p54, %p55
      %p58 = scmp.ne.s32.totalorder %s41, %s57
      %p59 = scmp.eq.s32.totalorder %s33, 0
      %p60 = por %p58, %p59
      %s62 = sadd.s32 %s61, 1
      %p65 = scmp.eq.s32.totalorder %s27, 1
      %p66 = scmp.ne.s32.totalorder %s61, %s63
      %p67 = scmp.eq.s32.totalorder %s27, 0
      %p68 = por %p66, %p67
      %p69 = scmp.ne.s32.totalorder %s61, %s63
      %p70 = scmp.eq.s32.totalorder %s32, 1
      %p71 = por %p69, %p70
      %p72 = scmp.ne.s32.totalorder %s63, %s64
      %p73 = scmp.eq.s32.totalorder %s32, 0
      %p74 = por %p72, %p73
      %p75 = scmp.ne.s32.totalorder %s63, %s64
      %p76 = scmp.eq.s32.totalorder %s33, 1
      %p77 = por %p75, %p76
      %p79 = scmp.ne.s32.totalorder %s64, %s78
      %p80 = scmp.eq.s32.totalorder %s33, 0
      %p81 = por %p79, %p80
      %s83 = sadd.s32 %s82, 1
      %p86 = scmp.eq.s32.totalorder %s27, 1
      %p87 = scmp.ne.s32.totalorder %s82, %s84
      %p88 = scmp.eq.s32.totalorder %s27, 0
      %p89 = por %p87, %p88
      %p90 = scmp.ne.s32.totalorder %s82, %s84
      %p91 = scmp.eq.s32.totalorder %s32, 1
      %p92 = por %p90, %p91
      %p93 = scmp.ne.s32.totalorder %s84, %s85
      %p94 = scmp.eq.s32.totalorder %s32, 0
      %p95 = por %p93, %p94
      %p96 = scmp.ne.s32.totalorder %s84, %s85
      %p97 = scmp.eq.s32.totalorder %s33, 1
      %p98 = por %p96, %p97
      %p100 = scmp.ne.s32.totalorder %s85, %s99
      %p101 = scmp.eq.s32.totalorder %s33, 0
      %p102 = por %p100, %p101
      %s104 = sadd.s32 %s103, 1
      %p107 = scmp.eq.s32.totalorder %s27, 1
      %p108 = scmp.ne.s32.totalorder %s103, %s105
      %p109 = scmp.eq.s32.totalorder %s27, 0
      %p110 = por %p108, %p109
      %p111 = scmp.ne.s32.totalorder %s103, %s105
      %p112 = scmp.eq.s32.totalorder %s32, 1
      %p113 = por %p111, %p112
      %p114 = scmp.ne.s32.totalorder %s105, %s106
      %p115 = scmp.eq.s32.totalorder %s32, 0
      %p116 = por %p114, %p115
      %p117 = scmp.ne.s32.totalorder %s105, %s106
      %p118 = scmp.eq.s32.totalorder %s33, 1
      %p119 = por %p117, %p118
      %p121 = scmp.ne.s32.totalorder %s106, %s120
      %p122 = scmp.eq.s32.totalorder %s33, 0
      %p123 = por %p121, %p122
      %s125 = sadd.s32 %s124, 1
      %p128 = scmp.eq.s32.totalorder %s27, 1
      %p129 = scmp.ne.s32.totalorder %s124, %s126
      %p130 = scmp.eq.s32.totalorder %s27, 0
      %p131 = por %p129, %p130
      %p132 = scmp.ne.s32.totalorder %s124, %s126
      %p133 = scmp.eq.s32.totalorder %s32, 1
      %p134 = por %p132, %p133
      %p135 = scmp.ne.s32.totalorder %s126, %s127
      %p136 = scmp.eq.s32.totalorder %s32, 0
      %p137 = por %p135, %p136
      %p138 = scmp.ne.s32.totalorder %s126, %s127
      %p139 = scmp.eq.s32.totalorder %s33, 1
      %p140 = por %p138, %p139
      %p142 = scmp.ne.s32.totalorder %s127, %s141
      %p143 = scmp.eq.s32.totalorder %s33, 0
      %p144 = por %p142, %p143
      %s146 = sadd.s32 %s145, 1
      %p149 = scmp.eq.s32.totalorder %s27, 1
      %p150 = scmp.ne.s32.totalorder %s145, %s147
      %p151 = scmp.eq.s32.totalorder %s27, 0
      %p152 = por %p150, %p151
      %p153 = scmp.ne.s32.totalorder %s145, %s147
      %p154 = scmp.eq.s32.totalorder %s32, 1
      %p155 = por %p153, %p154
      %p156 = scmp.ne.s32.totalorder %s147, %s148
      %p157 = scmp.eq.s32.totalorder %s32, 0
      %p158 = por %p156, %p157
      %p159 = scmp.ne.s32.totalorder %s147, %s148
      %p160 = scmp.eq.s32.totalorder %s33, 1
      %p161 = por %p159, %p160
      %p163 = scmp.ne.s32.totalorder %s148, %s162
      %p164 = scmp.eq.s32.totalorder %s33, 0
      %p165 = por %p163, %p164
      %s167 = sadd.s32 %s166, 1
      %p170 = scmp.eq.s32.totalorder %s27, 1
      %p171 = scmp.ne.s32.totalorder %s166, %s168
      %p172 = scmp.eq.s32.totalorder %s27, 0
      %p173 = por %p171, %p172
      %p174 = scmp.ne.s32.totalorder %s166, %s168
      %p175 = scmp.eq.s32.totalorder %s32, 1
      %p176 = por %p174, %p175
      %p177 = scmp.ne.s32.totalorder %s168, %s169
      %p178 = scmp.eq.s32.totalorder %s32, 0
      %p179 = por %p177, %p178
      %p180 = scmp.ne.s32.totalorder %s168, %s169
      %p181 = scmp.eq.s32.totalorder %s33, 1
      %p182 = por %p180, %p181
      %p184 = scmp.ne.s32.totalorder %s169, %s183
      %p185 = scmp.eq.s32.totalorder %s33, 0
      %p186 = por %p184, %p185
      %s188 = sadd.s32 %s187, 1
      %p191 = scmp.eq.s32.totalorder %s27, 1
      %p192 = scmp.ne.s32.totalorder %s187, %s189
      %p193 = scmp.eq.s32.totalorder %s27, 0
      %p194 = por %p192, %p193
      %p195 = scmp.ne.s32.totalorder %s187, %s189
      %p196 = scmp.eq.s32.totalorder %s32, 1
      %p197 = por %p195, %p196
      %p198 = scmp.ne.s32.totalorder %s189, %s190
      %p199 = scmp.eq.s32.totalorder %s32, 0
      %p200 = por %p198, %p199
      %p201 = scmp.ne.s32.totalorder %s189, %s190
      %p202 = scmp.eq.s32.totalorder %s33, 1
      %p203 = por %p201, %p202
      %p205 = scmp.ne.s32.totalorder %s190, %s204
      %p206 = scmp.eq.s32.totalorder %s33, 0
      %p207 = por %p205, %p206
      %s209 = sadd.s32 %s208, 1
      %p212 = scmp.eq.s32.totalorder %s27, 1
      %p213 = scmp.ne.s32.totalorder %s208, %s210
      %p214 = scmp.eq.s32.totalorder %s27, 0
      %p215 = por %p213, %p214
      %p216 = scmp.ne.s32.totalorder %s208, %s210
      %p217 = scmp.eq.s32.totalorder %s32, 1
      %p218 = por %p216, %p217
      %p219 = scmp.ne.s32.totalorder %s210, %s211
      %p220 = scmp.eq.s32.totalorder %s32, 0
      %p221 = por %p219, %p220
      %p222 = scmp.ne.s32.totalorder %s210, %s211
      %p223 = scmp.eq.s32.totalorder %s33, 1
      %p224 = por %p222, %p223
      %p226 = scmp.ne.s32.totalorder %s211, %s225
      %p227 = scmp.eq.s32.totalorder %s33, 0
      %p228 = por %p226, %p227
      %s230 = sadd.s32 %s229, 1
      %p233 = scmp.eq.s32.totalorder %s27, 1
      %p234 = scmp.ne.s32.totalorder %s229, %s231
      %p235 = scmp.eq.s32.totalorder %s27, 0
      %p236 = por %p234, %p235
      %p237 = scmp.ne.s32.totalorder %s229, %s231
      %p238 = scmp.eq.s32.totalorder %s32, 1
      %p239 = por %p237, %p238
      %p240 = scmp.ne.s32.totalorder %s231, %s232
      %p241 = scmp.eq.s32.totalorder %s32, 0
      %p242 = por %p240, %p241
      %p243 = scmp.ne.s32.totalorder %s231, %s232
      %p244 = scmp.eq.s32.totalorder %s33, 1
      %p245 = por %p243, %p244
      %p247 = scmp.ne.s32.totalorder %s232, %s246
      %p248 = scmp.eq.s32.totalorder %s33, 0
      %p249 = por %p247, %p248
      %s251 = sadd.s32 %s250, 1
      %p254 = scmp.eq.s32.totalorder %s27, 1
      %p255 = scmp.ne.s32.totalorder %s250, %s252
      %p256 = scmp.eq.s32.totalorder %s27, 0
      %p257 = por %p255, %p256
      %p258 = scmp.ne.s32.totalorder %s250, %s252
      %p259 = scmp.eq.s32.totalorder %s32, 1
      %p260 = por %p258, %p259
      %p261 = scmp.ne.s32.totalorder %s252, %s253
      %p262 = scmp.eq.s32.totalorder %s32, 0
      %p263 = por %p261, %p262
      %p264 = scmp.ne.s32.totalorder %s252, %s253
      %p265 = scmp.eq.s32.totalorder %s33, 1
      %p266 = por %p264, %p265
      %p268 = scmp.ne.s32.totalorder %s253, %s267
      %p269 = scmp.eq.s32.totalorder %s33, 0
      %p270 = por %p268, %p269
      %s272 = sadd.s32 %s271, 1
      %p275 = scmp.eq.s32.totalorder %s27, 1
      %p276 = scmp.ne.s32.totalorder %s271, %s273
      %p277 = scmp.eq.s32.totalorder %s27, 0
      %p278 = por %p276, %p277
      %p279 = scmp.ne.s32.totalorder %s271, %s273
      %p280 = scmp.eq.s32.totalorder %s32, 1
      %p281 = por %p279, %p280
      %p282 = scmp.ne.s32.totalorder %s273, %s274
      %p283 = scmp.eq.s32.totalorder %s32, 0
      %p284 = por %p282, %p283
      %p285 = scmp.ne.s32.totalorder %s273, %s274
      %p286 = scmp.eq.s32.totalorder %s33, 1
      %p287 = por %p285, %p286
      %p289 = scmp.ne.s32.totalorder %s274, %s288
      %p290 = scmp.eq.s32.totalorder %s33, 0
      %p291 = por %p289, %p290
      %s293 = sadd.s32 %s292, 1
      %p296 = scmp.eq.s32.totalorder %s27, 1
      %p297 = scmp.ne.s32.totalorder %s292, %s294
      %p298 = scmp.eq.s32.totalorder %s27, 0
      %p299 = por %p297, %p298
      %p300 = scmp.ne.s32.totalorder %s292, %s294
      %p301 = scmp.eq.s32.totalorder %s32, 1
      %p302 = por %p300, %p301
      %p303 = scmp.ne.s32.totalorder %s294, %s295
      %p304 = scmp.eq.s32.totalorder %s32, 0
      %p305 = por %p303, %p304
      %p306 = scmp.ne.s32.totalorder %s294, %s295
      %p307 = scmp.eq.s32.totalorder %s33, 1
      %p308 = por %p306, %p307
      %p310 = scmp.ne.s32.totalorder %s295, %s309
      %p311 = scmp.eq.s32.totalorder %s33, 0
      %p312 = por %p310, %p311
      %s314 = sadd.s32 %s313, 1
      %p317 = scmp.eq.s32.totalorder %s27, 1
      %p318 = scmp.ne.s32.totalorder %s313, %s315
      %p319 = scmp.eq.s32.totalorder %s27, 0
      %p320 = por %p318, %p319
      %p321 = scmp.ne.s32.totalorder %s313, %s315
      %p322 = scmp.eq.s32.totalorder %s32, 1
      %p323 = por %p321, %p322
      %p324 = scmp.ne.s32.totalorder %s315, %s316
      %p325 = scmp.eq.s32.totalorder %s32, 0
      %p326 = por %p324, %p325
      %p327 = scmp.ne.s32.totalorder %s315, %s316
      %p328 = scmp.eq.s32.totalorder %s33, 1
      %p329 = por %p327, %p328
      %p331 = scmp.ne.s32.totalorder %s316, %s330
      %p332 = scmp.eq.s32.totalorder %s33, 0
      %p333 = por %p331, %p332
      %s335 = sadd.s32 %s334, 1
      %p338 = scmp.eq.s32.totalorder %s27, 1
      %p339 = scmp.ne.s32.totalorder %s334, %s336
      %p340 = scmp.eq.s32.totalorder %s27, 0
      %p341 = por %p339, %p340
      %p342 = scmp.ne.s32.totalorder %s334, %s336
      %p343 = scmp.eq.s32.totalorder %s32, 1
      %p344 = por %p342, %p343
      %p345 = scmp.ne.s32.totalorder %s336, %s337
      %p346 = scmp.eq.s32.totalorder %s32, 0
      %p347 = por %p345, %p346
      %p348 = scmp.ne.s32.totalorder %s336, %s337
      %p349 = scmp.eq.s32.totalorder %s33, 1
      %p350 = por %p348, %p349
      %p352 = scmp.ne.s32.totalorder %s337, %s351
      %p353 = scmp.eq.s32.totalorder %s33, 0
      %p354 = por %p352, %p353
      %s356 = sadd.s32 %s355, 1
      %p359 = scmp.eq.s32.totalorder %s27, 1
      %p360 = scmp.ne.s32.totalorder %s355, %s357
      %p361 = scmp.eq.s32.totalorder %s27, 0
      %p362 = por %p360, %p361
      %p363 = scmp.ne.s32.totalorder %s355, %s357
      %p364 = scmp.eq.s32.totalorder %s32, 1
      %p365 = por %p363, %p364
      %p366 = scmp.ne.s32.totalorder %s357, %s358
      %p367 = scmp.eq.s32.totalorder %s32, 0
      %p368 = por %p366, %p367
      %p369 = scmp.ne.s32.totalorder %s357, %s358
      %p370 = scmp.eq.s32.totalorder %s33, 1
      %p371 = por %p369, %p370
      %p373 = scmp.ne.s32.totalorder %s358, %s372
      %p374 = scmp.eq.s32.totalorder %s33, 0
      %p375 = por %p373, %p374
      %s377 = sadd.s32 %s376, 1
      %p380 = scmp.eq.s32.totalorder %s27, 1
      %p381 = scmp.ne.s32.totalorder %s376, %s378
      %p382 = scmp.eq.s32.totalorder %s27, 0
      %p383 = por %p381, %p382
      %p384 = scmp.ne.s32.totalorder %s376, %s378
      %p385 = scmp.eq.s32.totalorder %s32, 1
      %p386 = por %p384, %p385
      %p387 = scmp.ne.s32.totalorder %s378, %s379
      %p388 = scmp.eq.s32.totalorder %s32, 0
      %p389 = por %p387, %p388
      %p390 = scmp.ne.s32.totalorder %s378, %s379
      %p391 = scmp.eq.s32.totalorder %s33, 1
      %p392 = por %p390, %p391
      %p394 = scmp.ne.s32.totalorder %s379, %s393
      %p395 = scmp.eq.s32.totalorder %s33, 0
      %p396 = por %p394, %p395
      %s398 = sadd.s32 %s397, 1
      %p401 = scmp.eq.s32.totalorder %s27, 1
      %p402 = scmp.ne.s32.totalorder %s397, %s399
      %p403 = scmp.eq.s32.totalorder %s27, 0
      %p404 = por %p402, %p403
      %p405 = scmp.ne.s32.totalorder %s397, %s399
      %p406 = scmp.eq.s32.totalorder %s32, 1
      %p407 = por %p405, %p406
      %p408 = scmp.ne.s32.totalorder %s399, %s400
      %p409 = scmp.eq.s32.totalorder %s32, 0
      %p410 = por %p408, %p409
      %p411 = scmp.ne.s32.totalorder %s399, %s400
      %p412 = scmp.eq.s32.totalorder %s33, 1
      %p413 = por %p411, %p412
      %p415 = scmp.ne.s32.totalorder %s400, %s414
      %p416 = scmp.eq.s32.totalorder %s33, 0
      %p417 = por %p415, %p416
      %s418 = ssub.s32 %s27, %s34
      %p419 = scmp.eq.s32.totalorder %s418, 0
      %s421 = sadd.s32 %s420, 1
      %s422 = scalar_select %p419, %s420, %s421
      %p425 = pneg %p419
      %p426 = scmp.eq.s32.totalorder %s27, 1
      %p427 = por %p425, %p426
      %p428 = scmp.ne.s32.totalorder %s420, %s423
      %p429 = scmp.eq.s32.totalorder %s27, 0
      %p430 = por %p428, %p429
      %p431 = scmp.ne.s32.totalorder %s420, %s423
      %p432 = scmp.eq.s32.totalorder %s32, 1
      %p433 = por %p431, %p432
      %p434 = scmp.ne.s32.totalorder %s423, %s424
      %p435 = scmp.eq.s32.totalorder %s32, 0
      %p436 = por %p434, %p435
      %p437 = scmp.ne.s32.totalorder %s423, %s424
      %p438 = scmp.eq.s32.totalorder %s33, 1
      %p439 = por %p437, %p438
      %p441 = scmp.ne.s32.totalorder %s424, %s440
      %p442 = scmp.eq.s32.totalorder %s33, 0
      %p443 = por %p441, %p442
      %p444 = scmp.le.s32.totalorder 1, %s27
      %p445 = scmp.lt.s32.totalorder %s27, 3
      %p446 = pnand %p444, %p445
      %p447 = pneg %p446
      // Predicated region
      $region9: #{encoder_forward.1} parent=5 // pred_check
        _
      $region10: #{encoder_forward.1} parent=5 // pred_check_branch
        %449 = sbr.rel (%p446) target = $region12
      $region11: #{encoder_forward.1} parent=5 // pred_region
        %s450 = ssub.s32 %s27, 1
        // Predicated region
        $region13: #{encoder_forward.1} parent=11 // pred_check
          %p451 = pneg %p74
        $region14: #{encoder_forward.1} parent=11 // pred_check_branch
          %453 = sbr.rel (%p451) target = $region16
        $region15: #{encoder_forward.1} parent=11 // pred_region
          _
        $region16: #{encoder_forward.1} parent=11 // pred_fallthru
          _
        // Predicated region
        $region17: #{encoder_forward.1} parent=11 // pred_check
          %p454 = pneg %p95
        $region18: #{encoder_forward.1} parent=11 // pred_check_branch
          %456 = sbr.rel (%p454) target = $region20
        $region19: #{encoder_forward.1} parent=11 // pred_region
          _
        $region20: #{encoder_forward.1} parent=11 // pred_fallthru
          _
        // Predicated region
        $region21: #{encoder_forward.1} parent=11 // pred_check
          %p457 = pneg %p116
        $region22: #{encoder_forward.1} parent=11 // pred_check_branch
          %459 = sbr.rel (%p457) target = $region24
        $region23: #{encoder_forward.1} parent=11 // pred_region
          _
        $region24: #{encoder_forward.1} parent=11 // pred_fallthru
          _
        // Predicated region
        $region25: #{encoder_forward.1} parent=11 // pred_check
          %p460 = pneg %p137
        $region26: #{encoder_forward.1} parent=11 // pred_check_branch
          %462 = sbr.rel (%p460) target = $region28
        $region27: #{encoder_forward.1} parent=11 // pred_region
          _
        $region28: #{encoder_forward.1} parent=11 // pred_fallthru
          _
        // Predicated region
        $region29: #{encoder_forward.1} parent=11 // pred_check
          %p463 = pneg %p158
        $region30: #{encoder_forward.1} parent=11 // pred_check_branch
          %465 = sbr.rel (%p463) target = $region32
        $region31: #{encoder_forward.1} parent=11 // pred_region
          _
        $region32: #{encoder_forward.1} parent=11 // pred_fallthru
          _
        // Predicated region
        $region33: #{encoder_forward.1} parent=11 // pred_check
          %p466 = pneg %p179
        $region34: #{encoder_forward.1} parent=11 // pred_check_branch
          %468 = sbr.rel (%p466) target = $region36
        $region35: #{encoder_forward.1} parent=11 // pred_region
          _
        $region36: #{encoder_forward.1} parent=11 // pred_fallthru
          _
        // Predicated region
        $region37: #{encoder_forward.1} parent=11 // pred_check
          %p469 = pneg %p200
        $region38: #{encoder_forward.1} parent=11 // pred_check_branch
          %471 = sbr.rel (%p469) target = $region40
        $region39: #{encoder_forward.1} parent=11 // pred_region
          _
        $region40: #{encoder_forward.1} parent=11 // pred_fallthru
          _
        // Predicated region
        $region41: #{encoder_forward.1} parent=11 // pred_check
          %p472 = pneg %p221
        $region42: #{encoder_forward.1} parent=11 // pred_check_branch
          %474 = sbr.rel (%p472) target = $region44
        $region43: #{encoder_forward.1} parent=11 // pred_region
          _
        $region44: #{encoder_forward.1} parent=11 // pred_fallthru
          _
        // Predicated region
        $region45: #{encoder_forward.1} parent=11 // pred_check
          %p475 = pneg %p242
        $region46: #{encoder_forward.1} parent=11 // pred_check_branch
          %477 = sbr.rel (%p475) target = $region48
        $region47: #{encoder_forward.1} parent=11 // pred_region
          _
        $region48: #{encoder_forward.1} parent=11 // pred_fallthru
          _
        // Predicated region
        $region49: #{encoder_forward.1} parent=11 // pred_check
          %p478 = pneg %p263
        $region50: #{encoder_forward.1} parent=11 // pred_check_branch
          %480 = sbr.rel (%p478) target = $region52
        $region51: #{encoder_forward.1} parent=11 // pred_region
          _
        $region52: #{encoder_forward.1} parent=11 // pred_fallthru
          _
        // Predicated region
        $region53: #{encoder_forward.1} parent=11 // pred_check
          %p481 = pneg %p284
        $region54: #{encoder_forward.1} parent=11 // pred_check_branch
          %483 = sbr.rel (%p481) target = $region56
        $region55: #{encoder_forward.1} parent=11 // pred_region
          _
        $region56: #{encoder_forward.1} parent=11 // pred_fallthru
          _
        // Predicated region
        $region57: #{encoder_forward.1} parent=11 // pred_check
          %p484 = pneg %p305
        $region58: #{encoder_forward.1} parent=11 // pred_check_branch
          %486 = sbr.rel (%p484) target = $region60
        $region59: #{encoder_forward.1} parent=11 // pred_region
          _
        $region60: #{encoder_forward.1} parent=11 // pred_fallthru
          _
        // Predicated region
        $region61: #{encoder_forward.1} parent=11 // pred_check
          %p487 = pneg %p326
        $region62: #{encoder_forward.1} parent=11 // pred_check_branch
          %489 = sbr.rel (%p487) target = $region64
        $region63: #{encoder_forward.1} parent=11 // pred_region
          _
        $region64: #{encoder_forward.1} parent=11 // pred_fallthru
          _
        // Predicated region
        $region65: #{encoder_forward.1} parent=11 // pred_check
          %p490 = pneg %p347
        $region66: #{encoder_forward.1} parent=11 // pred_check_branch
          %492 = sbr.rel (%p490) target = $region68
        $region67: #{encoder_forward.1} parent=11 // pred_region
          _
        $region68: #{encoder_forward.1} parent=11 // pred_fallthru
          _
        // Predicated region
        $region69: #{encoder_forward.1} parent=11 // pred_check
          %p493 = pneg %p368
        $region70: #{encoder_forward.1} parent=11 // pred_check_branch
          %495 = sbr.rel (%p493) target = $region72
        $region71: #{encoder_forward.1} parent=11 // pred_region
          _
        $region72: #{encoder_forward.1} parent=11 // pred_fallthru
          _
        // Predicated region
        $region73: #{encoder_forward.1} parent=11 // pred_check
          %p496 = pneg %p389
        $region74: #{encoder_forward.1} parent=11 // pred_check_branch
          %498 = sbr.rel (%p496) target = $region76
        $region75: #{encoder_forward.1} parent=11 // pred_region
          _
        $region76: #{encoder_forward.1} parent=11 // pred_fallthru
          _
        // Predicated region
        $region77: #{encoder_forward.1} parent=11 // pred_check
          %p499 = pneg %p410
        $region78: #{encoder_forward.1} parent=11 // pred_check_branch
          %501 = sbr.rel (%p499) target = $region80
        $region79: #{encoder_forward.1} parent=11 // pred_region
          _
        $region80: #{encoder_forward.1} parent=11 // pred_fallthru
          _
      $region12: #{encoder_forward.1} parent=5 // pred_fallthru
        _
      %p502 = scmp.lt.s32.totalorder %s27, 2
      // Predicated region
      $region81: #{encoder_forward.1} parent=5 // pred_check
        %p503 = pneg %p502
      $region82: #{encoder_forward.1} parent=5 // pred_check_branch
        %505 = sbr.rel (%p503) target = $region84
      $region83: #{encoder_forward.1} parent=5 // pred_region
        // Predicated region
        $region85: #{encoder_forward.1} parent=83 // pred_check
          %p506 = pneg %p47
        $region86: #{encoder_forward.1} parent=83 // pred_check_branch
          %508 = sbr.rel (%p506) target = $region88
        $region87: #{encoder_forward.1} parent=83 // pred_region
          %p509 = scmp.lt.s32.totalorder %s27, 1
          %s510 = scalar_select %p509, %s27, 1
          %s511 = smul.addr %s510, 4
          %s512 = smul.addr %s511, 8
          %s513 = scalar_lea.vmem %s0, %s512
        $region88: #{encoder_forward.1} parent=83 // pred_fallthru
          _
      $region84: #{encoder_forward.1} parent=5 // pred_fallthru
        _
      %p514 = scmp.le.s32.totalorder 1, %s27
      %p515 = scmp.lt.s32.totalorder %s27, 3
      %p516 = pnand %p514, %p515
      %p517 = pneg %p516
      // Predicated region
      $region89: #{encoder_forward.1} parent=5 // pred_check
        _
      $region90: #{encoder_forward.1} parent=5 // pred_check_branch
        %519 = sbr.rel (%p516) target = $region92
      $region91: #{encoder_forward.1} parent=5 // pred_region
        %s520 = ssub.s32 %s27, 1
        %p521 = scmp.lt.s32.totalorder %s32, 1
        %s522 = scalar_select %p521, %s32, 1
        %s523 = smul.addr %s522, 4
        %s524 = smul.addr %s523, 8
        %s525 = scalar_lea.vmem %s0, %s524
        %p526 = pneg %p53
        %p527 = pneg %p50
        %p528 = pneg %p74
        %p529 = pneg %p71
        %p530 = pneg %p95
        %p531 = pneg %p92
        %p532 = pneg %p116
        %p533 = pneg %p113
        %p534 = pneg %p137
        %p535 = pneg %p134
        %p536 = pneg %p158
        %p537 = pneg %p155
        %p538 = pneg %p179
        %p539 = pneg %p176
        %p540 = pneg %p200
        %p541 = pneg %p197
        %p542 = pneg %p221
        %p543 = pneg %p218
        %p544 = pneg %p242
        %p545 = pneg %p239
        %p546 = pneg %p263
        %p547 = pneg %p260
        %p548 = pneg %p284
        %p549 = pneg %p281
        %p550 = pneg %p305
        %p551 = pneg %p302
        %p552 = pneg %p326
        %p553 = pneg %p323
        %p554 = pneg %p347
        %p555 = pneg %p344
        %p556 = pneg %p368
        %p557 = pneg %p365
        %p558 = pneg %p389
        %p559 = pneg %p386
        %p560 = pneg %p410
        %p561 = pneg %p407
        %p562 = pneg %p436
        %p563 = pneg %p433
        %s564 = sand.u32 %s423, 1
        %s565 = scalar_lea.sflag [#allocation3], %s564
        %s566 = sand.u32 %s423, 1
        %s567 = scalar_lea.vmem [#allocation2], %s566
        %p568 = scmp.lt.s32.totalorder %s32, 1
        %s569 = scalar_select %p568, %s32, 1
        %s570 = smul.addr %s569, 4
        %s571 = smul.addr %s570, 8
        %s572 = scalar_lea.vmem %s0, %s571
        %v574 = vld [vmem:[%s572] sm:$0xff]
        %v575 = vld [vmem:[%s572 + $0x8] sm:$0xff]
        %v576 = vld [vmem:[%s572 + $0x10] sm:$0xff]
        %v577 = vld [vmem:[%s572 + $0x18] sm:$0xff]
        %v578 = vpack.c.bf16 %v575, %v574
        %v579 = vpack.c.bf16 %v577, %v576
        %v580 = vld [vmem:[%s1] sm:$0xf]
        %v581 = vld [vmem:[%s1 + $0x4] sm:$0xf]
        %v584 = vunpack.c.l.b16 %v580
        %v585 = vunpack.c.l.b16 %v581
        %v586 = vpack.c.b16 %v585, %v584
        %vm587 = vcmask 261120
        %v589 = vsel %vm587, %v586, 0
        %591 = vmatprep.subr.bf16.mxu0 0
        %592 = vmatpush1.bf16.msra.mxu0 %v578
        %593 = vmatprep.subr.bf16.mxu0 0
        %594 = vmatpush1.bf16.msra.mxu0 %v579
        %595 = vmatprep.subr.bf16.mxu0 0
        %596 = vmatpush1.bf16.msra.mxu0 0
        %597 = vmatprep.subr.bf16.mxu0 0
        %598 = vmatpush1.bf16.msra.mxu0 0
        %599 = vmatprep.subr.bf16.mxu0 0
        %600 = vmatpush1.bf16.msra.mxu0 0
        %601 = vmatprep.subr.bf16.mxu0 0
        %602 = vmatpush1.bf16.msra.mxu0 0
        %603 = vmatprep.subr.bf16.mxu0 0
        %604 = vmatpush1.bf16.msra.mxu0 0
        %605 = vmatprep.subr.bf16.mxu0 0
        %606 = vmatpush1.bf16.msra.mxu0 0
        %607 = vmatprep.subr.bf16.mxu0 0
        %608 = vmatpush1.bf16.msra.mxu0 0
        %609 = vmatprep.subr.bf16.mxu0 0
        %610 = vmatpush1.bf16.msra.mxu0 0
        %611 = vmatprep.subr.bf16.mxu0 0
        %612 = vmatpush1.bf16.msra.mxu0 0
        %613 = vmatprep.subr.bf16.mxu0 0
        %614 = vmatpush1.bf16.msra.mxu0 0
        %615 = vmatprep.subr.bf16.mxu0 0
        %616 = vmatpush1.bf16.msra.mxu0 0
        %617 = vmatprep.subr.bf16.mxu0 0
        %618 = vmatpush1.bf16.msra.mxu0 0
        %619 = vmatprep.subr.bf16.mxu0 0
        %620 = vmatpush1.bf16.msra.mxu0 0
        %621 = vmatprep.subr.bf16.mxu0 0
        %622 = vmatpush1.bf16.msra.mxu0 0
        %623 = vmatprep.mubr.bf16.mxu0 0
        %624 = vmatmul.mubr.bf16.gmra.mrb[0].mxu0 %v589
        %v625 = vpop.f32.mrb[0].mxu0
        %v626 = vadd.f32 0.0, %v625
        %v627 = vpop.f32.mrb[0].mxu0
        %v628 = vpop.f32.mrb[0].mxu0
        %v629 = vadd.f32 0.0, %v628
        %v630 = vpop.f32.mrb[0].mxu0
        %631 = vdwg.mxu0
        %v632 = vpack.c.bf16 %v629, %v626
        %v633 = vld [vmem:[%s2] sm:$0xf]
        %v634 = vld [vmem:[%s2 + $0x4] sm:$0xf]
        %v635 = vld [vmem:[%s2 + $0x8] sm:$0xf]
        %v636 = vld [vmem:[%s2 + $0xc] sm:$0xf]
        %v637 = vld [vmem:[%s2 + $0x10] sm:$0xf]
        %v638 = vld [vmem:[%s2 + $0x14] sm:$0xf]
        %v639 = vld [vmem:[%s2 + $0x18] sm:$0xf]
        %v640 = vld [vmem:[%s2 + $0x1c] sm:$0xf]
        %v641 = vld [vmem:[%s2 + $0x20] sm:$0xf]
        %v642 = vld [vmem:[%s2 + $0x24] sm:$0xf]
        %v643 = vld [vmem:[%s2 + $0x28] sm:$0xf]
        %v644 = vld [vmem:[%s2 + $0x2c] sm:$0xf]
        %s645 = scalar_lea.vmem %s1, 8
        %v646 = vld [vmem:[%s645] sm:$0xf]
        %v647 = vld [vmem:[%s645 + $0x4] sm:$0xf]
        %v650 = vunpack.c.l.b16 %v646
        %v651 = vunpack.c.l.b16 %v647
        %v652 = vpack.c.b16 %v651, %v650
        %v654 = vsel %vm587, %v652, 0
        %656 = vmatprep.subr.bf16.mxu0 0
        %657 = vmatpush1.bf16.msra.mxu0 %v578
        %658 = vmatprep.subr.bf16.mxu0 0
        %659 = vmatpush1.bf16.msra.mxu0 %v579
        %660 = vmatprep.subr.bf16.mxu0 0
        %661 = vmatpush1.bf16.msra.mxu0 0
        %662 = vmatprep.subr.bf16.mxu0 0
        %663 = vmatpush1.bf16.msra.mxu0 0
        %664 = vmatprep.subr.bf16.mxu0 0
        %665 = vmatpush1.bf16.msra.mxu0 0
        %666 = vmatprep.subr.bf16.mxu0 0
        %667 = vmatpush1.bf16.msra.mxu0 0
        %668 = vmatprep.subr.bf16.mxu0 0
        %669 = vmatpush1.bf16.msra.mxu0 0
        %670 = vmatprep.subr.bf16.mxu0 0
        %671 = vmatpush1.bf16.msra.mxu0 0
        %672 = vmatprep.subr.bf16.mxu0 0
        %673 = vmatpush1.bf16.msra.mxu0 0
        %674 = vmatprep.subr.bf16.mxu0 0
        %675 = vmatpush1.bf16.msra.mxu0 0
        %676 = vmatprep.subr.bf16.mxu0 0
        %677 = vmatpush1.bf16.msra.mxu0 0
        %678 = vmatprep.subr.bf16.mxu0 0
        %679 = vmatpush1.bf16.msra.mxu0 0
        %680 = vmatprep.subr.bf16.mxu0 0
        %681 = vmatpush1.bf16.msra.mxu0 0
        %682 = vmatprep.subr.bf16.mxu0 0
        %683 = vmatpush1.bf16.msra.mxu0 0
        %684 = vmatprep.subr.bf16.mxu0 0
        %685 = vmatpush1.bf16.msra.mxu0 0
        %686 = vmatprep.subr.bf16.mxu0 0
        %687 = vmatpush1.bf16.msra.mxu0 0
        %688 = vmatprep.mubr.bf16.mxu0 0
        %689 = vmatmul.mubr.bf16.gmra.mrb[0].mxu0 %v654
        %v690 = vpop.f32.mrb[0].mxu0
        %v691 = vadd.f32 0.0, %v690
        %v692 = vpop.f32.mrb[0].mxu0
        %v693 = vpop.f32.mrb[0].mxu0
        %v694 = vadd.f32 0.0, %v693
        %v695 = vpop.f32.mrb[0].mxu0
        %696 = vdwg.mxu0
        %v697 = vpack.c.bf16 %v694, %v691
        %s698 = scalar_lea.vmem %s2, 48
        %v699 = vld [vmem:[%s698] sm:$0xf]
        %v700 = vld [vmem:[%s698 + $0x4] sm:$0xf]
        %v701 = vld [vmem:[%s698 + $0x8] sm:$0xf]
        %v702 = vld [vmem:[%s698 + $0xc] sm:$0xf]
        %v703 = vld [vmem:[%s698 + $0x10] sm:$0xf]
        %v704 = vld [vmem:[%s698 + $0x14] sm:$0xf]
        %v705 = vld [vmem:[%s698 + $0x18] sm:$0xf]
        %v706 = vld [vmem:[%s698 + $0x1c] sm:$0xf]
        %v707 = vld [vmem:[%s698 + $0x20] sm:$0xf]
        %v708 = vld [vmem:[%s698 + $0x24] sm:$0xf]
        %v709 = vld [vmem:[%s698 + $0x28] sm:$0xf]
        %v710 = vld [vmem:[%s698 + $0x2c] sm:$0xf]
        %v723 = vunpack.c.l.b16 %v699
        %v724 = vunpack.c.l.b16 %v700
        %v725 = vunpack.c.l.b16 %v701
        %v726 = vunpack.c.l.b16 %v702
        %v727 = vunpack.c.l.b16 %v703
        %v728 = vunpack.c.l.b16 %v704
        %v729 = vunpack.c.l.b16 %v705
        %v730 = vunpack.c.l.b16 %v706
        %v731 = vunpack.c.l.b16 %v707
        %v732 = vunpack.c.l.b16 %v708
        %v733 = vunpack.c.l.b16 %v709
        %v734 = vunpack.c.l.b16 %v710
        %v735 = vpack.c.b16 %v724, %v723
        %v736 = vpack.c.b16 %v726, %v725
        %v737 = vpack.c.b16 %v728, %v727
        %v738 = vpack.c.b16 %v730, %v729
        %v739 = vpack.c.b16 %v732, %v731
        %v740 = vpack.c.b16 %v734, %v733
        %vm747 = vcmask 785408
        %v749 = vsel %vm747, %v697, 0
        %751 = vmatprep.subr.bf16.mxu0 0
        %752 = vmatpush1.bf16.msra.mxu0 %v735
        %753 = vmatprep.subr.bf16.mxu0 0
        %754 = vmatpush1.bf16.msra.mxu0 %v736
        %755 = vmatprep.subr.bf16.mxu0 0
        %756 = vmatpush1.bf16.msra.mxu0 %v737
        %757 = vmatprep.subr.bf16.mxu0 0
        %758 = vmatpush1.bf16.msra.mxu0 %v738
        %759 = vmatprep.subr.bf16.mxu0 0
        %760 = vmatpush1.bf16.msra.mxu0 %v739
        %761 = vmatprep.subr.bf16.mxu0 0
        %762 = vmatpush1.bf16.msra.mxu0 %v740
        %763 = vmatprep.subr.bf16.mxu0 0
        %764 = vmatpush1.bf16.msra.mxu0 0
        %765 = vmatprep.subr.bf16.mxu0 0
        %766 = vmatpush1.bf16.msra.mxu0 0
        %767 = vmatprep.subr.bf16.mxu0 0
        %768 = vmatpush1.bf16.msra.mxu0 0
        %769 = vmatprep.subr.bf16.mxu0 0
        %770 = vmatpush1.bf16.msra.mxu0 0
        %771 = vmatprep.subr.bf16.mxu0 0
        %772 = vmatpush1.bf16.msra.mxu0 0
        %773 = vmatprep.subr.bf16.mxu0 0
        %774 = vmatpush1.bf16.msra.mxu0 0
        %775 = vmatprep.subr.bf16.mxu0 0
        %776 = vmatpush1.bf16.msra.mxu0 0
        %777 = vmatprep.subr.bf16.mxu0 0
        %778 = vmatpush1.bf16.msra.mxu0 0
        %779 = vmatprep.subr.bf16.mxu0 0
        %780 = vmatpush1.bf16.msra.mxu0 0
        %781 = vmatprep.subr.bf16.mxu0 0
        %782 = vmatpush1.bf16.msra.mxu0 0
        %783 = vmatprep.mubr.bf16.mxu0 0
        %784 = vmatmul.mubr.bf16.gmra.mrb[0].mxu0 %v749
        %v785 = vpop.f32.mrb[0].mxu0
        %v786 = vadd.f32 0.0, %v785
        %v787 = vpop.f32.mrb[0].mxu0
        %v788 = vpop.f32.mrb[0].mxu0
        %v789 = vadd.f32 0.0, %v788
        %v790 = vpop.f32.mrb[0].mxu0
        %791 = vdwg.mxu0
        %v804 = vunpack.c.l.b16 %v633
        %v805 = vunpack.c.l.b16 %v634
        %v806 = vunpack.c.l.b16 %v635
        %v807 = vunpack.c.l.b16 %v636
        %v808 = vunpack.c.l.b16 %v637
        %v809 = vunpack.c.l.b16 %v638
        %v810 = vunpack.c.l.b16 %v639
        %v811 = vunpack.c.l.b16 %v640
        %v812 = vunpack.c.l.b16 %v641
        %v813 = vunpack.c.l.b16 %v642
        %v814 = vunpack.c.l.b16 %v643
        %v815 = vunpack.c.l.b16 %v644
        %v816 = vpack.c.b16 %v805, %v804
        %v817 = vpack.c.b16 %v807, %v806
        %v818 = vpack.c.b16 %v809, %v808
        %v819 = vpack.c.b16 %v811, %v810
        %v820 = vpack.c.b16 %v813, %v812
        %v821 = vpack.c.b16 %v815, %v814
        %v829 = vsel %vm747, %v632, 0
        %831 = vmatprep.subr.bf16.mxu0 0
        %832 = vmatpush1.bf16.msra.mxu0 %v816
        %833 = vmatprep.subr.bf16.mxu0 0
        %834 = vmatpush1.bf16.msra.mxu0 %v817
        %835 = vmatprep.subr.bf16.mxu0 0
        %836 = vmatpush1.bf16.msra.mxu0 %v818
        %837 = vmatprep.subr.bf16.mxu0 0
        %838 = vmatpush1.bf16.msra.mxu0 %v819
        %839 = vmatprep.subr.bf16.mxu0 0
        %840 = vmatpush1.bf16.msra.mxu0 %v820
        %841 = vmatprep.subr.bf16.mxu0 0
        %842 = vmatpush1.bf16.msra.mxu0 %v821
        %843 = vmatprep.subr.bf16.mxu0 0
        %844 = vmatpush1.bf16.msra.mxu0 0
        %845 = vmatprep.subr.bf16.mxu0 0
        %846 = vmatpush1.bf16.msra.mxu0 0
        %847 = vmatprep.subr.bf16.mxu0 0
        %848 = vmatpush1.bf16.msra.mxu0 0
        %849 = vmatprep.subr.bf16.mxu0 0
        %850 = vmatpush1.bf16.msra.mxu0 0
        %851 = vmatprep.subr.bf16.mxu0 0
        %852 = vmatpush1.bf16.msra.mxu0 0
        %853 = vmatprep.subr.bf16.mxu0 0
        %854 = vmatpush1.bf16.msra.mxu0 0
        %855 = vmatprep.subr.bf16.mxu0 0
        %856 = vmatpush1.bf16.msra.mxu0 0
        %857 = vmatprep.subr.bf16.mxu0 0
        %858 = vmatpush1.bf16.msra.mxu0 0
        %859 = vmatprep.subr.bf16.mxu0 0
        %860 = vmatpush1.bf16.msra.mxu0 0
        %861 = vmatprep.subr.bf16.mxu0 0
        %862 = vmatpush1.bf16.msra.mxu0 0
        %863 = vmatprep.mubr.bf16.mxu0 0
        %864 = vmatmul.mubr.bf16.gmra.mrb[0].mxu0 %v829
        %v865 = vpop.f32.mrb[0].mxu0
        %v866 = vadd.f32 %v786, %v865
        %v867 = vpop.f32.mrb[0].mxu0
        %v868 = vpop.f32.mrb[0].mxu0
        %v869 = vadd.f32 %v789, %v868
        %v870 = vpop.f32.mrb[0].mxu0
        %871 = vdwg.mxu0
        %s872 = scalar_lea.vmem %s1, 16
        %v873 = vld [vmem:[%s872] sm:$0xf]
        %v874 = vld [vmem:[%s872 + $0x4] sm:$0xf]
        %v877 = vunpack.c.l.b16 %v873
        %v878 = vunpack.c.l.b16 %v874
        %v879 = vpack.c.b16 %v878, %v877
        %v881 = vsel %vm587, %v879, 0
        %883 = vmatprep.subr.bf16.mxu0 0
        %884 = vmatpush1.bf16.msra.mxu0 %v578
        %885 = vmatprep.subr.bf16.mxu0 0
        %886 = vmatpush1.bf16.msra.mxu0 %v579
        %887 = vmatprep.subr.bf16.mxu0 0
        %888 = vmatpush1.bf16.msra.mxu0 0
        %889 = vmatprep.subr.bf16.mxu0 0
        %890 = vmatpush1.bf16.msra.mxu0 0
        %891 = vmatprep.subr.bf16.mxu0 0
        %892 = vmatpush1.bf16.msra.mxu0 0
        %893 = vmatprep.subr.bf16.mxu0 0
        %894 = vmatpush1.bf16.msra.mxu0 0
        %895 = vmatprep.subr.bf16.mxu0 0
        %896 = vmatpush1.bf16.msra.mxu0 0
        %897 = vmatprep.subr.bf16.mxu0 0
        %898 = vmatpush1.bf16.msra.mxu0 0
        %899 = vmatprep.subr.bf16.mxu0 0
        %900 = vmatpush1.bf16.msra.mxu0 0
        %901 = vmatprep.subr.bf16.mxu0 0
        %902 = vmatpush1.bf16.msra.mxu0 0
        %903 = vmatprep.subr.bf16.mxu0 0
        %904 = vmatpush1.bf16.msra.mxu0 0
        %905 = vmatprep.subr.bf16.mxu0 0
        %906 = vmatpush1.bf16.msra.mxu0 0
        %907 = vmatprep.subr.bf16.mxu0 0
        %908 = vmatpush1.bf16.msra.mxu0 0
        %909 = vmatprep.subr.bf16.mxu0 0
        %910 = vmatpush1.bf16.msra.mxu0 0
        %911 = vmatprep.subr.bf16.mxu0 0
        %912 = vmatpush1.bf16.msra.mxu0 0
        %913 = vmatprep.subr.bf16.mxu0 0
        %914 = vmatpush1.bf16.msra.mxu0 0
        %915 = vmatprep.mubr.bf16.mxu0 0
        %916 = vmatmul.mubr.bf16.gmra.mrb[0].mxu0 %v881
        %v917 = vpop.f32.mrb[0].mxu0
        %v918 = vadd.f32 0.0, %v917
        %v919 = vpop.f32.mrb[0].mxu0
        %v920 = vpop.f32.mrb[0].mxu0
        %v921 = vadd.f32 0.0, %v920
        %v922 = vpop.f32.mrb[0].mxu0
        %923 = vdwg.mxu0
        %v924 = vpack.c.bf16 %v921, %v918
        %s925 = scalar_lea.vmem %s2, 96
        %v926 = vld [vmem:[%s925] sm:$0xf]
        %v927 = vld [vmem:[%s925 + $0x4] sm:$0xf]
        %v928 = vld [vmem:[%s925 + $0x8] sm:$0xf]
        %v929 = vld [vmem:[%s925 + $0xc] sm:$0xf]
        %v930 = vld [vmem:[%s925 + $0x10] sm:$0xf]
        %v931 = vld [vmem:[%s925 + $0x14] sm:$0xf]
        %v932 = vld [vmem:[%s925 + $0x18] sm:$0xf]
        %v933 = vld [vmem:[%s925 + $0x1c] sm:$0xf]
        %v934 = vld [vmem:[%s925 + $0x20] sm:$0xf]
        %v935 = vld [vmem:[%s925 + $0x24] sm:$0xf]
        %v936 = vld [vmem:[%s925 + $0x28] sm:$0xf]
        %v937 = vld [vmem:[%s925 + $0x2c] sm:$0xf]
        %v950 = vunpack.c.l.b16 %v926
        %v951 = vunpack.c.l.b16 %v927
        %v952 = vunpack.c.l.b16 %v928
        %v953 = vunpack.c.l.b16 %v929
        %v954 = vunpack.c.l.b16 %v930
        %v955 = vunpack.c.l.b16 %v931
        %v956 = vunpack.c.l.b16 %v932
        %v957 = vunpack.c.l.b16 %v933
        %v958 = vunpack.c.l.b16 %v934
        %v959 = vunpack.c.l.b16 %v935
        %v960 = vunpack.c.l.b16 %v936
        %v961 = vunpack.c.l.b16 %v937
        %v962 = vpack.c.b16 %v951, %v950
        %v963 = vpack.c.b16 %v953, %v952
        %v964 = vpack.c.b16 %v955, %v954
        %v965 = vpack.c.b16 %v957, %v956
        %v966 = vpack.c.b16 %v959, %v958
        %v967 = vpack.c.b16 %v961, %v960
        %v975 = vsel %vm747, %v924, 0
        %977 = vmatprep.subr.bf16.mxu0 0
        %978 = vmatpush1.bf16.msra.mxu0 %v962
        %979 = vmatprep.subr.bf16.mxu0 0
        %980 = vmatpush1.bf16.msra.mxu0 %v963
        %981 = vmatprep.subr.bf16.mxu0 0
        %982 = vmatpush1.bf16.msra.mxu0 %v964
        %983 = vmatprep.subr.bf16.mxu0 0
        %984 = vmatpush1.bf16.msra.mxu0 %v965
        %985 = vmatprep.subr.bf16.mxu0 0
        %986 = vmatpush1.bf16.msra.mxu0 %v966
        %987 = vmatprep.subr.bf16.mxu0 0
        %988 = vmatpush1.bf16.msra.mxu0 %v967
        %989 = vmatprep.subr.bf16.mxu0 0
        %990 = vmatpush1.bf16.msra.mxu0 0
        %991 = vmatprep.subr.bf16.mxu0 0
        %992 = vmatpush1.bf16.msra.mxu0 0
        %993 = vmatprep.subr.bf16.mxu0 0
        %994 = vmatpush1.bf16.msra.mxu0 0
        %995 = vmatprep.subr.bf16.mxu0 0
        %996 = vmatpush1.bf16.msra.mxu0 0
        %997 = vmatprep.subr.bf16.mxu0 0
        %998 = vmatpush1.bf16.msra.mxu0 0
        %999 = vmatprep.subr.bf16.mxu0 0
        %1000 = vmatpush1.bf16.msra.mxu0 0
        %1001 = vmatprep.subr.bf16.mxu0 0
        %1002 = vmatpush1.bf16.msra.mxu0 0
        %1003 = vmatprep.subr.bf16.mxu0 0
        %1004 = vmatpush1.bf16.msra.mxu0 0
        %1005 = vmatprep.subr.bf16.mxu0 0
        %1006 = vmatpush1.bf16.msra.mxu0 0
        %1007 = vmatprep.subr.bf16.mxu0 0
        %1008 = vmatpush1.bf16.msra.mxu0 0
        %1009 = vmatprep.mubr.bf16.mxu0 0
        %1010 = vmatmul.mubr.bf16.gmra.mrb[0].mxu0 %v975
        %v1011 = vpop.f32.mrb[0].mxu0
        %v1012 = vadd.f32 0.0, %v1011
        %v1013 = vpop.f32.mrb[0].mxu0
        %v1014 = vpop.f32.mrb[0].mxu0
        %v1015 = vadd.f32 0.0, %v1014
        %v1016 = vpop.f32.mrb[0].mxu0
        %1017 = vdwg.mxu0
        %v1018 = vadd.f32 %v866, %v1012
        %v1019 = vadd.f32 %v869, %v1015
        %v1020 = vld [vmem:[%s3] sm:$0x1]
        %v1022 = vlaneseq
        %v1023 = vshrl.u32 %v1022, 7
        %v1024 = vsub.s32 0, %v1023
        %v1025 = vrot.slane %v1020, %v1024
        %v1027 = vadd.f32 %v1018, %v1025
        %v1028 = vadd.f32 %v1019, %v1025
        %v1029 = vmul.f32 %v1027, 0.5
        %v1030 = vmul.f32 %v1028, 0.5
        %v1031 = vmul.f32 %v1027, 0.70710677
        %v1032 = vmul.f32 %v1028, 0.70710677
        %v1033 = verf.f32.pop %v1031
        %v1034 = verf.f32.pop %v1032
        %v1035 = vadd.f32 %v1033, 1.0
        %v1036 = vadd.f32 %v1034, 1.0
        %v1037 = vmul.f32 %v1029, %v1035
        %v1038 = vmul.f32 %v1030, %v1036
        %v1039 = vpack.c.bf16 %v1038, %v1037
        %v1040 = vld [vmem:[%s4] sm:$0xf]
        %v1041 = vld [vmem:[%s4 + $0x4] sm:$0xf]
        %v1044 = vunpack.c.l.b16 %v1040
        %v1045 = vunpack.c.l.b16 %v1041
        %v1046 = vpack.c.b16 %v1045, %v1044
        %vm1047 = vcmask 130048
        %v1049 = vsel %vm1047, %v1046, 0
        %1051 = vmatprep.subr.bf16.mxu0 0
        %1052 = vmatpush1.bf16.msra.mxu0 %v1039
        %1053 = vmatprep.subr.bf16.mxu0 0
        %1054 = vmatpush1.bf16.msra.mxu0 0
        %1055 = vmatprep.subr.bf16.mxu0 0
        %1056 = vmatpush1.bf16.msra.mxu0 0
        %1057 = vmatprep.subr.bf16.mxu0 0
        %1058 = vmatpush1.bf16.msra.mxu0 0
        %1059 = vmatprep.subr.bf16.mxu0 0
        %1060 = vmatpush1.bf16.msra.mxu0 0
        %1061 = vmatprep.subr.bf16.mxu0 0
        %1062 = vmatpush1.bf16.msra.mxu0 0
        %1063 = vmatprep.subr.bf16.mxu0 0
        %1064 = vmatpush1.bf16.msra.mxu0 0
        %1065 = vmatprep.subr.bf16.mxu0 0
        %1066 = vmatpush1.bf16.msra.mxu0 0
        %1067 = vmatprep.subr.bf16.mxu0 0
        %1068 = vmatpush1.bf16.msra.mxu0 0
        %1069 = vmatprep.subr.bf16.mxu0 0
        %1070 = vmatpush1.bf16.msra.mxu0 0
        %1071 = vmatprep.subr.bf16.mxu0 0
        %1072 = vmatpush1.bf16.msra.mxu0 0
        %1073 = vmatprep.subr.bf16.mxu0 0
        %1074 = vmatpush1.bf16.msra.mxu0 0
        %1075 = vmatprep.subr.bf16.mxu0 0
        %1076 = vmatpush1.bf16.msra.mxu0 0
        %1077 = vmatprep.subr.bf16.mxu0 0
        %1078 = vmatpush1.bf16.msra.mxu0 0
        %1079 = vmatprep.subr.bf16.mxu0 0
        %1080 = vmatpush1.bf16.msra.mxu0 0
        %1081 = vmatprep.subr.bf16.mxu0 0
        %1082 = vmatpush1.bf16.msra.mxu0 0
        %1083 = vmatprep.mubr.bf16.mxu0 0
        %1084 = vmatmul.mubr.bf16.gmra.mrb[0].mxu0 %v1049
        %v1085 = vpop.f32.mrb[0].mxu0
        %v1086 = vadd.f32 0.0, %v1085
        %v1087 = vpop.f32.mrb[0].mxu0
        %v1088 = vpop.f32.mrb[0].mxu0
        %v1089 = vadd.f32 0.0, %v1088
        %v1090 = vpop.f32.mrb[0].mxu0
        %1091 = vdwg.mxu0
        %v1092 = vpack.c.bf16 %v1089, %v1086
        %v1093 = vld [vmem:[%s5] sm:$0xf]
        %v1094 = vld [vmem:[%s5 + $0x4] sm:$0xf]
        %v1095 = vld [vmem:[%s5 + $0x8] sm:$0xf]
        %v1096 = vld [vmem:[%s5 + $0xc] sm:$0xf]
        %v1097 = vld [vmem:[%s5 + $0x10] sm:$0xf]
        %v1098 = vld [vmem:[%s5 + $0x14] sm:$0xf]
        %v1099 = vld [vmem:[%s5 + $0x18] sm:$0xf]
        %v1100 = vld [vmem:[%s5 + $0x1c] sm:$0xf]
        %v1101 = vld [vmem:[%s5 + $0x20] sm:$0xf]
        %v1102 = vld [vmem:[%s5 + $0x24] sm:$0xf]
        %v1103 = vld [vmem:[%s5 + $0x28] sm:$0xf]
        %v1104 = vld [vmem:[%s5 + $0x2c] sm:$0xf]
        %v1105 = vld [vmem:[%s5 + $0x30] sm:$0xf]
        %v1106 = vld [vmem:[%s5 + $0x34] sm:$0xf]
        %v1107 = vld [vmem:[%s5 + $0x38] sm:$0xf]
        %v1108 = vld [vmem:[%s5 + $0x3c] sm:$0xf]
        %s1109 = scalar_lea.vmem %s4, 8
        %v1110 = vld [vmem:[%s1109] sm:$0xf]
        %v1111 = vld [vmem:[%s1109 + $0x4] sm:$0xf]
        %v1114 = vunpack.c.l.b16 %v1110
        %v1115 = vunpack.c.l.b16 %v1111
        %v1116 = vpack.c.b16 %v1115, %v1114
        %v1118 = vsel %vm1047, %v1116, 0
        %1120 = vmatprep.subr.bf16.mxu0 0
        %1121 = vmatpush1.bf16.msra.mxu0 %v1039
        %1122 = vmatprep.subr.bf16.mxu0 0
        %1123 = vmatpush1.bf16.msra.mxu0 0
        %1124 = vmatprep.subr.bf16.mxu0 0
        %1125 = vmatpush1.bf16.msra.mxu0 0
        %1126 = vmatprep.subr.bf16.mxu0 0
        %1127 = vmatpush1.bf16.msra.mxu0 0
        %1128 = vmatprep.subr.bf16.mxu0 0
        %1129 = vmatpush1.bf16.msra.mxu0 0
        %1130 = vmatprep.subr.bf16.mxu0 0
        %1131 = vmatpush1.bf16.msra.mxu0 0
        %1132 = vmatprep.subr.bf16.mxu0 0
        %1133 = vmatpush1.bf16.msra.mxu0 0
        %1134 = vmatprep.subr.bf16.mxu0 0
        %1135 = vmatpush1.bf16.msra.mxu0 0
        %1136 = vmatprep.subr.bf16.mxu0 0
        %1137 = vmatpush1.bf16.msra.mxu0 0
        %1138 = vmatprep.subr.bf16.mxu0 0
        %1139 = vmatpush1.bf16.msra.mxu0 0
        %1140 = vmatprep.subr.bf16.mxu0 0
        %1141 = vmatpush1.bf16.msra.mxu0 0
        %1142 = vmatprep.subr.bf16.mxu0 0
        %1143 = vmatpush1.bf16.msra.mxu0 0
        %1144 = vmatprep.subr.bf16.mxu0 0
        %1145 = vmatpush1.bf16.msra.mxu0 0
        %1146 = vmatprep.subr.bf16.mxu0 0
        %1147 = vmatpush1.bf16.msra.mxu0 0
        %1148 = vmatprep.subr.bf16.mxu0 0
        %1149 = vmatpush1.bf16.msra.mxu0 0
        %1150 = vmatprep.subr.bf16.mxu0 0
        %1151 = vmatpush1.bf16.msra.mxu0 0
        %1152 = vmatprep.mubr.bf16.mxu0 0
        %1153 = vmatmul.mubr.bf16.gmra.mrb[0].mxu0 %v1118
        %v1154 = vpop.f32.mrb[0].mxu0
        %v1155 = vadd.f32 0.0, %v1154
        %v1156 = vpop.f32.mrb[0].mxu0
        %v1157 = vpop.f32.mrb[0].mxu0
        %v1158 = vadd.f32 0.0, %v1157
        %v1159 = vpop.f32.mrb[0].mxu0
        %1160 = vdwg.mxu0
        %v1161 = vpack.c.bf16 %v1158, %v1155
        %s1162 = scalar_lea.vmem %s5, 64
        %v1163 = vld [vmem:[%s1162] sm:$0xf]
        %v1164 = vld [vmem:[%s1162 + $0x4] sm:$0xf]
        %v1165 = vld [vmem:[%s1162 + $0x8] sm:$0xf]
        %v1166 = vld [vmem:[%s1162 + $0xc] sm:$0xf]
        %v1167 = vld [vmem:[%s1162 + $0x10] sm:$0xf]
        %v1168 = vld [vmem:[%s1162 + $0x14] sm:$0xf]
        %v1169 = vld [vmem:[%s1162 + $0x18] sm:$0xf]
        %v1170 = vld [vmem:[%s1162 + $0x1c] sm:$0xf]
        %v1171 = vld [vmem:[%s1162 + $0x20] sm:$0xf]
        %v1172 = vld [vmem:[%s1162 + $0x24] sm:$0xf]
        %v1173 = vld [vmem:[%s1162 + $0x28] sm:$0xf]
        %v1174 = vld [vmem:[%s1162 + $0x2c] sm:$0xf]
        %v1175 = vld [vmem:[%s1162 + $0x30] sm:$0xf]
        %v1176 = vld [vmem:[%s1162 + $0x34] sm:$0xf]
        %v1177 = vld [vmem:[%s1162 + $0x38] sm:$0xf]
        %v1178 = vld [vmem:[%s1162 + $0x3c] sm:$0xf]
        %v1195 = vunpack.c.l.b16 %v1163
        %v1196 = vunpack.c.l.b16 %v1164
        %v1197 = vunpack.c.l.b16 %v1165
        %v1198 = vunpack.c.l.b16 %v1166
        %v1199 = vunpack.c.l.b16 %v1167
        %v1200 = vunpack.c.l.b16 %v1168
        %v1201 = vunpack.c.l.b16 %v1169
        %v1202 = vunpack.c.l.b16 %v1170
        %v1203 = vunpack.c.l.b16 %v1171
        %v1204 = vunpack.c.l.b16 %v1172
        %v1205 = vunpack.c.l.b16 %v1173
        %v1206 = vunpack.c.l.b16 %v1174
        %v1207 = vunpack.c.l.b16 %v1175
        %v1208 = vunpack.c.l.b16 %v1176
        %v1209 = vunpack.c.l.b16 %v1177
        %v1210 = vunpack.c.l.b16 %v1178
        %v1211 = vpack.c.b16 %v1196, %v1195
        %v1212 = vpack.c.b16 %v1198, %v1197
        %v1213 = vpack.c.b16 %v1200, %v1199
        %v1214 = vpack.c.b16 %v1202, %v1201
        %v1215 = vpack.c.b16 %v1204, %v1203
        %v1216 = vpack.c.b16 %v1206, %v1205
        %v1217 = vpack.c.b16 %v1208, %v1207
        %v1218 = vpack.c.b16 %v1210, %v1209
        %1227 = vmatprep.subr.bf16.mxu0 0
        %1228 = vmatpush1.bf16.msra.mxu0 %v1211
        %1229 = vmatprep.subr.bf16.mxu0 0
        %1230 = vmatpush1.bf16.msra.mxu0 %v1212
        %1231 = vmatprep.subr.bf16.mxu0 0
        %1232 = vmatpush1.bf16.msra.mxu0 %v1213
        %1233 = vmatprep.subr.bf16.mxu0 0
        %1234 = vmatpush1.bf16.msra.mxu0 %v1214
        %1235 = vmatprep.subr.bf16.mxu0 0
        %1236 = vmatpush1.bf16.msra.mxu0 %v1215
        %1237 = vmatprep.subr.bf16.mxu0 0
        %1238 = vmatpush1.bf16.msra.mxu0 %v1216
        %1239 = vmatprep.subr.bf16.mxu0 0
        %1240 = vmatpush1.bf16.msra.mxu0 %v1217
        %1241 = vmatprep.subr.bf16.mxu0 0
        %1242 = vmatpush1.bf16.msra.mxu0 %v1218
        %1243 = vmatprep.subr.bf16.mxu0 0
        %1244 = vmatpush1.bf16.msra.mxu0 0
        %1245 = vmatprep.subr.bf16.mxu0 0
        %1246 = vmatpush1.bf16.msra.mxu0 0
        %1247 = vmatprep.subr.bf16.mxu0 0
        %1248 = vmatpush1.bf16.msra.mxu0 0
        %1249 = vmatprep.subr.bf16.mxu0 0
        %1250 = vmatpush1.bf16.msra.mxu0 0
        %1251 = vmatprep.subr.bf16.mxu0 0
        %1252 = vmatpush1.bf16.msra.mxu0 0
        %1253 = vmatprep.subr.bf16.mxu0 0
        %1254 = vmatpush1.bf16.msra.mxu0 0
        %1255 = vmatprep.subr.bf16.mxu0 0
        %1256 = vmatpush1.bf16.msra.mxu0 0
        %1257 = vmatprep.subr.bf16.mxu0 0
        %1258 = vmatpush1.bf16.msra.mxu0 0
        %1259 = vmatprep.mubr.bf16.mxu0 0
        %1260 = vmatmul.mubr.bf16.gmra.mrb[0].mxu0 %v1161
        %v1261 = vpop.f32.mrb[0].mxu0
        %v1262 = vadd.f32 0.0, %v1261
        %v1263 = vpop.f32.mrb[0].mxu0
        %v1264 = vpop.f32.mrb[0].mxu0
        %v1265 = vadd.f32 0.0, %v1264
        %v1266 = vpop.f32.mrb[0].mxu0
        %1267 = vdwg.mxu0
        %v1284 = vunpack.c.l.b16 %v1093
        %v1285 = vunpack.c.l.b16 %v1094
        %v1286 = vunpack.c.l.b16 %v1095
        %v1287 = vunpack.c.l.b16 %v1096
        %v1288 = vunpack.c.l.b16 %v1097
        %v1289 = vunpack.c.l.b16 %v1098
        %v1290 = vunpack.c.l.b16 %v1099
        %v1291 = vunpack.c.l.b16 %v1100
        %v1292 = vunpack.c.l.b16 %v1101
        %v1293 = vunpack.c.l.b16 %v1102
        %v1294 = vunpack.c.l.b16 %v1103
        %v1295 = vunpack.c.l.b16 %v1104
        %v1296 = vunpack.c.l.b16 %v1105
        %v1297 = vunpack.c.l.b16 %v1106
        %v1298 = vunpack.c.l.b16 %v1107
        %v1299 = vunpack.c.l.b16 %v1108
        %v1300 = vpack.c.b16 %v1285, %v1284
        %v1301 = vpack.c.b16 %v1287, %v1286
        %v1302 = vpack.c.b16 %v1289, %v1288
        %v1303 = vpack.c.b16 %v1291, %v1290
        %v1304 = vpack.c.b16 %v1293, %v1292
        %v1305 = vpack.c.b16 %v1295, %v1294
        %v1306 = vpack.c.b16 %v1297, %v1296
        %v1307 = vpack.c.b16 %v1299, %v1298
        %1316 = vmatprep.subr.bf16.mxu0 0
        %1317 = vmatpush1.bf16.msra.mxu0 %v1300
        %1318 = vmatprep.subr.bf16.mxu0 0
        %1319 = vmatpush1.bf16.msra.mxu0 %v1301
        %1320 = vmatprep.subr.bf16.mxu0 0
        %1321 = vmatpush1.bf16.msra.mxu0 %v1302
        %1322 = vmatprep.subr.bf16.mxu0 0
        %1323 = vmatpush1.bf16.msra.mxu0 %v1303
        %1324 = vmatprep.subr.bf16.mxu0 0
        %1325 = vmatpush1.bf16.msra.mxu0 %v1304
        %1326 = vmatprep.subr.bf16.mxu0 0
        %1327 = vmatpush1.bf16.msra.mxu0 %v1305
        %1328 = vmatprep.subr.bf16.mxu0 0
        %1329 = vmatpush1.bf16.msra.mxu0 %v1306
        %1330 = vmatprep.subr.bf16.mxu0 0
        %1331 = vmatpush1.bf16.msra.mxu0 %v1307
        %1332 = vmatprep.subr.bf16.mxu0 0
        %1333 = vmatpush1.bf16.msra.mxu0 0
        %1334 = vmatprep.subr.bf16.mxu0 0
        %1335 = vmatpush1.bf16.msra.mxu0 0
        %1336 = vmatprep.subr.bf16.mxu0 0
        %1337 = vmatpush1.bf16.msra.mxu0 0
        %1338 = vmatprep.subr.bf16.mxu0 0
        %1339 = vmatpush1.bf16.msra.mxu0 0
        %1340 = vmatprep.subr.bf16.mxu0 0
        %1341 = vmatpush1.bf16.msra.mxu0 0
        %1342 = vmatprep.subr.bf16.mxu0 0
        %1343 = vmatpush1.bf16.msra.mxu0 0
        %1344 = vmatprep.subr.bf16.mxu0 0
        %1345 = vmatpush1.bf16.msra.mxu0 0
        %1346 = vmatprep.subr.bf16.mxu0 0
        %1347 = vmatpush1.bf16.msra.mxu0 0
        %1348 = vmatprep.mubr.bf16.mxu0 0
        %1349 = vmatmul.mubr.bf16.gmra.mrb[0].mxu0 %v1092
        %v1350 = vpop.f32.mrb[0].mxu0
        %v1351 = vadd.f32 %v1262, %v1350
        %v1352 = vpop.f32.mrb[0].mxu0
        %v1353 = vpop.f32.mrb[0].mxu0
        %v1354 = vadd.f32 %v1265, %v1353
        %v1355 = vpop.f32.mrb[0].mxu0
        %1356 = vdwg.mxu0
        %s1357 = scalar_lea.vmem %s4, 16
        %v1358 = vld [vmem:[%s1357] sm:$0xf]
        %v1359 = vld [vmem:[%s1357 + $0x4] sm:$0xf]
        %v1362 = vunpack.c.l.b16 %v1358
        %v1363 = vunpack.c.l.b16 %v1359
        %v1364 = vpack.c.b16 %v1363, %v1362
        %v1366 = vsel %vm1047, %v1364, 0
        %1368 = vmatprep.subr.bf16.mxu0 0
        %1369 = vmatpush1.bf16.msra.mxu0 %v1039
        %1370 = vmatprep.subr.bf16.mxu0 0
        %1371 = vmatpush1.bf16.msra.mxu0 0
        %1372 = vmatprep.subr.bf16.mxu0 0
        %1373 = vmatpush1.bf16.msra.mxu0 0
        %1374 = vmatprep.subr.bf16.mxu0 0
        %1375 = vmatpush1.bf16.msra.mxu0 0
        %1376 = vmatprep.subr.bf16.mxu0 0
        %1377 = vmatpush1.bf16.msra.mxu0 0
        %1378 = vmatprep.subr.bf16.mxu0 0
        %1379 = vmatpush1.bf16.msra.mxu0 0
        %1380 = vmatprep.subr.bf16.mxu0 0
        %1381 = vmatpush1.bf16.msra.mxu0 0
        %1382 = vmatprep.subr.bf16.mxu0 0
        %1383 = vmatpush1.bf16.msra.mxu0 0
        %1384 = vmatprep.subr.bf16.mxu0 0
        %1385 = vmatpush1.bf16.msra.mxu0 0
        %1386 = vmatprep.subr.bf16.mxu0 0
        %1387 = vmatpush1.bf16.msra.mxu0 0
        %1388 = vmatprep.subr.bf16.mxu0 0
        %1389 = vmatpush1.bf16.msra.mxu0 0
        %1390 = vmatprep.subr.bf16.mxu0 0
        %1391 = vmatpush1.bf16.msra.mxu0 0
        %1392 = vmatprep.subr.bf16.mxu0 0
        %1393 = vmatpush1.bf16.msra.mxu0 0
        %1394 = vmatprep.subr.bf16.mxu0 0
        %1395 = vmatpush1.bf16.msra.mxu0 0
        %1396 = vmatprep.subr.bf16.mxu0 0
        %1397 = vmatpush1.bf16.msra.mxu0 0
        %1398 = vmatprep.subr.bf16.mxu0 0
        %1399 = vmatpush1.bf16.msra.mxu0 0
        %1400 = vmatprep.mubr.bf16.mxu0 0
        %1401 = vmatmul.mubr.bf16.gmra.mrb[0].mxu0 %v1366
        %v1402 = vpop.f32.mrb[0].mxu0
        %v1403 = vadd.f32 0.0, %v1402
        %v1404 = vpop.f32.mrb[0].mxu0
        %v1405 = vpop.f32.mrb[0].mxu0
        %v1406 = vadd.f32 0.0, %v1405
        %v1407 = vpop.f32.mrb[0].mxu0
        %1408 = vdwg.mxu0
        %v1409 = vpack.c.bf16 %v1406, %v1403
        %s1410 = scalar_lea.vmem %s5, 128
        %v1411 = vld [vmem:[%s1410] sm:$0xf]
        %v1412 = vld [vmem:[%s1410 + $0x4] sm:$0xf]
        %v1413 = vld [vmem:[%s1410 + $0x8] sm:$0xf]
        %v1414 = vld [vmem:[%s1410 + $0xc] sm:$0xf]
        %v1415 = vld [vmem:[%s1410 + $0x10] sm:$0xf]
        %v1416 = vld [vmem:[%s1410 + $0x14] sm:$0xf]
        %v1417 = vld [vmem:[%s1410 + $0x18] sm:$0xf]
        %v1418 = vld [vmem:[%s1410 + $0x1c] sm:$0xf]
        %v1419 = vld [vmem:[%s1410 + $0x20] sm:$0xf]
        %v1420 = vld [vmem:[%s1410 + $0x24] sm:$0xf]
        %v1421 = vld [vmem:[%s1410 + $0x28] sm:$0xf]
        %v1422 = vld [vmem:[%s1410 + $0x2c] sm:$0xf]
        %v1423 = vld [vmem:[%s1410 + $0x30] sm:$0xf]
        %v1424 = vld [vmem:[%s1410 + $0x34] sm:$0xf]
        %v1425 = vld [vmem:[%s1410 + $0x38] sm:$0xf]
        %v1426 = vld [vmem:[%s1410 + $0x3c] sm:$0xf]
        %v1443 = vunpack.c.l.b16 %v1411
        %v1444 = vunpack.c.l.b16 %v1412
        %v1445 = vunpack.c.l.b16 %v1413
        %v1446 = vunpack.c.l.b16 %v1414
        %v1447 = vunpack.c.l.b16 %v1415
        %v1448 = vunpack.c.l.b16 %v1416
        %v1449 = vunpack.c.l.b16 %v1417
        %v1450 = vunpack.c.l.b16 %v1418
        %v1451 = vunpack.c.l.b16 %v1419
        %v1452 = vunpack.c.l.b16 %v1420
        %v1453 = vunpack.c.l.b16 %v1421
        %v1454 = vunpack.c.l.b16 %v1422
        %v1455 = vunpack.c.l.b16 %v1423
        %v1456 = vunpack.c.l.b16 %v1424
        %v1457 = vunpack.c.l.b16 %v1425
        %v1458 = vunpack.c.l.b16 %v1426
        %v1459 = vpack.c.b16 %v1444, %v1443
        %v1460 = vpack.c.b16 %v1446, %v1445
        %v1461 = vpack.c.b16 %v1448, %v1447
        %v1462 = vpack.c.b16 %v1450, %v1449
        %v1463 = vpack.c.b16 %v1452, %v1451
        %v1464 = vpack.c.b16 %v1454, %v1453
        %v1465 = vpack.c.b16 %v1456, %v1455
        %v1466 = vpack.c.b16 %v1458, %v1457
        %1475 = vmatprep.subr.bf16.mxu0 0
        %1476 = vmatpush1.bf16.msra.mxu0 %v1459
        %1477 = vmatprep.subr.bf16.mxu0 0
        %1478 = vmatpush1.bf16.msra.mxu0 %v1460
        %1479 = vmatprep.subr.bf16.mxu0 0
        %1480 = vmatpush1.bf16.msra.mxu0 %v1461
        %1481 = vmatprep.subr.bf16.mxu0 0
        %1482 = vmatpush1.bf16.msra.mxu0 %v1462
        %1483 = vmatprep.subr.bf16.mxu0 0
        %1484 = vmatpush1.bf16.msra.mxu0 %v1463
        %1485 = vmatprep.subr.bf16.mxu0 0
        %1486 = vmatpush1.bf16.msra.mxu0 %v1464
        %1487 = vmatprep.subr.bf16.mxu0 0
        %1488 = vmatpush1.bf16.msra.mxu0 %v1465
        %1489 = vmatprep.subr.bf16.mxu0 0
        %1490 = vmatpush1.bf16.msra.mxu0 %v1466
        %1491 = vmatprep.subr.bf16.mxu0 0
        %1492 = vmatpush1.bf16.msra.mxu0 0
        %1493 = vmatprep.subr.bf16.mxu0 0
        %1494 = vmatpush1.bf16.msra.mxu0 0
        %1495 = vmatprep.subr.bf16.mxu0 0
        %1496 = vmatpush1.bf16.msra.mxu0 0
        %1497 = vmatprep.subr.bf16.mxu0 0
        %1498 = vmatpush1.bf16.msra.mxu0 0
        %1499 = vmatprep.subr.bf16.mxu0 0
        %1500 = vmatpush1.bf16.msra.mxu0 0
        %1501 = vmatprep.subr.bf16.mxu0 0
        %1502 = vmatpush1.bf16.msra.mxu0 0
        %1503 = vmatprep.subr.bf16.mxu0 0
        %1504 = vmatpush1.bf16.msra.mxu0 0
        %1505 = vmatprep.subr.bf16.mxu0 0
        %1506 = vmatpush1.bf16.msra.mxu0 0
        %1507 = vmatprep.mubr.bf16.mxu0 0
        %1508 = vmatmul.mubr.bf16.gmra.mrb[0].mxu0 %v1409
        %v1509 = vpop.f32.mrb[0].mxu0
        %v1510 = vadd.f32 0.0, %v1509
        %v1511 = vpop.f32.mrb[0].mxu0
        %v1512 = vpop.f32.mrb[0].mxu0
        %v1513 = vadd.f32 0.0, %v1512
        %v1514 = vpop.f32.mrb[0].mxu0
        %1515 = vdwg.mxu0
        %v1516 = vadd.f32 %v1351, %v1510
        %v1517 = vadd.f32 %v1354, %v1513
        %v1518 = vld [vmem:[%s6] sm:$0x1]
        %v1520 = vlaneseq
        %v1521 = vshrl.u32 %v1520, 7
        %v1522 = vsub.s32 0, %v1521
        %v1523 = vrot.slane %v1518, %v1522
        %v1525 = vadd.f32 %v1516, %v1523
        %v1526 = vadd.f32 %v1517, %v1523
        %v1527 = vmul.f32 %v1525, 0.5
        %v1528 = vmul.f32 %v1526, 0.5
        %v1529 = vmul.f32 %v1525, 0.70710677
        %v1530 = vmul.f32 %v1526, 0.70710677
        %v1531 = verf.f32.pop %v1529
        %v1532 = verf.f32.pop %v1530
        %v1533 = vadd.f32 %v1531, 1.0
        %v1534 = vadd.f32 %v1532, 1.0
        %v1535 = vmul.f32 %v1527, %v1533
        %v1536 = vmul.f32 %v1528, %v1534
        %v1537 = vpack.c.bf16 %v1536, %v1535
        %v1538 = vld [vmem:[%s7] sm:$0xf]
        %v1540 = vsel %vm1047, %v1538, 0
        %1542 = vmatprep.subr.bf16.mxu0 0
        %1543 = vmatpush1.bf16.msra.mxu0 %v1537
        %1544 = vmatprep.subr.bf16.mxu0 0
        %1545 = vmatpush1.bf16.msra.mxu0 0
        %1546 = vmatprep.subr.bf16.mxu0 0
        %1547 = vmatpush1.bf16.msra.mxu0 0
        %1548 = vmatprep.subr.bf16.mxu0 0
        %1549 = vmatpush1.bf16.msra.mxu0 0
        %1550 = vmatprep.subr.bf16.mxu0 0
        %1551 = vmatpush1.bf16.msra.mxu0 0
        %1552 = vmatprep.subr.bf16.mxu0 0
        %1553 = vmatpush1.bf16.msra.mxu0 0
        %1554 = vmatprep.subr.bf16.mxu0 0
        %1555 = vmatpush1.bf16.msra.mxu0 0
        %1556 = vmatprep.subr.bf16.mxu0 0
        %1557 = vmatpush1.bf16.msra.mxu0 0
        %1558 = vmatprep.subr.bf16.mxu0 0
        %1559 = vmatpush1.bf16.msra.mxu0 0
        %1560 = vmatprep.subr.bf16.mxu0 0
        %1561 = vmatpush1.bf16.msra.mxu0 0
        %1562 = vmatprep.subr.bf16.mxu0 0
        %1563 = vmatpush1.bf16.msra.mxu0 0
        %1564 = vmatprep.subr.bf16.mxu0 0
        %1565 = vmatpush1.bf16.msra.mxu0 0
        %1566 = vmatprep.subr.bf16.mxu0 0
        %1567 = vmatpush1.bf16.msra.mxu0 0
        %1568 = vmatprep.subr.bf16.mxu0 0
        %1569 = vmatpush1.bf16.msra.mxu0 0
        %1570 = vmatprep.subr.bf16.mxu0 0
        %1571 = vmatpush1.bf16.msra.mxu0 0
        %1572 = vmatprep.subr.bf16.mxu0 0
        %1573 = vmatpush1.bf16.msra.mxu0 0
        %1574 = vmatprep.mubr.bf16.mxu0 0
        %1575 = vmatmul.mubr.bf16.gmra.mrb[0].mxu0 %v1540
        %v1576 = vpop.f32.mrb[0].mxu0
        %v1577 = vadd.f32 0.0, %v1576
        %v1578 = vpop.f32.mrb[0].mxu0
        %v1579 = vpop.f32.mrb[0].mxu0
        %v1580 = vpop.f32.mrb[0].mxu0
        %1581 = vdwg.mxu0
        %v1582 = vpack.c.bf16 %v1577, %v1577
        %v1583 = vld [vmem:[%s8] sm:$0xf]
        %v1584 = vld [vmem:[%s8 + $0x4] sm:$0xf]
        %v1585 = vld [vmem:[%s8 + $0x8] sm:$0xf]
        %v1586 = vld [vmem:[%s8 + $0xc] sm:$0xf]
        %v1587 = vld [vmem:[%s8 + $0x10] sm:$0xf]
        %v1588 = vld [vmem:[%s8 + $0x14] sm:$0xf]
        %v1589 = vld [vmem:[%s8 + $0x18] sm:$0xf]
        %v1590 = vld [vmem:[%s8 + $0x1c] sm:$0xf]
        %v1591 = vld [vmem:[%s8 + $0x20] sm:$0xf]
        %v1592 = vld [vmem:[%s8 + $0x24] sm:$0xf]
        %v1593 = vld [vmem:[%s8 + $0x28] sm:$0xf]
        %v1594 = vld [vmem:[%s8 + $0x2c] sm:$0xf]
        %v1595 = vld [vmem:[%s8 + $0x30] sm:$0xf]
        %v1596 = vld [vmem:[%s8 + $0x34] sm:$0xf]
        %v1597 = vld [vmem:[%s8 + $0x38] sm:$0xf]
        %v1598 = vld [vmem:[%s8 + $0x3c] sm:$0xf]
        %s1599 = scalar_lea.vmem %s7, 4
        %v1600 = vld [vmem:[%s1599] sm:$0xf]
        %v1602 = vsel %vm1047, %v1600, 0
        %1604 = vmatprep.subr.bf16.mxu0 0
        %1605 = vmatpush1.bf16.msra.mxu0 %v1537
        %1606 = vmatprep.subr.bf16.mxu0 0
        %1607 = vmatpush1.bf16.msra.mxu0 0
        %1608 = vmatprep.subr.bf16.mxu0 0
        %1609 = vmatpush1.bf16.msra.mxu0 0
        %1610 = vmatprep.subr.bf16.mxu0 0
        %1611 = vmatpush1.bf16.msra.mxu0 0
        %1612 = vmatprep.subr.bf16.mxu0 0
        %1613 = vmatpush1.bf16.msra.mxu0 0
        %1614 = vmatprep.subr.bf16.mxu0 0
        %1615 = vmatpush1.bf16.msra.mxu0 0
        %1616 = vmatprep.subr.bf16.mxu0 0
        %1617 = vmatpush1.bf16.msra.mxu0 0
        %1618 = vmatprep.subr.bf16.mxu0 0
        %1619 = vmatpush1.bf16.msra.mxu0 0
        %1620 = vmatprep.subr.bf16.mxu0 0
        %1621 = vmatpush1.bf16.msra.mxu0 0
        %1622 = vmatprep.subr.bf16.mxu0 0
        %1623 = vmatpush1.bf16.msra.mxu0 0
        %1624 = vmatprep.subr.bf16.mxu0 0
        %1625 = vmatpush1.bf16.msra.mxu0 0
        %1626 = vmatprep.subr.bf16.mxu0 0
        %1627 = vmatpush1.bf16.msra.mxu0 0
        %1628 = vmatprep.subr.bf16.mxu0 0
        %1629 = vmatpush1.bf16.msra.mxu0 0
        %1630 = vmatprep.subr.bf16.mxu0 0
        %1631 = vmatpush1.bf16.msra.mxu0 0
        %1632 = vmatprep.subr.bf16.mxu0 0
        %1633 = vmatpush1.bf16.msra.mxu0 0
        %1634 = vmatprep.subr.bf16.mxu0 0
        %1635 = vmatpush1.bf16.msra.mxu0 0
        %1636 = vmatprep.mubr.bf16.mxu0 0
        %1637 = vmatmul.mubr.bf16.gmra.mrb[0].mxu0 %v1602
        %v1638 = vpop.f32.mrb[0].mxu0
        %v1639 = vadd.f32 0.0, %v1638
        %v1640 = vpop.f32.mrb[0].mxu0
        %v1641 = vpop.f32.mrb[0].mxu0
        %v1642 = vpop.f32.mrb[0].mxu0
        %1643 = vdwg.mxu0
        %v1644 = vpack.c.bf16 %v1639, %v1639
        %s1645 = scalar_lea.vmem %s8, 64
        %v1646 = vld [vmem:[%s1645] sm:$0xf]
        %v1647 = vld [vmem:[%s1645 + $0x4] sm:$0xf]
        %v1648 = vld [vmem:[%s1645 + $0x8] sm:$0xf]
        %v1649 = vld [vmem:[%s1645 + $0xc] sm:$0xf]
        %v1650 = vld [vmem:[%s1645 + $0x10] sm:$0xf]
        %v1651 = vld [vmem:[%s1645 + $0x14] sm:$0xf]
        %v1652 = vld [vmem:[%s1645 + $0x18] sm:$0xf]
        %v1653 = vld [vmem:[%s1645 + $0x1c] sm:$0xf]
        %v1654 = vld [vmem:[%s1645 + $0x20] sm:$0xf]
        %v1655 = vld [vmem:[%s1645 + $0x24] sm:$0xf]
        %v1656 = vld [vmem:[%s1645 + $0x28] sm:$0xf]
        %v1657 = vld [vmem:[%s1645 + $0x2c] sm:$0xf]
        %v1658 = vld [vmem:[%s1645 + $0x30] sm:$0xf]
        %v1659 = vld [vmem:[%s1645 + $0x34] sm:$0xf]
        %v1660 = vld [vmem:[%s1645 + $0x38] sm:$0xf]
        %v1661 = vld [vmem:[%s1645 + $0x3c] sm:$0xf]
        %v1678 = vunpack.c.l.b16 %v1646
        %v1679 = vunpack.c.l.b16 %v1647
        %v1680 = vunpack.c.l.b16 %v1648
        %v1681 = vunpack.c.l.b16 %v1649
        %v1682 = vunpack.c.l.b16 %v1650
        %v1683 = vunpack.c.l.b16 %v1651
        %v1684 = vunpack.c.l.b16 %v1652
        %v1685 = vunpack.c.l.b16 %v1653
        %v1686 = vunpack.c.l.b16 %v1654
        %v1687 = vunpack.c.l.b16 %v1655
        %v1688 = vunpack.c.l.b16 %v1656
        %v1689 = vunpack.c.l.b16 %v1657
        %v1690 = vunpack.c.l.b16 %v1658
        %v1691 = vunpack.c.l.b16 %v1659
        %v1692 = vunpack.c.l.b16 %v1660
        %v1693 = vunpack.c.l.b16 %v1661
        %v1694 = vpack.c.b16 %v1679, %v1678
        %v1695 = vpack.c.b16 %v1681, %v1680
        %v1696 = vpack.c.b16 %v1683, %v1682
        %v1697 = vpack.c.b16 %v1685, %v1684
        %v1698 = vpack.c.b16 %v1687, %v1686
        %v1699 = vpack.c.b16 %v1689, %v1688
        %v1700 = vpack.c.b16 %v1691, %v1690
        %v1701 = vpack.c.b16 %v1693, %v1692
        %1710 = vmatprep.subr.bf16.mxu0 0
        %1711 = vmatpush1.bf16.msra.mxu0 %v1694
        %1712 = vmatprep.subr.bf16.mxu0 0
        %1713 = vmatpush1.bf16.msra.mxu0 %v1695
        %1714 = vmatprep.subr.bf16.mxu0 0
        %1715 = vmatpush1.bf16.msra.mxu0 %v1696
        %1716 = vmatprep.subr.bf16.mxu0 0
        %1717 = vmatpush1.bf16.msra.mxu0 %v1697
        %1718 = vmatprep.subr.bf16.mxu0 0
        %1719 = vmatpush1.bf16.msra.mxu0 %v1698
        %1720 = vmatprep.subr.bf16.mxu0 0
        %1721 = vmatpush1.bf16.msra.mxu0 %v1699
        %1722 = vmatprep.subr.bf16.mxu0 0
        %1723 = vmatpush1.bf16.msra.mxu0 %v1700
        %1724 = vmatprep.subr.bf16.mxu0 0
        %1725 = vmatpush1.bf16.msra.mxu0 %v1701
        %1726 = vmatprep.subr.bf16.mxu0 0
        %1727 = vmatpush1.bf16.msra.mxu0 0
        %1728 = vmatprep.subr.bf16.mxu0 0
        %1729 = vmatpush1.bf16.msra.mxu0 0
        %1730 = vmatprep.subr.bf16.mxu0 0
        %1731 = vmatpush1.bf16.msra.mxu0 0
        %1732 = vmatprep.subr.bf16.mxu0 0
        %1733 = vmatpush1.bf16.msra.mxu0 0
        %1734 = vmatprep.subr.bf16.mxu0 0
        %1735 = vmatpush1.bf16.msra.mxu0 0
        %1736 = vmatprep.subr.bf16.mxu0 0
        %1737 = vmatpush1.bf16.msra.mxu0 0
        %1738 = vmatprep.subr.bf16.mxu0 0
        %1739 = vmatpush1.bf16.msra.mxu0 0
        %1740 = vmatprep.subr.bf16.mxu0 0
        %1741 = vmatpush1.bf16.msra.mxu0 0
        %1742 = vmatprep.mubr.bf16.mxu0 0
        %1743 = vmatmul.mubr.bf16.gmra.mrb[0].mxu0 %v1644
        %v1744 = vpop.f32.mrb[0].mxu0
        %v1745 = vadd.f32 0.0, %v1744
        %v1746 = vpop.f32.mrb[0].mxu0
        %v1747 = vpop.f32.mrb[0].mxu0
        %v1748 = vpop.f32.mrb[0].mxu0
        %1749 = vdwg.mxu0
        %v1766 = vunpack.c.l.b16 %v1583
        %v1767 = vunpack.c.l.b16 %v1584
        %v1768 = vunpack.c.l.b16 %v1585
        %v1769 = vunpack.c.l.b16 %v1586
        %v1770 = vunpack.c.l.b16 %v1587
        %v1771 = vunpack.c.l.b16 %v1588
        %v1772 = vunpack.c.l.b16 %v1589
        %v1773 = vunpack.c.l.b16 %v1590
        %v1774 = vunpack.c.l.b16 %v1591
        %v1775 = vunpack.c.l.b16 %v1592
        %v1776 = vunpack.c.l.b16 %v1593
        %v1777 = vunpack.c.l.b16 %v1594
        %v1778 = vunpack.c.l.b16 %v1595
        %v1779 = vunpack.c.l.b16 %v1596
        %v1780 = vunpack.c.l.b16 %v1597
        %v1781 = vunpack.c.l.b16 %v1598
        %v1782 = vpack.c.b16 %v1767, %v1766
        %v1783 = vpack.c.b16 %v1769, %v1768
        %v1784 = vpack.c.b16 %v1771, %v1770
        %v1785 = vpack.c.b16 %v1773, %v1772
        %v1786 = vpack.c.b16 %v1775, %v1774
        %v1787 = vpack.c.b16 %v1777, %v1776
        %v1788 = vpack.c.b16 %v1779, %v1778
        %v1789 = vpack.c.b16 %v1781, %v1780
        %1798 = vmatprep.subr.bf16.mxu0 0
        %1799 = vmatpush1.bf16.msra.mxu0 %v1782
        %1800 = vmatprep.subr.bf16.mxu0 0
        %1801 = vmatpush1.bf16.msra.mxu0 %v1783
        %1802 = vmatprep.subr.bf16.mxu0 0
        %1803 = vmatpush1.bf16.msra.mxu0 %v1784
        %1804 = vmatprep.subr.bf16.mxu0 0
        %1805 = vmatpush1.bf16.msra.mxu0 %v1785
        %1806 = vmatprep.subr.bf16.mxu0 0
        %1807 = vmatpush1.bf16.msra.mxu0 %v1786
        %1808 = vmatprep.subr.bf16.mxu0 0
        %1809 = vmatpush1.bf16.msra.mxu0 %v1787
        %1810 = vmatprep.subr.bf16.mxu0 0
        %1811 = vmatpush1.bf16.msra.mxu0 %v1788
        %1812 = vmatprep.subr.bf16.mxu0 0
        %1813 = vmatpush1.bf16.msra.mxu0 %v1789
        %1814 = vmatprep.subr.bf16.mxu0 0
        %1815 = vmatpush1.bf16.msra.mxu0 0
        %1816 = vmatprep.subr.bf16.mxu0 0
        %1817 = vmatpush1.bf16.msra.mxu0 0
        %1818 = vmatprep.subr.bf16.mxu0 0
        %1819 = vmatpush1.bf16.msra.mxu0 0
        %1820 = vmatprep.subr.bf16.mxu0 0
        %1821 = vmatpush1.bf16.msra.mxu0 0
        %1822 = vmatprep.subr.bf16.mxu0 0
        %1823 = vmatpush1.bf16.msra.mxu0 0
        %1824 = vmatprep.subr.bf16.mxu0 0
        %1825 = vmatpush1.bf16.msra.mxu0 0
        %1826 = vmatprep.subr.bf16.mxu0 0
        %1827 = vmatpush1.bf16.msra.mxu0 0
        %1828 = vmatprep.subr.bf16.mxu0 0
        %1829 = vmatpush1.bf16.msra.mxu0 0
        %1830 = vmatprep.mubr.bf16.mxu0 0
        %1831 = vmatmul.mubr.bf16.gmra.mrb[0].mxu0 %v1582
        %v1832 = vpop.f32.mrb[0].mxu0
        %v1833 = vadd.f32 %v1745, %v1832
        %v1834 = vpop.f32.mrb[0].mxu0
        %v1835 = vpop.f32.mrb[0].mxu0
        %v1836 = vpop.f32.mrb[0].mxu0
        %1837 = vdwg.mxu0
        %s1838 = scalar_lea.vmem %s7, 8
        %v1839 = vld [vmem:[%s1838] sm:$0xf]
        %v1841 = vsel %vm1047, %v1839, 0
        %1843 = vmatprep.subr.bf16.mxu0 0
        %1844 = vmatpush1.bf16.msra.mxu0 %v1537
        %1845 = vmatprep.subr.bf16.mxu0 0
        %1846 = vmatpush1.bf16.msra.mxu0 0
        %1847 = vmatprep.subr.bf16.mxu0 0
        %1848 = vmatpush1.bf16.msra.mxu0 0
        %1849 = vmatprep.subr.bf16.mxu0 0
        %1850 = vmatpush1.bf16.msra.mxu0 0
        %1851 = vmatprep.subr.bf16.mxu0 0
        %1852 = vmatpush1.bf16.msra.mxu0 0
        %1853 = vmatprep.subr.bf16.mxu0 0
        %1854 = vmatpush1.bf16.msra.mxu0 0
        %1855 = vmatprep.subr.bf16.mxu0 0
        %1856 = vmatpush1.bf16.msra.mxu0 0
        %1857 = vmatprep.subr.bf16.mxu0 0
        %1858 = vmatpush1.bf16.msra.mxu0 0
        %1859 = vmatprep.subr.bf16.mxu0 0
        %1860 = vmatpush1.bf16.msra.mxu0 0
        %1861 = vmatprep.subr.bf16.mxu0 0
        %1862 = vmatpush1.bf16.msra.mxu0 0
        %1863 = vmatprep.subr.bf16.mxu0 0
        %1864 = vmatpush1.bf16.msra.mxu0 0
        %1865 = vmatprep.subr.bf16.mxu0 0
        %1866 = vmatpush1.bf16.msra.mxu0 0
        %1867 = vmatprep.subr.bf16.mxu0 0
        %1868 = vmatpush1.bf16.msra.mxu0 0
        %1869 = vmatprep.subr.bf16.mxu0 0
        %1870 = vmatpush1.bf16.msra.mxu0 0
        %1871 = vmatprep.subr.bf16.mxu0 0
        %1872 = vmatpush1.bf16.msra.mxu0 0
        %1873 = vmatprep.subr.bf16.mxu0 0
        %1874 = vmatpush1.bf16.msra.mxu0 0
        %1875 = vmatprep.mubr.bf16.mxu0 0
        %1876 = vmatmul.mubr.bf16.gmra.mrb[0].mxu0 %v1841
        %v1877 = vpop.f32.mrb[0].mxu0
        %v1878 = vadd.f32 0.0, %v1877
        %v1879 = vpop.f32.mrb[0].mxu0
        %v1880 = vpop.f32.mrb[0].mxu0
        %v1881 = vpop.f32.mrb[0].mxu0
        %1882 = vdwg.mxu0
        %v1883 = vpack.c.bf16 %v1878, %v1878
        %s1884 = scalar_lea.vmem %s8, 128
        %v1885 = vld [vmem:[%s1884] sm:$0xf]
        %v1886 = vld [vmem:[%s1884 + $0x4] sm:$0xf]
        %v1887 = vld [vmem:[%s1884 + $0x8] sm:$0xf]
        %v1888 = vld [vmem:[%s1884 + $0xc] sm:$0xf]
        %v1889 = vld [vmem:[%s1884 + $0x10] sm:$0xf]
        %v1890 = vld [vmem:[%s1884 + $0x14] sm:$0xf]
        %v1891 = vld [vmem:[%s1884 + $0x18] sm:$0xf]
        %v1892 = vld [vmem:[%s1884 + $0x1c] sm:$0xf]
        %v1893 = vld [vmem:[%s1884 + $0x20] sm:$0xf]
        %v1894 = vld [vmem:[%s1884 + $0x24] sm:$0xf]
        %v1895 = vld [vmem:[%s1884 + $0x28] sm:$0xf]
        %v1896 = vld [vmem:[%s1884 + $0x2c] sm:$0xf]
        %v1897 = vld [vmem:[%s1884 + $0x30] sm:$0xf]
        %v1898 = vld [vmem:[%s1884 + $0x34] sm:$0xf]
        %v1899 = vld [vmem:[%s1884 + $0x38] sm:$0xf]
        %v1900 = vld [vmem:[%s1884 + $0x3c] sm:$0xf]
        %v1917 = vunpack.c.l.b16 %v1885
        %v1918 = vunpack.c.l.b16 %v1886
        %v1919 = vunpack.c.l.b16 %v1887
        %v1920 = vunpack.c.l.b16 %v1888
        %v1921 = vunpack.c.l.b16 %v1889
        %v1922 = vunpack.c.l.b16 %v1890
        %v1923 = vunpack.c.l.b16 %v1891
        %v1924 = vunpack.c.l.b16 %v1892
        %v1925 = vunpack.c.l.b16 %v1893
        %v1926 = vunpack.c.l.b16 %v1894
        %v1927 = vunpack.c.l.b16 %v1895
        %v1928 = vunpack.c.l.b16 %v1896
        %v1929 = vunpack.c.l.b16 %v1897
        %v1930 = vunpack.c.l.b16 %v1898
        %v1931 = vunpack.c.l.b16 %v1899
        %v1932 = vunpack.c.l.b16 %v1900
        %v1933 = vpack.c.b16 %v1918, %v1917
        %v1934 = vpack.c.b16 %v1920, %v1919
        %v1935 = vpack.c.b16 %v1922, %v1921
        %v1936 = vpack.c.b16 %v1924, %v1923
        %v1937 = vpack.c.b16 %v1926, %v1925
        %v1938 = vpack.c.b16 %v1928, %v1927
        %v1939 = vpack.c.b16 %v1930, %v1929
        %v1940 = vpack.c.b16 %v1932, %v1931
        %1949 = vmatprep.subr.bf16.mxu0 0
        %1950 = vmatpush1.bf16.msra.mxu0 %v1933
        %1951 = vmatprep.subr.bf16.mxu0 0
        %1952 = vmatpush1.bf16.msra.mxu0 %v1934
        %1953 = vmatprep.subr.bf16.mxu0 0
        %1954 = vmatpush1.bf16.msra.mxu0 %v1935
        %1955 = vmatprep.subr.bf16.mxu0 0
        %1956 = vmatpush1.bf16.msra.mxu0 %v1936
        %1957 = vmatprep.subr.bf16.mxu0 0
        %1958 = vmatpush1.bf16.msra.mxu0 %v1937
        %1959 = vmatprep.subr.bf16.mxu0 0
        %1960 = vmatpush1.bf16.msra.mxu0 %v1938
        %1961 = vmatprep.subr.bf16.mxu0 0
        %1962 = vmatpush1.bf16.msra.mxu0 %v1939
        %1963 = vmatprep.subr.bf16.mxu0 0
        %1964 = vmatpush1.bf16.msra.mxu0 %v1940
        %1965 = vmatprep.subr.bf16.mxu0 0
        %1966 = vmatpush1.bf16.msra.mxu0 0
        %1967 = vmatprep.subr.bf16.mxu0 0
        %1968 = vmatpush1.bf16.msra.mxu0 0
        %1969 = vmatprep.subr.bf16.mxu0 0
        %1970 = vmatpush1.bf16.msra.mxu0 0
        %1971 = vmatprep.subr.bf16.mxu0 0
        %1972 = vmatpush1.bf16.msra.mxu0 0
        %1973 = vmatprep.subr.bf16.mxu0 0
        %1974 = vmatpush1.bf16.msra.mxu0 0
        %1975 = vmatprep.subr.bf16.mxu0 0
        %1976 = vmatpush1.bf16.msra.mxu0 0
        %1977 = vmatprep.subr.bf16.mxu0 0
        %1978 = vmatpush1.bf16.msra.mxu0 0
        %1979 = vmatprep.subr.bf16.mxu0 0
        %1980 = vmatpush1.bf16.msra.mxu0 0
        %1981 = vmatprep.mubr.bf16.mxu0 0
        %1982 = vmatmul.mubr.bf16.gmra.mrb[0].mxu0 %v1883
        %v1983 = vpop.f32.mrb[0].mxu0
        %v1984 = vadd.f32 0.0, %v1983
        %v1985 = vpop.f32.mrb[0].mxu0
        %v1986 = vpop.f32.mrb[0].mxu0
        %v1987 = vpop.f32.mrb[0].mxu0
        %1988 = vdwg.mxu0
        %v1989 = vadd.f32 %v1833, %v1984
        %v1990 = vld [vmem:[%s9] sm:$0x1]
        %v1992 = vlaneseq
        %v1993 = vshrl.u32 %v1992, 7
        %v1994 = vsub.s32 0, %v1993
        %v1995 = vrot.slane %v1990, %v1994
        %v1997 = vadd.f32 %v1989, %v1995
        %v1998 = vmul.f32 %v1997, 0.5
        %v1999 = vmul.f32 %v1997, 0.70710677
        %v2000 = verf.f32.pop %v1999
        %v2001 = vadd.f32 %v2000, 1.0
        %v2002 = vmul.f32 %v1998, %v2001
        %v2003 = vpack.c.bf16 %v2002, %v2002
        %v2004 = vld [vmem:[%s10] sm:$0xf]
        %vm2005 = vcmask 64512
        %v2007 = vsel %vm2005, %v2004, 0
        %vm2009 = vcmask 1043456
        %v2011 = vsel %vm2009, %v2003, 0
        %2013 = vmatprep.subr.bf16.mxu0 0
        %2014 = vmatpush1.bf16.msra.mxu0 %v2011
        %2015 = vmatprep.subr.bf16.mxu0 0
        %2016 = vmatpush1.bf16.msra.mxu0 0
        %2017 = vmatprep.subr.bf16.mxu0 0
        %2018 = vmatpush1.bf16.msra.mxu0 0
        %2019 = vmatprep.subr.bf16.mxu0 0
        %2020 = vmatpush1.bf16.msra.mxu0 0
        %2021 = vmatprep.subr.bf16.mxu0 0
        %2022 = vmatpush1.bf16.msra.mxu0 0
        %2023 = vmatprep.subr.bf16.mxu0 0
        %2024 = vmatpush1.bf16.msra.mxu0 0
        %2025 = vmatprep.subr.bf16.mxu0 0
        %2026 = vmatpush1.bf16.msra.mxu0 0
        %2027 = vmatprep.subr.bf16.mxu0 0
        %2028 = vmatpush1.bf16.msra.mxu0 0
        %2029 = vmatprep.subr.bf16.mxu0 0
        %2030 = vmatpush1.bf16.msra.mxu0 0
        %2031 = vmatprep.subr.bf16.mxu0 0
        %2032 = vmatpush1.bf16.msra.mxu0 0
        %2033 = vmatprep.subr.bf16.mxu0 0
        %2034 = vmatpush1.bf16.msra.mxu0 0
        %2035 = vmatprep.subr.bf16.mxu0 0
        %2036 = vmatpush1.bf16.msra.mxu0 0
        %2037 = vmatprep.subr.bf16.mxu0 0
        %2038 = vmatpush1.bf16.msra.mxu0 0
        %2039 = vmatprep.subr.bf16.mxu0 0
        %2040 = vmatpush1.bf16.msra.mxu0 0
        %2041 = vmatprep.subr.bf16.mxu0 0
        %2042 = vmatpush1.bf16.msra.mxu0 0
        %2043 = vmatprep.subr.bf16.mxu0 0
        %2044 = vmatpush1.bf16.msra.mxu0 0
        %2045 = vmatprep.mubr.bf16.mxu0 0
        %2046 = vmatmul.mubr.bf16.gmra.mrb[0].mxu0 %v2007
        %v2047 = vpop.f32.mrb[0].mxu0
        %v2048 = vadd.f32 0.0, %v2047
        %v2049 = vpop.f32.mrb[0].mxu0
        %v2050 = vpop.f32.mrb[0].mxu0
        %v2051 = vpop.f32.mrb[0].mxu0
        %2052 = vdwg.mxu0
        %v2053 = vpack.c.bf16 %v2048, %v2048
        %v2054 = vld [vmem:[%s11] sm:$0xf]
        %v2055 = vld [vmem:[%s11 + $0x4] sm:$0xf]
        %v2056 = vld [vmem:[%s11 + $0x8] sm:$0xf]
        %v2057 = vld [vmem:[%s11 + $0xc] sm:$0xf]
        %v2058 = vld [vmem:[%s11 + $0x10] sm:$0xf]
        %v2059 = vld [vmem:[%s11 + $0x14] sm:$0xf]
        %v2060 = vld [vmem:[%s11 + $0x18] sm:$0xf]
        %v2061 = vld [vmem:[%s11 + $0x1c] sm:$0xf]
        %v2062 = vld [vmem:[%s11 + $0x20] sm:$0xf]
        %v2063 = vld [vmem:[%s11 + $0x24] sm:$0xf]
        %v2064 = vld [vmem:[%s11 + $0x28] sm:$0xf]
        %v2065 = vld [vmem:[%s11 + $0x2c] sm:$0xf]
        %v2066 = vld [vmem:[%s11 + $0x30] sm:$0xf]
        %v2067 = vld [vmem:[%s11 + $0x34] sm:$0xf]
        %v2068 = vld [vmem:[%s11 + $0x38] sm:$0xf]
        %v2069 = vld [vmem:[%s11 + $0x3c] sm:$0xf]
        %s2070 = scalar_lea.vmem %s10, 4
        %v2071 = vld [vmem:[%s2070] sm:$0xf]
        %v2073 = vsel %vm2005, %v2071, 0
        %2075 = vmatprep.subr.bf16.mxu0 0
        %2076 = vmatpush1.bf16.msra.mxu0 %v2011
        %2077 = vmatprep.subr.bf16.mxu0 0
        %2078 = vmatpush1.bf16.msra.mxu0 0
        %2079 = vmatprep.subr.bf16.mxu0 0
        %2080 = vmatpush1.bf16.msra.mxu0 0
        %2081 = vmatprep.subr.bf16.mxu0 0
        %2082 = vmatpush1.bf16.msra.mxu0 0
        %2083 = vmatprep.subr.bf16.mxu0 0
        %2084 = vmatpush1.bf16.msra.mxu0 0
        %2085 = vmatprep.subr.bf16.mxu0 0
        %2086 = vmatpush1.bf16.msra.mxu0 0
        %2087 = vmatprep.subr.bf16.mxu0 0
        %2088 = vmatpush1.bf16.msra.mxu0 0
        %2089 = vmatprep.subr.bf16.mxu0 0
        %2090 = vmatpush1.bf16.msra.mxu0 0
        %2091 = vmatprep.subr.bf16.mxu0 0
        %2092 = vmatpush1.bf16.msra.mxu0 0
        %2093 = vmatprep.subr.bf16.mxu0 0
        %2094 = vmatpush1.bf16.msra.mxu0 0
        %2095 = vmatprep.subr.bf16.mxu0 0
        %2096 = vmatpush1.bf16.msra.mxu0 0
        %2097 = vmatprep.subr.bf16.mxu0 0
        %2098 = vmatpush1.bf16.msra.mxu0 0
        %2099 = vmatprep.subr.bf16.mxu0 0
        %2100 = vmatpush1.bf16.msra.mxu0 0
        %2101 = vmatprep.subr.bf16.mxu0 0
        %2102 = vmatpush1.bf16.msra.mxu0 0
        %2103 = vmatprep.subr.bf16.mxu0 0
        %2104 = vmatpush1.bf16.msra.mxu0 0
        %2105 = vmatprep.subr.bf16.mxu0 0
        %2106 = vmatpush1.bf16.msra.mxu0 0
        %2107 = vmatprep.mubr.bf16.mxu0 0
        %2108 = vmatmul.mubr.bf16.gmra.mrb[0].mxu0 %v2073
        %v2109 = vpop.f32.mrb[0].mxu0
        %v2110 = vadd.f32 0.0, %v2109
        %v2111 = vpop.f32.mrb[0].mxu0
        %v2112 = vpop.f32.mrb[0].mxu0
        %v2113 = vpop.f32.mrb[0].mxu0
        %2114 = vdwg.mxu0
        %v2115 = vpack.c.bf16 %v2110, %v2110
        %s2116 = scalar_lea.vmem %s11, 64
        %v2117 = vld [vmem:[%s2116] sm:$0xf]
        %v2118 = vld [vmem:[%s2116 + $0x4] sm:$0xf]
        %v2119 = vld [vmem:[%s2116 + $0x8] sm:$0xf]
        %v2120 = vld [vmem:[%s2116 + $0xc] sm:$0xf]
        %v2121 = vld [vmem:[%s2116 + $0x10] sm:$0xf]
        %v2122 = vld [vmem:[%s2116 + $0x14] sm:$0xf]
        %v2123 = vld [vmem:[%s2116 + $0x18] sm:$0xf]
        %v2124 = vld [vmem:[%s2116 + $0x1c] sm:$0xf]
        %v2125 = vld [vmem:[%s2116 + $0x20] sm:$0xf]
        %v2126 = vld [vmem:[%s2116 + $0x24] sm:$0xf]
        %v2127 = vld [vmem:[%s2116 + $0x28] sm:$0xf]
        %v2128 = vld [vmem:[%s2116 + $0x2c] sm:$0xf]
        %v2129 = vld [vmem:[%s2116 + $0x30] sm:$0xf]
        %v2130 = vld [vmem:[%s2116 + $0x34] sm:$0xf]
        %v2131 = vld [vmem:[%s2116 + $0x38] sm:$0xf]
        %v2132 = vld [vmem:[%s2116 + $0x3c] sm:$0xf]
        %v2149 = vunpack.c.l.b16 %v2117
        %v2150 = vunpack.c.l.b16 %v2118
        %v2151 = vunpack.c.l.b16 %v2119
        %v2152 = vunpack.c.l.b16 %v2120
        %v2153 = vunpack.c.l.b16 %v2121
        %v2154 = vunpack.c.l.b16 %v2122
        %v2155 = vunpack.c.l.b16 %v2123
        %v2156 = vunpack.c.l.b16 %v2124
        %v2157 = vunpack.c.l.b16 %v2125
        %v2158 = vunpack.c.l.b16 %v2126
        %v2159 = vunpack.c.l.b16 %v2127
        %v2160 = vunpack.c.l.b16 %v2128
        %v2161 = vunpack.c.l.b16 %v2129
        %v2162 = vunpack.c.l.b16 %v2130
        %v2163 = vunpack.c.l.b16 %v2131
        %v2164 = vunpack.c.l.b16 %v2132
        %v2165 = vpack.c.b16 %v2150, %v2149
        %v2166 = vpack.c.b16 %v2152, %v2151
        %v2167 = vpack.c.b16 %v2154, %v2153
        %v2168 = vpack.c.b16 %v2156, %v2155
        %v2169 = vpack.c.b16 %v2158, %v2157
        %v2170 = vpack.c.b16 %v2160, %v2159
        %v2171 = vpack.c.b16 %v2162, %v2161
        %v2172 = vpack.c.b16 %v2164, %v2163
        %2181 = vmatprep.subr.bf16.mxu0 0
        %2182 = vmatpush1.bf16.msra.mxu0 %v2165
        %2183 = vmatprep.subr.bf16.mxu0 0
        %2184 = vmatpush1.bf16.msra.mxu0 %v2166
        %2185 = vmatprep.subr.bf16.mxu0 0
        %2186 = vmatpush1.bf16.msra.mxu0 %v2167
        %2187 = vmatprep.subr.bf16.mxu0 0
        %2188 = vmatpush1.bf16.msra.mxu0 %v2168
        %2189 = vmatprep.subr.bf16.mxu0 0
        %2190 = vmatpush1.bf16.msra.mxu0 %v2169
        %2191 = vmatprep.subr.bf16.mxu0 0
        %2192 = vmatpush1.bf16.msra.mxu0 %v2170
        %2193 = vmatprep.subr.bf16.mxu0 0
        %2194 = vmatpush1.bf16.msra.mxu0 %v2171
        %2195 = vmatprep.subr.bf16.mxu0 0
        %2196 = vmatpush1.bf16.msra.mxu0 %v2172
        %2197 = vmatprep.subr.bf16.mxu0 0
        %2198 = vmatpush1.bf16.msra.mxu0 0
        %2199 = vmatprep.subr.bf16.mxu0 0
        %2200 = vmatpush1.bf16.msra.mxu0 0
        %2201 = vmatprep.subr.bf16.mxu0 0
        %2202 = vmatpush1.bf16.msra.mxu0 0
        %2203 = vmatprep.subr.bf16.mxu0 0
        %2204 = vmatpush1.bf16.msra.mxu0 0
        %2205 = vmatprep.subr.bf16.mxu0 0
        %2206 = vmatpush1.bf16.msra.mxu0 0
        %2207 = vmatprep.subr.bf16.mxu0 0
        %2208 = vmatpush1.bf16.msra.mxu0 0
        %2209 = vmatprep.subr.bf16.mxu0 0
        %2210 = vmatpush1.bf16.msra.mxu0 0
        %2211 = vmatprep.subr.bf16.mxu0 0
        %2212 = vmatpush1.bf16.msra.mxu0 0
        %2213 = vmatprep.mubr.bf16.mxu0 0
        %2214 = vmatmul.mubr.bf16.gmra.mrb[0].mxu0 %v2115
        %v2215 = vpop.f32.mrb[0].mxu0
        %v2216 = vadd.f32 0.0, %v2215
        %v2217 = vpop.f32.mrb[0].mxu0
        %v2218 = vpop.f32.mrb[0].mxu0
        %v2219 = vpop.f32.mrb[0].mxu0
        %2220 = vdwg.mxu0
        %v2237 = vunpack.c.l.b16 %v2054
        %v2238 = vunpack.c.l.b16 %v2055
        %v2239 = vunpack.c.l.b16 %v2056
        %v2240 = vunpack.c.l.b16 %v2057
        %v2241 = vunpack.c.l.b16 %v2058
        %v2242 = vunpack.c.l.b16 %v2059
        %v2243 = vunpack.c.l.b16 %v2060
        %v2244 = vunpack.c.l.b16 %v2061
        %v2245 = vunpack.c.l.b16 %v2062
        %v2246 = vunpack.c.l.b16 %v2063
        %v2247 = vunpack.c.l.b16 %v2064
        %v2248 = vunpack.c.l.b16 %v2065
        %v2249 = vunpack.c.l.b16 %v2066
        %v2250 = vunpack.c.l.b16 %v2067
        %v2251 = vunpack.c.l.b16 %v2068
        %v2252 = vunpack.c.l.b16 %v2069
        %v2253 = vpack.c.b16 %v2238, %v2237
        %v2254 = vpack.c.b16 %v2240, %v2239
        %v2255 = vpack.c.b16 %v2242, %v2241
        %v2256 = vpack.c.b16 %v2244, %v2243
        %v2257 = vpack.c.b16 %v2246, %v2245
        %v2258 = vpack.c.b16 %v2248, %v2247
        %v2259 = vpack.c.b16 %v2250, %v2249
        %v2260 = vpack.c.b16 %v2252, %v2251
        %2269 = vmatprep.subr.bf16.mxu0 0
        %2270 = vmatpush1.bf16.msra.mxu0 %v2253
        %2271 = vmatprep.subr.bf16.mxu0 0
        %2272 = vmatpush1.bf16.msra.mxu0 %v2254
        %2273 = vmatprep.subr.bf16.mxu0 0
        %2274 = vmatpush1.bf16.msra.mxu0 %v2255
        %2275 = vmatprep.subr.bf16.mxu0 0
        %2276 = vmatpush1.bf16.msra.mxu0 %v2256
        %2277 = vmatprep.subr.bf16.mxu0 0
        %2278 = vmatpush1.bf16.msra.mxu0 %v2257
        %2279 = vmatprep.subr.bf16.mxu0 0
        %2280 = vmatpush1.bf16.msra.mxu0 %v2258
        %2281 = vmatprep.subr.bf16.mxu0 0
        %2282 = vmatpush1.bf16.msra.mxu0 %v2259
        %2283 = vmatprep.subr.bf16.mxu0 0
        %2284 = vmatpush1.bf16.msra.mxu0 %v2260
        %2285 = vmatprep.subr.bf16.mxu0 0
        %2286 = vmatpush1.bf16.msra.mxu0 0
        %2287 = vmatprep.subr.bf16.mxu0 0
        %2288 = vmatpush1.bf16.msra.mxu0 0
        %2289 = vmatprep.subr.bf16.mxu0 0
        %2290 = vmatpush1.bf16.msra.mxu0 0
        %2291 = vmatprep.subr.bf16.mxu0 0
        %2292 = vmatpush1.bf16.msra.mxu0 0
        %2293 = vmatprep.subr.bf16.mxu0 0
        %2294 = vmatpush1.bf16.msra.mxu0 0
        %2295 = vmatprep.subr.bf16.mxu0 0
        %2296 = vmatpush1.bf16.msra.mxu0 0
        %2297 = vmatprep.subr.bf16.mxu0 0
        %2298 = vmatpush1.bf16.msra.mxu0 0
        %2299 = vmatprep.subr.bf16.mxu0 0
        %2300 = vmatpush1.bf16.msra.mxu0 0
        %2301 = vmatprep.mubr.bf16.mxu0 0
        %2302 = vmatmul.mubr.bf16.gmra.mrb[0].mxu0 %v2053
        %v2303 = vpop.f32.mrb[0].mxu0
        %v2304 = vadd.f32 %v2216, %v2303
        %v2305 = vpop.f32.mrb[0].mxu0
        %v2306 = vpop.f32.mrb[0].mxu0
        %v2307 = vpop.f32.mrb[0].mxu0
        %2308 = vdwg.mxu0
        %s2309 = scalar_lea.vmem %s10, 8
        %v2310 = vld [vmem:[%s2309] sm:$0xf]
        %v2312 = vsel %vm2005, %v2310, 0
        %2314 = vmatprep.subr.bf16.mxu0 0
        %2315 = vmatpush1.bf16.msra.mxu0 %v2011
        %2316 = vmatprep.subr.bf16.mxu0 0
        %2317 = vmatpush1.bf16.msra.mxu0 0
        %2318 = vmatprep.subr.bf16.mxu0 0
        %2319 = vmatpush1.bf16.msra.mxu0 0
        %2320 = vmatprep.subr.bf16.mxu0 0
        %2321 = vmatpush1.bf16.msra.mxu0 0
        %2322 = vmatprep.subr.bf16.mxu0 0
        %2323 = vmatpush1.bf16.msra.mxu0 0
        %2324 = vmatprep.subr.bf16.mxu0 0
        %2325 = vmatpush1.bf16.msra.mxu0 0
        %2326 = vmatprep.subr.bf16.mxu0 0
        %2327 = vmatpush1.bf16.msra.mxu0 0
        %2328 = vmatprep.subr.bf16.mxu0 0
        %2329 = vmatpush1.bf16.msra.mxu0 0
        %2330 = vmatprep.subr.bf16.mxu0 0
        %2331 = vmatpush1.bf16.msra.mxu0 0
        %2332 = vmatprep.subr.bf16.mxu0 0
        %2333 = vmatpush1.bf16.msra.mxu0 0
        %2334 = vmatprep.subr.bf16.mxu0 0
        %2335 = vmatpush1.bf16.msra.mxu0 0
        %2336 = vmatprep.subr.bf16.mxu0 0
        %2337 = vmatpush1.bf16.msra.mxu0 0
        %2338 = vmatprep.subr.bf16.mxu0 0
        %2339 = vmatpush1.bf16.msra.mxu0 0
        %2340 = vmatprep.subr.bf16.mxu0 0
        %2341 = vmatpush1.bf16.msra.mxu0 0
        %2342 = vmatprep.subr.bf16.mxu0 0
        %2343 = vmatpush1.bf16.msra.mxu0 0
        %2344 = vmatprep.subr.bf16.mxu0 0
        %2345 = vmatpush1.bf16.msra.mxu0 0
        %2346 = vmatprep.mubr.bf16.mxu0 0
        %2347 = vmatmul.mubr.bf16.gmra.mrb[0].mxu0 %v2312
        %v2348 = vpop.f32.mrb[0].mxu0
        %v2349 = vadd.f32 0.0, %v2348
        %v2350 = vpop.f32.mrb[0].mxu0
        %v2351 = vpop.f32.mrb[0].mxu0
        %v2352 = vpop.f32.mrb[0].mxu0
        %2353 = vdwg.mxu0
        %v2354 = vpack.c.bf16 %v2349, %v2349
        %s2355 = scalar_lea.vmem %s11, 128
        %v2356 = vld [vmem:[%s2355] sm:$0xf]
        %v2357 = vld [vmem:[%s2355 + $0x4] sm:$0xf]
        %v2358 = vld [vmem:[%s2355 + $0x8] sm:$0xf]
        %v2359 = vld [vmem:[%s2355 + $0xc] sm:$0xf]
        %v2360 = vld [vmem:[%s2355 + $0x10] sm:$0xf]
        %v2361 = vld [vmem:[%s2355 + $0x14] sm:$0xf]
        %v2362 = vld [vmem:[%s2355 + $0x18] sm:$0xf]
        %v2363 = vld [vmem:[%s2355 + $0x1c] sm:$0xf]
        %v2364 = vld [vmem:[%s2355 + $0x20] sm:$0xf]
        %v2365 = vld [vmem:[%s2355 + $0x24] sm:$0xf]
        %v2366 = vld [vmem:[%s2355 + $0x28] sm:$0xf]
        %v2367 = vld [vmem:[%s2355 + $0x2c] sm:$0xf]
        %v2368 = vld [vmem:[%s2355 + $0x30] sm:$0xf]
        %v2369 = vld [vmem:[%s2355 + $0x34] sm:$0xf]
        %v2370 = vld [vmem:[%s2355 + $0x38] sm:$0xf]
        %v2371 = vld [vmem:[%s2355 + $0x3c] sm:$0xf]
        %v2388 = vunpack.c.l.b16 %v2356
        %v2389 = vunpack.c.l.b16 %v2357
        %v2390 = vunpack.c.l.b16 %v2358
        %v2391 = vunpack.c.l.b16 %v2359
        %v2392 = vunpack.c.l.b16 %v2360
        %v2393 = vunpack.c.l.b16 %v2361
        %v2394 = vunpack.c.l.b16 %v2362
        %v2395 = vunpack.c.l.b16 %v2363
        %v2396 = vunpack.c.l.b16 %v2364
        %v2397 = vunpack.c.l.b16 %v2365
        %v2398 = vunpack.c.l.b16 %v2366
        %v2399 = vunpack.c.l.b16 %v2367
        %v2400 = vunpack.c.l.b16 %v2368
        %v2401 = vunpack.c.l.b16 %v2369
        %v2402 = vunpack.c.l.b16 %v2370
        %v2403 = vunpack.c.l.b16 %v2371
        %v2404 = vpack.c.b16 %v2389, %v2388
        %v2405 = vpack.c.b16 %v2391, %v2390
        %v2406 = vpack.c.b16 %v2393, %v2392
        %v2407 = vpack.c.b16 %v2395, %v2394
        %v2408 = vpack.c.b16 %v2397, %v2396
        %v2409 = vpack.c.b16 %v2399, %v2398
        %v2410 = vpack.c.b16 %v2401, %v2400
        %v2411 = vpack.c.b16 %v2403, %v2402
        %2420 = vmatprep.subr.bf16.mxu0 0
        %2421 = vmatpush1.bf16.msra.mxu0 %v2404
        %2422 = vmatprep.subr.bf16.mxu0 0
        %2423 = vmatpush1.bf16.msra.mxu0 %v2405
        %2424 = vmatprep.subr.bf16.mxu0 0
        %2425 = vmatpush1.bf16.msra.mxu0 %v2406
        %2426 = vmatprep.subr.bf16.mxu0 0
        %2427 = vmatpush1.bf16.msra.mxu0 %v2407
        %2428 = vmatprep.subr.bf16.mxu0 0
        %2429 = vmatpush1.bf16.msra.mxu0 %v2408
        %2430 = vmatprep.subr.bf16.mxu0 0
        %2431 = vmatpush1.bf16.msra.mxu0 %v2409
        %2432 = vmatprep.subr.bf16.mxu0 0
        %2433 = vmatpush1.bf16.msra.mxu0 %v2410
        %2434 = vmatprep.subr.bf16.mxu0 0
        %2435 = vmatpush1.bf16.msra.mxu0 %v2411
        %2436 = vmatprep.subr.bf16.mxu0 0
        %2437 = vmatpush1.bf16.msra.mxu0 0
        %2438 = vmatprep.subr.bf16.mxu0 0
        %2439 = vmatpush1.bf16.msra.mxu0 0
        %2440 = vmatprep.subr.bf16.mxu0 0
        %2441 = vmatpush1.bf16.msra.mxu0 0
        %2442 = vmatprep.subr.bf16.mxu0 0
        %2443 = vmatpush1.bf16.msra.mxu0 0
        %2444 = vmatprep.subr.bf16.mxu0 0
        %2445 = vmatpush1.bf16.msra.mxu0 0
        %2446 = vmatprep.subr.bf16.mxu0 0
        %2447 = vmatpush1.bf16.msra.mxu0 0
        %2448 = vmatprep.subr.bf16.mxu0 0
        %2449 = vmatpush1.bf16.msra.mxu0 0
        %2450 = vmatprep.subr.bf16.mxu0 0
        %2451 = vmatpush1.bf16.msra.mxu0 0
        %2452 = vmatprep.mubr.bf16.mxu0 0
        %2453 = vmatmul.mubr.bf16.gmra.mrb[0].mxu0 %v2354
        %v2454 = vpop.f32.mrb[0].mxu0
        %v2455 = vadd.f32 0.0, %v2454
        %v2456 = vpop.f32.mrb[0].mxu0
        %v2457 = vpop.f32.mrb[0].mxu0
        %v2458 = vpop.f32.mrb[0].mxu0
        %2459 = vdwg.mxu0
        %v2460 = vadd.f32 %v2304, %v2455
        %v2461 = vld [vmem:[%s12] sm:$0x1]
        %v2463 = vlaneseq
        %v2464 = vshrl.u32 %v2463, 7
        %v2465 = vsub.s32 0, %v2464
        %v2466 = vrot.slane %v2461, %v2465
        %v2468 = vadd.f32 %v2460, %v2466
        %v2469 = vmul.f32 %v2468, 0.5
        %v2470 = vmul.f32 %v2468, 0.70710677
        %v2471 = verf.f32.pop %v2470
        %v2472 = vadd.f32 %v2471, 1.0
        %v2473 = vmul.f32 %v2469, %v2472
        %v2474 = vpack.c.bf16 %v2473, %v2473
        %v2475 = vld [vmem:[%s13] sm:$0x3]
        %v2477 = vsel %vm2005, %v2475, 0
        %v2480 = vsel %vm2009, %v2474, 0
        %2482 = vmatprep.subr.bf16.mxu0 0
        %2483 = vmatpush1.bf16.msra.mxu0 %v2480
        %2484 = vmatprep.subr.bf16.mxu0 0
        %2485 = vmatpush1.bf16.msra.mxu0 0
        %2486 = vmatprep.subr.bf16.mxu0 0
        %2487 = vmatpush1.bf16.msra.mxu0 0
        %2488 = vmatprep.subr.bf16.mxu0 0
        %2489 = vmatpush1.bf16.msra.mxu0 0
        %2490 = vmatprep.subr.bf16.mxu0 0
        %2491 = vmatpush1.bf16.msra.mxu0 0
        %2492 = vmatprep.subr.bf16.mxu0 0
        %2493 = vmatpush1.bf16.msra.mxu0 0
        %2494 = vmatprep.subr.bf16.mxu0 0
        %2495 = vmatpush1.bf16.msra.mxu0 0
        %2496 = vmatprep.subr.bf16.mxu0 0
        %2497 = vmatpush1.bf16.msra.mxu0 0
        %2498 = vmatprep.subr.bf16.mxu0 0
        %2499 = vmatpush1.bf16.msra.mxu0 0
        %2500 = vmatprep.subr.bf16.mxu0 0
        %2501 = vmatpush1.bf16.msra.mxu0 0
        %2502 = vmatprep.subr.bf16.mxu0 0
        %2503 = vmatpush1.bf16.msra.mxu0 0
        %2504 = vmatprep.subr.bf16.mxu0 0
        %2505 = vmatpush1.bf16.msra.mxu0 0
        %2506 = vmatprep.subr.bf16.mxu0 0
        %2507 = vmatpush1.bf16.msra.mxu0 0
        %2508 = vmatprep.subr.bf16.mxu0 0
        %2509 = vmatpush1.bf16.msra.mxu0 0
        %2510 = vmatprep.subr.bf16.mxu0 0
        %2511 = vmatpush1.bf16.msra.mxu0 0
        %2512 = vmatprep.subr.bf16.mxu0 0
        %2513 = vmatpush1.bf16.msra.mxu0 0
        %2514 = vmatprep.mubr.bf16.mxu0 0
        %2515 = vmatmul.mubr.bf16.gmra.mrb[0].mxu0 %v2477
        %v2516 = vpop.f32.mrb[0].mxu0
        %v2517 = vadd.f32 0.0, %v2516
        %v2518 = vpop.f32.mrb[0].mxu0
        %v2519 = vpop.f32.mrb[0].mxu0
        %v2520 = vpop.f32.mrb[0].mxu0
        %2521 = vdwg.mxu0
        %v2522 = vpack.c.bf16 %v2517, %v2517
        %v2523 = vld [vmem:[%s14] sm:$0xf]
        %v2524 = vld [vmem:[%s14 + $0x4] sm:$0xf]
        %v2525 = vld [vmem:[%s14 + $0x8] sm:$0xf]
        %v2526 = vld [vmem:[%s14 + $0xc] sm:$0xf]
        %v2527 = vld [vmem:[%s14 + $0x10] sm:$0xf]
        %v2528 = vld [vmem:[%s14 + $0x14] sm:$0xf]
        %v2529 = vld [vmem:[%s14 + $0x18] sm:$0xf]
        %v2530 = vld [vmem:[%s14 + $0x1c] sm:$0xf]
        %v2531 = vld [vmem:[%s14 + $0x20] sm:$0xf]
        %v2532 = vld [vmem:[%s14 + $0x24] sm:$0xf]
        %v2533 = vld [vmem:[%s14 + $0x28] sm:$0xf]
        %v2534 = vld [vmem:[%s14 + $0x2c] sm:$0xf]
        %v2535 = vld [vmem:[%s14 + $0x30] sm:$0xf]
        %v2536 = vld [vmem:[%s14 + $0x34] sm:$0xf]
        %v2537 = vld [vmem:[%s14 + $0x38] sm:$0xf]
        %v2538 = vld [vmem:[%s14 + $0x3c] sm:$0xf]
        %s2539 = scalar_lea.vmem %s13, 2
        %v2540 = vld [vmem:[%s2539] sm:$0x3]
        %v2542 = vsel %vm2005, %v2540, 0
        %2544 = vmatprep.subr.bf16.mxu0 0
        %2545 = vmatpush1.bf16.msra.mxu0 %v2480
        %2546 = vmatprep.subr.bf16.mxu0 0
        %2547 = vmatpush1.bf16.msra.mxu0 0
        %2548 = vmatprep.subr.bf16.mxu0 0
        %2549 = vmatpush1.bf16.msra.mxu0 0
        %2550 = vmatprep.subr.bf16.mxu0 0
        %2551 = vmatpush1.bf16.msra.mxu0 0
        %2552 = vmatprep.subr.bf16.mxu0 0
        %2553 = vmatpush1.bf16.msra.mxu0 0
        %2554 = vmatprep.subr.bf16.mxu0 0
        %2555 = vmatpush1.bf16.msra.mxu0 0
        %2556 = vmatprep.subr.bf16.mxu0 0
        %2557 = vmatpush1.bf16.msra.mxu0 0
        %2558 = vmatprep.subr.bf16.mxu0 0
        %2559 = vmatpush1.bf16.msra.mxu0 0
        %2560 = vmatprep.subr.bf16.mxu0 0
        %2561 = vmatpush1.bf16.msra.mxu0 0
        %2562 = vmatprep.subr.bf16.mxu0 0
        %2563 = vmatpush1.bf16.msra.mxu0 0
        %2564 = vmatprep.subr.bf16.mxu0 0
        %2565 = vmatpush1.bf16.msra.mxu0 0
        %2566 = vmatprep.subr.bf16.mxu0 0
        %2567 = vmatpush1.bf16.msra.mxu0 0
        %2568 = vmatprep.subr.bf16.mxu0 0
        %2569 = vmatpush1.bf16.msra.mxu0 0
        %2570 = vmatprep.subr.bf16.mxu0 0
        %2571 = vmatpush1.bf16.msra.mxu0 0
        %2572 = vmatprep.subr.bf16.mxu0 0
        %2573 = vmatpush1.bf16.msra.mxu0 0
        %2574 = vmatprep.subr.bf16.mxu0 0
        %2575 = vmatpush1.bf16.msra.mxu0 0
        %2576 = vmatprep.mubr.bf16.mxu0 0
        %2577 = vmatmul.mubr.bf16.gmra.mrb[0].mxu0 %v2542
        %v2578 = vpop.f32.mrb[0].mxu0
        %v2579 = vadd.f32 0.0, %v2578
        %v2580 = vpop.f32.mrb[0].mxu0
        %v2581 = vpop.f32.mrb[0].mxu0
        %v2582 = vpop.f32.mrb[0].mxu0
        %2583 = vdwg.mxu0
        %v2584 = vpack.c.bf16 %v2579, %v2579
        %s2585 = scalar_lea.vmem %s14, 64
        %v2586 = vld [vmem:[%s2585] sm:$0xf]
        %v2587 = vld [vmem:[%s2585 + $0x4] sm:$0xf]
        %v2588 = vld [vmem:[%s2585 + $0x8] sm:$0xf]
        %v2589 = vld [vmem:[%s2585 + $0xc] sm:$0xf]
        %v2590 = vld [vmem:[%s2585 + $0x10] sm:$0xf]
        %v2591 = vld [vmem:[%s2585 + $0x14] sm:$0xf]
        %v2592 = vld [vmem:[%s2585 + $0x18] sm:$0xf]
        %v2593 = vld [vmem:[%s2585 + $0x1c] sm:$0xf]
        %v2594 = vld [vmem:[%s2585 + $0x20] sm:$0xf]
        %v2595 = vld [vmem:[%s2585 + $0x24] sm:$0xf]
        %v2596 = vld [vmem:[%s2585 + $0x28] sm:$0xf]
        %v2597 = vld [vmem:[%s2585 + $0x2c] sm:$0xf]
        %v2598 = vld [vmem:[%s2585 + $0x30] sm:$0xf]
        %v2599 = vld [vmem:[%s2585 + $0x34] sm:$0xf]
        %v2600 = vld [vmem:[%s2585 + $0x38] sm:$0xf]
        %v2601 = vld [vmem:[%s2585 + $0x3c] sm:$0xf]
        %v2618 = vunpack.c.l.b16 %v2586
        %v2619 = vunpack.c.l.b16 %v2587
        %v2620 = vunpack.c.l.b16 %v2588
        %v2621 = vunpack.c.l.b16 %v2589
        %v2622 = vunpack.c.l.b16 %v2590
        %v2623 = vunpack.c.l.b16 %v2591
        %v2624 = vunpack.c.l.b16 %v2592
        %v2625 = vunpack.c.l.b16 %v2593
        %v2626 = vunpack.c.l.b16 %v2594
        %v2627 = vunpack.c.l.b16 %v2595
        %v2628 = vunpack.c.l.b16 %v2596
        %v2629 = vunpack.c.l.b16 %v2597
        %v2630 = vunpack.c.l.b16 %v2598
        %v2631 = vunpack.c.l.b16 %v2599
        %v2632 = vunpack.c.l.b16 %v2600
        %v2633 = vunpack.c.l.b16 %v2601
        %v2634 = vpack.c.b16 %v2619, %v2618
        %v2635 = vpack.c.b16 %v2621, %v2620
        %v2636 = vpack.c.b16 %v2623, %v2622
        %v2637 = vpack.c.b16 %v2625, %v2624
        %v2638 = vpack.c.b16 %v2627, %v2626
        %v2639 = vpack.c.b16 %v2629, %v2628
        %v2640 = vpack.c.b16 %v2631, %v2630
        %v2641 = vpack.c.b16 %v2633, %v2632
        %2650 = vmatprep.subr.bf16.mxu0 0
        %2651 = vmatpush1.bf16.msra.mxu0 %v2634
        %2652 = vmatprep.subr.bf16.mxu0 0
        %2653 = vmatpush1.bf16.msra.mxu0 %v2635
        %2654 = vmatprep.subr.bf16.mxu0 0
        %2655 = vmatpush1.bf16.msra.mxu0 %v2636
        %2656 = vmatprep.subr.bf16.mxu0 0
        %2657 = vmatpush1.bf16.msra.mxu0 %v2637
        %2658 = vmatprep.subr.bf16.mxu0 0
        %2659 = vmatpush1.bf16.msra.mxu0 %v2638
        %2660 = vmatprep.subr.bf16.mxu0 0
        %2661 = vmatpush1.bf16.msra.mxu0 %v2639
        %2662 = vmatprep.subr.bf16.mxu0 0
        %2663 = vmatpush1.bf16.msra.mxu0 %v2640
        %2664 = vmatprep.subr.bf16.mxu0 0
        %2665 = vmatpush1.bf16.msra.mxu0 %v2641
        %2666 = vmatprep.subr.bf16.mxu0 0
        %2667 = vmatpush1.bf16.msra.mxu0 0
        %2668 = vmatprep.subr.bf16.mxu0 0
        %2669 = vmatpush1.bf16.msra.mxu0 0
        %2670 = vmatprep.subr.bf16.mxu0 0
        %2671 = vmatpush1.bf16.msra.mxu0 0
        %2672 = vmatprep.subr.bf16.mxu0 0
        %2673 = vmatpush1.bf16.msra.mxu0 0
        %2674 = vmatprep.subr.bf16.mxu0 0
        %2675 = vmatpush1.bf16.msra.mxu0 0
        %2676 = vmatprep.subr.bf16.mxu0 0
        %2677 = vmatpush1.bf16.msra.mxu0 0
        %2678 = vmatprep.subr.bf16.mxu0 0
        %2679 = vmatpush1.bf16.msra.mxu0 0
        %2680 = vmatprep.subr.bf16.mxu0 0
        %2681 = vmatpush1.bf16.msra.mxu0 0
        %2682 = vmatprep.mubr.bf16.mxu0 0
        %2683 = vmatmul.mubr.bf16.gmra.mrb[0].mxu0 %v2584
        %v2684 = vpop.f32.mrb[0].mxu0
        %v2685 = vadd.f32 0.0, %v2684
        %v2686 = vpop.f32.mrb[0].mxu0
        %v2687 = vpop.f32.mrb[0].mxu0
        %v2688 = vpop.f32.mrb[0].mxu0
        %2689 = vdwg.mxu0
        %v2706 = vunpack.c.l.b16 %v2523
        %v2707 = vunpack.c.l.b16 %v2524
        %v2708 = vunpack.c.l.b16 %v2525
        %v2709 = vunpack.c.l.b16 %v2526
        %v2710 = vunpack.c.l.b16 %v2527
        %v2711 = vunpack.c.l.b16 %v2528
        %v2712 = vunpack.c.l.b16 %v2529
        %v2713 = vunpack.c.l.b16 %v2530
        %v2714 = vunpack.c.l.b16 %v2531
        %v2715 = vunpack.c.l.b16 %v2532
        %v2716 = vunpack.c.l.b16 %v2533
        %v2717 = vunpack.c.l.b16 %v2534
        %v2718 = vunpack.c.l.b16 %v2535
        %v2719 = vunpack.c.l.b16 %v2536
        %v2720 = vunpack.c.l.b16 %v2537
        %v2721 = vunpack.c.l.b16 %v2538
        %v2722 = vpack.c.b16 %v2707, %v2706
        %v2723 = vpack.c.b16 %v2709, %v2708
        %v2724 = vpack.c.b16 %v2711, %v2710
        %v2725 = vpack.c.b16 %v2713, %v2712
        %v2726 = vpack.c.b16 %v2715, %v2714
        %v2727 = vpack.c.b16 %v2717, %v2716
        %v2728 = vpack.c.b16 %v2719, %v2718
        %v2729 = vpack.c.b16 %v2721, %v2720
        %2738 = vmatprep.subr.bf16.mxu0 0
        %2739 = vmatpush1.bf16.msra.mxu0 %v2722
        %2740 = vmatprep.subr.bf16.mxu0 0
        %2741 = vmatpush1.bf16.msra.mxu0 %v2723
        %2742 = vmatprep.subr.bf16.mxu0 0
        %2743 = vmatpush1.bf16.msra.mxu0 %v2724
        %2744 = vmatprep.subr.bf16.mxu0 0
        %2745 = vmatpush1.bf16.msra.mxu0 %v2725
        %2746 = vmatprep.subr.bf16.mxu0 0
        %2747 = vmatpush1.bf16.msra.mxu0 %v2726
        %2748 = vmatprep.subr.bf16.mxu0 0
        %2749 = vmatpush1.bf16.msra.mxu0 %v2727
        %2750 = vmatprep.subr.bf16.mxu0 0
        %2751 = vmatpush1.bf16.msra.mxu0 %v2728
        %2752 = vmatprep.subr.bf16.mxu0 0
        %2753 = vmatpush1.bf16.msra.mxu0 %v2729
        %2754 = vmatprep.subr.bf16.mxu0 0
        %2755 = vmatpush1.bf16.msra.mxu0 0
        %2756 = vmatprep.subr.bf16.mxu0 0
        %2757 = vmatpush1.bf16.msra.mxu0 0
        %2758 = vmatprep.subr.bf16.mxu0 0
        %2759 = vmatpush1.bf16.msra.mxu0 0
        %2760 = vmatprep.subr.bf16.mxu0 0
        %2761 = vmatpush1.bf16.msra.mxu0 0
        %2762 = vmatprep.subr.bf16.mxu0 0
        %2763 = vmatpush1.bf16.msra.mxu0 0
        %2764 = vmatprep.subr.bf16.mxu0 0
        %2765 = vmatpush1.bf16.msra.mxu0 0
        %2766 = vmatprep.subr.bf16.mxu0 0
        %2767 = vmatpush1.bf16.msra.mxu0 0
        %2768 = vmatprep.subr.bf16.mxu0 0
        %2769 = vmatpush1.bf16.msra.mxu0 0
        %2770 = vmatprep.mubr.bf16.mxu0 0
        %2771 = vmatmul.mubr.bf16.gmra.mrb[0].mxu0 %v2522
        %v2772 = vpop.f32.mrb[0].mxu0
        %v2773 = vadd.f32 %v2685, %v2772
        %v2774 = vpop.f32.mrb[0].mxu0
        %v2775 = vpop.f32.mrb[0].mxu0
        %v2776 = vpop.f32.mrb[0].mxu0
        %2777 = vdwg.mxu0
        %s2778 = scalar_lea.vmem %s13, 4
        %v2779 = vld [vmem:[%s2778] sm:$0x3]
        %v2781 = vsel %vm2005, %v2779, 0
        %2783 = vmatprep.subr.bf16.mxu0 0
        %2784 = vmatpush1.bf16.msra.mxu0 %v2480
        %2785 = vmatprep.subr.bf16.mxu0 0
        %2786 = vmatpush1.bf16.msra.mxu0 0
        %2787 = vmatprep.subr.bf16.mxu0 0
        %2788 = vmatpush1.bf16.msra.mxu0 0
        %2789 = vmatprep.subr.bf16.mxu0 0
        %2790 = vmatpush1.bf16.msra.mxu0 0
        %2791 = vmatprep.subr.bf16.mxu0 0
        %2792 = vmatpush1.bf16.msra.mxu0 0
        %2793 = vmatprep.subr.bf16.mxu0 0
        %2794 = vmatpush1.bf16.msra.mxu0 0
        %2795 = vmatprep.subr.bf16.mxu0 0
        %2796 = vmatpush1.bf16.msra.mxu0 0
        %2797 = vmatprep.subr.bf16.mxu0 0
        %2798 = vmatpush1.bf16.msra.mxu0 0
        %2799 = vmatprep.subr.bf16.mxu0 0
        %2800 = vmatpush1.bf16.msra.mxu0 0
        %2801 = vmatprep.subr.bf16.mxu0 0
        %2802 = vmatpush1.bf16.msra.mxu0 0
        %2803 = vmatprep.subr.bf16.mxu0 0
        %2804 = vmatpush1.bf16.msra.mxu0 0
        %2805 = vmatprep.subr.bf16.mxu0 0
        %2806 = vmatpush1.bf16.msra.mxu0 0
        %2807 = vmatprep.subr.bf16.mxu0 0
        %2808 = vmatpush1.bf16.msra.mxu0 0
        %2809 = vmatprep.subr.bf16.mxu0 0
        %2810 = vmatpush1.bf16.msra.mxu0 0
        %2811 = vmatprep.subr.bf16.mxu0 0
        %2812 = vmatpush1.bf16.msra.mxu0 0
        %2813 = vmatprep.subr.bf16.mxu0 0
        %2814 = vmatpush1.bf16.msra.mxu0 0
        %2815 = vmatprep.mubr.bf16.mxu0 0
        %2816 = vmatmul.mubr.bf16.gmra.mrb[0].mxu0 %v2781
        %v2817 = vpop.f32.mrb[0].mxu0
        %v2818 = vadd.f32 0.0, %v2817
        %v2819 = vpop.f32.mrb[0].mxu0
        %v2820 = vpop.f32.mrb[0].mxu0
        %v2821 = vpop.f32.mrb[0].mxu0
        %2822 = vdwg.mxu0
        %v2823 = vpack.c.bf16 %v2818, %v2818
        %s2824 = scalar_lea.vmem %s14, 128
        %v2825 = vld [vmem:[%s2824] sm:$0xf]
        %v2826 = vld [vmem:[%s2824 + $0x4] sm:$0xf]
        %v2827 = vld [vmem:[%s2824 + $0x8] sm:$0xf]
        %v2828 = vld [vmem:[%s2824 + $0xc] sm:$0xf]
        %v2829 = vld [vmem:[%s2824 + $0x10] sm:$0xf]
        %v2830 = vld [vmem:[%s2824 + $0x14] sm:$0xf]
        %v2831 = vld [vmem:[%s2824 + $0x18] sm:$0xf]
        %v2832 = vld [vmem:[%s2824 + $0x1c] sm:$0xf]
        %v2833 = vld [vmem:[%s2824 + $0x20] sm:$0xf]
        %v2834 = vld [vmem:[%s2824 + $0x24] sm:$0xf]
        %v2835 = vld [vmem:[%s2824 + $0x28] sm:$0xf]
        %v2836 = vld [vmem:[%s2824 + $0x2c] sm:$0xf]
        %v2837 = vld [vmem:[%s2824 + $0x30] sm:$0xf]
        %v2838 = vld [vmem:[%s2824 + $0x34] sm:$0xf]
        %v2839 = vld [vmem:[%s2824 + $0x38] sm:$0xf]
        %v2840 = vld [vmem:[%s2824 + $0x3c] sm:$0xf]
        %v2857 = vunpack.c.l.b16 %v2825
        %v2858 = vunpack.c.l.b16 %v2826
        %v2859 = vunpack.c.l.b16 %v2827
        %v2860 = vunpack.c.l.b16 %v2828
        %v2861 = vunpack.c.l.b16 %v2829
        %v2862 = vunpack.c.l.b16 %v2830
        %v2863 = vunpack.c.l.b16 %v2831
        %v2864 = vunpack.c.l.b16 %v2832
        %v2865 = vunpack.c.l.b16 %v2833
        %v2866 = vunpack.c.l.b16 %v2834
        %v2867 = vunpack.c.l.b16 %v2835
        %v2868 = vunpack.c.l.b16 %v2836
        %v2869 = vunpack.c.l.b16 %v2837
        %v2870 = vunpack.c.l.b16 %v2838
        %v2871 = vunpack.c.l.b16 %v2839
        %v2872 = vunpack.c.l.b16 %v2840
        %v2873 = vpack.c.b16 %v2858, %v2857
        %v2874 = vpack.c.b16 %v2860, %v2859
        %v2875 = vpack.c.b16 %v2862, %v2861
        %v2876 = vpack.c.b16 %v2864, %v2863
        %v2877 = vpack.c.b16 %v2866, %v2865
        %v2878 = vpack.c.b16 %v2868, %v2867
        %v2879 = vpack.c.b16 %v2870, %v2869
        %v2880 = vpack.c.b16 %v2872, %v2871
        %2889 = vmatprep.subr.bf16.mxu0 0
        %2890 = vmatpush1.bf16.msra.mxu0 %v2873
        %2891 = vmatprep.subr.bf16.mxu0 0
        %2892 = vmatpush1.bf16.msra.mxu0 %v2874
        %2893 = vmatprep.subr.bf16.mxu0 0
        %2894 = vmatpush1.bf16.msra.mxu0 %v2875
        %2895 = vmatprep.subr.bf16.mxu0 0
        %2896 = vmatpush1.bf16.msra.mxu0 %v2876
        %2897 = vmatprep.subr.bf16.mxu0 0
        %2898 = vmatpush1.bf16.msra.mxu0 %v2877
        %2899 = vmatprep.subr.bf16.mxu0 0
        %2900 = vmatpush1.bf16.msra.mxu0 %v2878
        %2901 = vmatprep.subr.bf16.mxu0 0
        %2902 = vmatpush1.bf16.msra.mxu0 %v2879
        %2903 = vmatprep.subr.bf16.mxu0 0
        %2904 = vmatpush1.bf16.msra.mxu0 %v2880
        %2905 = vmatprep.subr.bf16.mxu0 0
        %2906 = vmatpush1.bf16.msra.mxu0 0
        %2907 = vmatprep.subr.bf16.mxu0 0
        %2908 = vmatpush1.bf16.msra.mxu0 0
        %2909 = vmatprep.subr.bf16.mxu0 0
        %2910 = vmatpush1.bf16.msra.mxu0 0
        %2911 = vmatprep.subr.bf16.mxu0 0
        %2912 = vmatpush1.bf16.msra.mxu0 0
        %2913 = vmatprep.subr.bf16.mxu0 0
        %2914 = vmatpush1.bf16.msra.mxu0 0
        %2915 = vmatprep.subr.bf16.mxu0 0
        %2916 = vmatpush1.bf16.msra.mxu0 0
        %2917 = vmatprep.subr.bf16.mxu0 0
        %2918 = vmatpush1.bf16.msra.mxu0 0
        %2919 = vmatprep.subr.bf16.mxu0 0
        %2920 = vmatpush1.bf16.msra.mxu0 0
        %2921 = vmatprep.mubr.bf16.mxu0 0
        %2922 = vmatmul.mubr.bf16.gmra.mrb[0].mxu0 %v2823
        %v2923 = vpop.f32.mrb[0].mxu0
        %v2924 = vadd.f32 0.0, %v2923
        %v2925 = vpop.f32.mrb[0].mxu0
        %v2926 = vpop.f32.mrb[0].mxu0
        %v2927 = vpop.f32.mrb[0].mxu0
        %2928 = vdwg.mxu0
        %v2929 = vadd.f32 %v2773, %v2924
        %v2930 = vld [vmem:[%s15] sm:$0x1]
        %v2932 = vlaneseq
        %v2933 = vshrl.u32 %v2932, 7
        %v2934 = vsub.s32 0, %v2933
        %v2935 = vrot.slane %v2930, %v2934
        %v2937 = vadd.f32 %v2929, %v2935
        %v2938 = vmul.f32 %v2937, 0.5
        %v2939 = vmul.f32 %v2937, 0.70710677
        %v2940 = verf.f32.pop %v2939
        %v2941 = vadd.f32 %v2940, 1.0
        %v2942 = vmul.f32 %v2938, %v2941
        %v2943 = vpack.c.bf16 %v2942, %v2942
        %v2944 = vld [vmem:[%s17] sm:$0x1]
        %v2945 = vld [vmem:[%s16] sm:$0xf]
        %v2946 = vld [vmem:[%s16 + $0x4] sm:$0xf]
        %v2947 = vld [vmem:[%s16 + $0x8] sm:$0xf]
        %v2948 = vld [vmem:[%s16 + $0xc] sm:$0xf]
        %v2949 = vld [vmem:[%s16 + $0x10] sm:$0xf]
        %v2950 = vld [vmem:[%s16 + $0x14] sm:$0xf]
        %v2951 = vld [vmem:[%s16 + $0x18] sm:$0xf]
        %v2952 = vld [vmem:[%s16 + $0x1c] sm:$0xf]
        %v2961 = vunpack.c.l.b16 %v2945
        %v2962 = vunpack.c.l.b16 %v2946
        %v2963 = vunpack.c.l.b16 %v2947
        %v2964 = vunpack.c.l.b16 %v2948
        %v2965 = vunpack.c.l.b16 %v2949
        %v2966 = vunpack.c.l.b16 %v2950
        %v2967 = vunpack.c.l.b16 %v2951
        %v2968 = vunpack.c.l.b16 %v2952
        %v2969 = vpack.c.b16 %v2962, %v2961
        %v2970 = vpack.c.b16 %v2964, %v2963
        %v2971 = vpack.c.b16 %v2966, %v2965
        %v2972 = vpack.c.b16 %v2968, %v2967
        %vm2977 = vcmask 523264
        %v2979 = vsel %vm2977, %v2943, 0
        %2981 = vmatprep.subr.bf16.mxu0 0
        %2982 = vmatpush1.bf16.msra.mxu0 %v2969
        %2983 = vmatprep.subr.bf16.mxu0 0
        %2984 = vmatpush1.bf16.msra.mxu0 %v2970
        %2985 = vmatprep.subr.bf16.mxu0 0
        %2986 = vmatpush1.bf16.msra.mxu0 %v2971
        %2987 = vmatprep.subr.bf16.mxu0 0
        %2988 = vmatpush1.bf16.msra.mxu0 %v2972
        %2989 = vmatprep.subr.bf16.mxu0 0
        %2990 = vmatpush1.bf16.msra.mxu0 0
        %2991 = vmatprep.subr.bf16.mxu0 0
        %2992 = vmatpush1.bf16.msra.mxu0 0
        %2993 = vmatprep.subr.bf16.mxu0 0
        %2994 = vmatpush1.bf16.msra.mxu0 0
        %2995 = vmatprep.subr.bf16.mxu0 0
        %2996 = vmatpush1.bf16.msra.mxu0 0
        %2997 = vmatprep.subr.bf16.mxu0 0
        %2998 = vmatpush1.bf16.msra.mxu0 0
        %2999 = vmatprep.subr.bf16.mxu0 0
        %3000 = vmatpush1.bf16.msra.mxu0 0
        %3001 = vmatprep.subr.bf16.mxu0 0
        %3002 = vmatpush1.bf16.msra.mxu0 0
        %3003 = vmatprep.subr.bf16.mxu0 0
        %3004 = vmatpush1.bf16.msra.mxu0 0
        %3005 = vmatprep.subr.bf16.mxu0 0
        %3006 = vmatpush1.bf16.msra.mxu0 0
        %3007 = vmatprep.subr.bf16.mxu0 0
        %3008 = vmatpush1.bf16.msra.mxu0 0
        %3009 = vmatprep.subr.bf16.mxu0 0
        %3010 = vmatpush1.bf16.msra.mxu0 0
        %3011 = vmatprep.subr.bf16.mxu0 0
        %3012 = vmatpush1.bf16.msra.mxu0 0
        %3013 = vmatprep.mubr.bf16.mxu0 0
        %3014 = vmatmul.mubr.bf16.gmra.mrb[0].mxu0 %v2979
        %v3015 = vpop.f32.mrb[0].mxu0
        %v3016 = vadd.f32 0.0, %v3015
        %v3017 = vpop.f32.mrb[0].mxu0
        %v3018 = vpop.f32.mrb[0].mxu0
        %v3019 = vpop.f32.mrb[0].mxu0
        %3020 = vdwg.mxu0
        %v3021 = vadd.f32 %v2944, %v3016
        %s3022 = scalar_lea.vmem %s16, 32
        %v3023 = vld [vmem:[%s3022] sm:$0xf]
        %v3024 = vld [vmem:[%s3022 + $0x4] sm:$0xf]
        %v3025 = vld [vmem:[%s3022 + $0x8] sm:$0xf]
        %v3026 = vld [vmem:[%s3022 + $0xc] sm:$0xf]
        %v3027 = vld [vmem:[%s3022 + $0x10] sm:$0xf]
        %v3028 = vld [vmem:[%s3022 + $0x14] sm:$0xf]
        %v3029 = vld [vmem:[%s3022 + $0x18] sm:$0xf]
        %v3030 = vld [vmem:[%s3022 + $0x1c] sm:$0xf]
        %v3039 = vunpack.c.l.b16 %v3023
        %v3040 = vunpack.c.l.b16 %v3024
        %v3041 = vunpack.c.l.b16 %v3025
        %v3042 = vunpack.c.l.b16 %v3026
        %v3043 = vunpack.c.l.b16 %v3027
        %v3044 = vunpack.c.l.b16 %v3028
        %v3045 = vunpack.c.l.b16 %v3029
        %v3046 = vunpack.c.l.b16 %v3030
        %v3047 = vpack.c.b16 %v3040, %v3039
        %v3048 = vpack.c.b16 %v3042, %v3041
        %v3049 = vpack.c.b16 %v3044, %v3043
        %v3050 = vpack.c.b16 %v3046, %v3045
        %3055 = vmatprep.subr.bf16.mxu0 0
        %3056 = vmatpush1.bf16.msra.mxu0 %v3047
        %3057 = vmatprep.subr.bf16.mxu0 0
        %3058 = vmatpush1.bf16.msra.mxu0 %v3048
        %3059 = vmatprep.subr.bf16.mxu0 0
        %3060 = vmatpush1.bf16.msra.mxu0 %v3049
        %3061 = vmatprep.subr.bf16.mxu0 0
        %3062 = vmatpush1.bf16.msra.mxu0 %v3050
        %3063 = vmatprep.subr.bf16.mxu0 0
        %3064 = vmatpush1.bf16.msra.mxu0 0
        %3065 = vmatprep.subr.bf16.mxu0 0
        %3066 = vmatpush1.bf16.msra.mxu0 0
        %3067 = vmatprep.subr.bf16.mxu0 0
        %3068 = vmatpush1.bf16.msra.mxu0 0
        %3069 = vmatprep.subr.bf16.mxu0 0
        %3070 = vmatpush1.bf16.msra.mxu0 0
        %3071 = vmatprep.subr.bf16.mxu0 0
        %3072 = vmatpush1.bf16.msra.mxu0 0
        %3073 = vmatprep.subr.bf16.mxu0 0
        %3074 = vmatpush1.bf16.msra.mxu0 0
        %3075 = vmatprep.subr.bf16.mxu0 0
        %3076 = vmatpush1.bf16.msra.mxu0 0
        %3077 = vmatprep.subr.bf16.mxu0 0
        %3078 = vmatpush1.bf16.msra.mxu0 0
        %3079 = vmatprep.subr.bf16.mxu0 0
        %3080 = vmatpush1.bf16.msra.mxu0 0
        %3081 = vmatprep.subr.bf16.mxu0 0
        %3082 = vmatpush1.bf16.msra.mxu0 0
        %3083 = vmatprep.subr.bf16.mxu0 0
        %3084 = vmatpush1.bf16.msra.mxu0 0
        %3085 = vmatprep.subr.bf16.mxu0 0
        %3086 = vmatpush1.bf16.msra.mxu0 0
        %3087 = vmatprep.mubr.bf16.mxu0 0
        %3088 = vmatmul.mubr.bf16.gmra.mrb[0].mxu0 %v2979
        %v3089 = vpop.f32.mrb[0].mxu0
        %v3090 = vadd.f32 0.0, %v3089
        %v3091 = vpop.f32.mrb[0].mxu0
        %v3092 = vpop.f32.mrb[0].mxu0
        %v3093 = vpop.f32.mrb[0].mxu0
        %3094 = vdwg.mxu0
        %v3097 = vunpack.c.l.s4 1966171168
        %v3098 = vunpack.c.0.s8 %v3097
        %v3099 = vlaneseq
        %v3100 = vshrl.u32 %v3099, 7
        %v3101 = vsub.s32 %v3098, %v3100
        %v3102 = vrot.slane %v3090, %v3101
        %v3103 = vcombine.high %v3102, %v3102
        %v3105 = vunpack.c.l.s4 1966171168
        %v3106 = vunpack.c.0.s8 %v3105
        %v3107 = vlaneseq
        %v3108 = vshrl.u32 %v3107, 7
        %v3109 = vsub.s32 %v3106, %v3108
        %v3110 = vrot.slane %v3103, %v3109
        %v3112 = vadd.f32 %v3021, %v3110
        %s3113 = scalar_lea.vmem %s16, 64
        %v3114 = vld [vmem:[%s3113] sm:$0xf]
        %v3115 = vld [vmem:[%s3113 + $0x4] sm:$0xf]
        %v3116 = vld [vmem:[%s3113 + $0x8] sm:$0xf]
        %v3117 = vld [vmem:[%s3113 + $0xc] sm:$0xf]
        %v3118 = vld [vmem:[%s3113 + $0x10] sm:$0xf]
        %v3119 = vld [vmem:[%s3113 + $0x14] sm:$0xf]
        %v3120 = vld [vmem:[%s3113 + $0x18] sm:$0xf]
        %v3121 = vld [vmem:[%s3113 + $0x1c] sm:$0xf]
        %v3130 = vunpack.c.l.b16 %v3114
        %v3131 = vunpack.c.l.b16 %v3115
        %v3132 = vunpack.c.l.b16 %v3116
        %v3133 = vunpack.c.l.b16 %v3117
        %v3134 = vunpack.c.l.b16 %v3118
        %v3135 = vunpack.c.l.b16 %v3119
        %v3136 = vunpack.c.l.b16 %v3120
        %v3137 = vunpack.c.l.b16 %v3121
        %v3138 = vpack.c.b16 %v3131, %v3130
        %v3139 = vpack.c.b16 %v3133, %v3132
        %v3140 = vpack.c.b16 %v3135, %v3134
        %v3141 = vpack.c.b16 %v3137, %v3136
        %3146 = vmatprep.subr.bf16.mxu0 0
        %3147 = vmatpush1.bf16.msra.mxu0 %v3138
        %3148 = vmatprep.subr.bf16.mxu0 0
        %3149 = vmatpush1.bf16.msra.mxu0 %v3139
        %3150 = vmatprep.subr.bf16.mxu0 0
        %3151 = vmatpush1.bf16.msra.mxu0 %v3140
        %3152 = vmatprep.subr.bf16.mxu0 0
        %3153 = vmatpush1.bf16.msra.mxu0 %v3141
        %3154 = vmatprep.subr.bf16.mxu0 0
        %3155 = vmatpush1.bf16.msra.mxu0 0
        %3156 = vmatprep.subr.bf16.mxu0 0
        %3157 = vmatpush1.bf16.msra.mxu0 0
        %3158 = vmatprep.subr.bf16.mxu0 0
        %3159 = vmatpush1.bf16.msra.mxu0 0
        %3160 = vmatprep.subr.bf16.mxu0 0
        %3161 = vmatpush1.bf16.msra.mxu0 0
        %3162 = vmatprep.subr.bf16.mxu0 0
        %3163 = vmatpush1.bf16.msra.mxu0 0
        %3164 = vmatprep.subr.bf16.mxu0 0
        %3165 = vmatpush1.bf16.msra.mxu0 0
        %3166 = vmatprep.subr.bf16.mxu0 0
        %3167 = vmatpush1.bf16.msra.mxu0 0
        %3168 = vmatprep.subr.bf16.mxu0 0
        %3169 = vmatpush1.bf16.msra.mxu0 0
        %3170 = vmatprep.subr.bf16.mxu0 0
        %3171 = vmatpush1.bf16.msra.mxu0 0
        %3172 = vmatprep.subr.bf16.mxu0 0
        %3173 = vmatpush1.bf16.msra.mxu0 0
        %3174 = vmatprep.subr.bf16.mxu0 0
        %3175 = vmatpush1.bf16.msra.mxu0 0
        %3176 = vmatprep.subr.bf16.mxu0 0
        %3177 = vmatpush1.bf16.msra.mxu0 0
        %3178 = vmatprep.mubr.bf16.mxu0 0
        %3179 = vmatmul.mubr.bf16.gmra.mrb[0].mxu0 %v2979
        %v3180 = vpop.f32.mrb[0].mxu0
        %v3181 = vadd.f32 0.0, %v3180
        %v3182 = vpop.f32.mrb[0].mxu0
        %v3183 = vpop.f32.mrb[0].mxu0
        %v3184 = vpop.f32.mrb[0].mxu0
        %3185 = vdwg.mxu0
        %v3188 = vunpack.c.l.s4 1966171168
        %v3189 = vunpack.c.0.s8 %v3188
        %v3190 = vlaneseq
        %v3191 = vshrl.u32 %v3190, 7
        %v3192 = vsub.s32 %v3189, %v3191
        %v3193 = vrot.slane %v3181, %v3192
        %v3195 = vunpack.c.l.s4 1966171168
        %v3196 = vunpack.c.0.s8 %v3195
        %v3197 = vlaneseq
        %v3198 = vshrl.u32 %v3197, 7
        %v3199 = vsub.s32 %v3196, %v3198
        %v3200 = vrot.slane %v3193, %v3199
        %v3201 = vcombine.high %v3200, %v3200
        %v3203 = vadd.f32 %v3112, %v3201
        %s3204 = scalar_lea.vmem %s16, 96
        %v3205 = vld [vmem:[%s3204] sm:$0xf]
        %v3206 = vld [vmem:[%s3204 + $0x4] sm:$0xf]
        %v3207 = vld [vmem:[%s3204 + $0x8] sm:$0xf]
        %v3208 = vld [vmem:[%s3204 + $0xc] sm:$0xf]
        %v3209 = vld [vmem:[%s3204 + $0x10] sm:$0xf]
        %v3210 = vld [vmem:[%s3204 + $0x14] sm:$0xf]
        %v3211 = vld [vmem:[%s3204 + $0x18] sm:$0xf]
        %v3212 = vld [vmem:[%s3204 + $0x1c] sm:$0xf]
        %v3221 = vunpack.c.l.b16 %v3205
        %v3222 = vunpack.c.l.b16 %v3206
        %v3223 = vunpack.c.l.b16 %v3207
        %v3224 = vunpack.c.l.b16 %v3208
        %v3225 = vunpack.c.l.b16 %v3209
        %v3226 = vunpack.c.l.b16 %v3210
        %v3227 = vunpack.c.l.b16 %v3211
        %v3228 = vunpack.c.l.b16 %v3212
        %v3229 = vpack.c.b16 %v3222, %v3221
        %v3230 = vpack.c.b16 %v3224, %v3223
        %v3231 = vpack.c.b16 %v3226, %v3225
        %v3232 = vpack.c.b16 %v3228, %v3227
        %3237 = vmatprep.subr.bf16.mxu0 0
        %3238 = vmatpush1.bf16.msra.mxu0 %v3229
        %3239 = vmatprep.subr.bf16.mxu0 0
        %3240 = vmatpush1.bf16.msra.mxu0 %v3230
        %3241 = vmatprep.subr.bf16.mxu0 0
        %3242 = vmatpush1.bf16.msra.mxu0 %v3231
        %3243 = vmatprep.subr.bf16.mxu0 0
        %3244 = vmatpush1.bf16.msra.mxu0 %v3232
        %3245 = vmatprep.subr.bf16.mxu0 0
        %3246 = vmatpush1.bf16.msra.mxu0 0
        %3247 = vmatprep.subr.bf16.mxu0 0
        %3248 = vmatpush1.bf16.msra.mxu0 0
        %3249 = vmatprep.subr.bf16.mxu0 0
        %3250 = vmatpush1.bf16.msra.mxu0 0
        %3251 = vmatprep.subr.bf16.mxu0 0
        %3252 = vmatpush1.bf16.msra.mxu0 0
        %3253 = vmatprep.subr.bf16.mxu0 0
        %3254 = vmatpush1.bf16.msra.mxu0 0
        %3255 = vmatprep.subr.bf16.mxu0 0
        %3256 = vmatpush1.bf16.msra.mxu0 0
        %3257 = vmatprep.subr.bf16.mxu0 0
        %3258 = vmatpush1.bf16.msra.mxu0 0
        %3259 = vmatprep.subr.bf16.mxu0 0
        %3260 = vmatpush1.bf16.msra.mxu0 0
        %3261 = vmatprep.subr.bf16.mxu0 0
        %3262 = vmatpush1.bf16.msra.mxu0 0
        %3263 = vmatprep.subr.bf16.mxu0 0
        %3264 = vmatpush1.bf16.msra.mxu0 0
        %3265 = vmatprep.subr.bf16.mxu0 0
        %3266 = vmatpush1.bf16.msra.mxu0 0
        %3267 = vmatprep.subr.bf16.mxu0 0
        %3268 = vmatpush1.bf16.msra.mxu0 0
        %3269 = vmatprep.mubr.bf16.mxu0 0
        %3270 = vmatmul.mubr.bf16.gmra.mrb[0].mxu0 %v2979
        %v3271 = vpop.f32.mrb[0].mxu0
        %v3272 = vadd.f32 0.0, %v3271
        %v3273 = vpop.f32.mrb[0].mxu0
        %v3274 = vpop.f32.mrb[0].mxu0
        %v3275 = vpop.f32.mrb[0].mxu0
        %3276 = vdwg.mxu0
        %v3279 = vunpack.c.l.s4 1966171168
        %v3280 = vunpack.c.0.s8 %v3279
        %v3281 = vlaneseq
        %v3282 = vshrl.u32 %v3281, 7
        %v3283 = vsub.s32 %v3280, %v3282
        %v3284 = vrot.slane %v3272, %v3283
        %v3285 = vcombine.high %v3284, %v3284
        %v3287 = vunpack.c.l.s4 1966171168
        %v3288 = vunpack.c.0.s8 %v3287
        %v3289 = vlaneseq
        %v3290 = vshrl.u32 %v3289, 7
        %v3291 = vsub.s32 %v3288, %v3290
        %v3292 = vrot.slane %v3285, %v3291
        %v3293 = vcombine.high %v3292, %v3292
        %v3295 = vadd.f32 %v3203, %v3293
        %vm3296 = vcmask 253952
        %3297 = vst.msk [vmem:[%s567] sm:$0x1] %vm3296, %v3295
        %s3298 = sand.u32 %s423, 1
        %s3299 = scalar_lea.sflag [#allocation3], %s3298
        %s3300 = sand.u32 %s423, 1
        %s3301 = scalar_lea.vmem [#allocation2], %s3300
        // Predicated region
        $region93: #{encoder_forward.1} parent=91 // pred_check
          %p3302 = pneg %p433
        $region94: #{encoder_forward.1} parent=91 // pred_check_branch
          %3304 = sbr.rel (%p3302) target = $region96
        $region95: #{encoder_forward.1} parent=91 // pred_region
          %s3306 = ssub.s32 16, 16
          %3307 = vsyncadd %s3299, %s3306
          %s3308 = smul.addr %s32, 16
          %s3309 = scalar_lea.hbm %s18, %s3308
          %s3311 = sshll.u32 %s3301, 4
          %s3312 = int_to_ptr.vmem [resolvable:$true] %s3311
          %3314 = dma.vmem_to_hbm [thread:$0]  %s3312, 16, %s3309, %s3299
        $region96: #{encoder_forward.1} parent=91 // pred_fallthru
          _
      $region92: #{encoder_forward.1} parent=5 // pred_fallthru
        _
      %p3315 = scmp.le.s32.totalorder 2, %s27
      // Predicated region
      $region97: #{encoder_forward.1} parent=5 // pred_check
        %p3316 = pneg %p3315
      $region98: #{encoder_forward.1} parent=5 // pred_check_branch
        %3318 = sbr.rel (%p3316) target = $region100
      $region99: #{encoder_forward.1} parent=5 // pred_region
        %s3319 = ssub.s32 %s27, 2
        // Predicated region
        $region101: #{encoder_forward.1} parent=99 // pred_check
          %p3320 = pneg %p439
        $region102: #{encoder_forward.1} parent=99 // pred_check_branch
          %3322 = sbr.rel (%p3320) target = $region104
        $region103: #{encoder_forward.1} parent=99 // pred_region
          %s3323 = sand.u32 %s424, 1
          %s3324 = scalar_lea.sflag [#allocation3], %s3323
          %s3325 = sand.u32 %s424, 1
          %s3326 = scalar_lea.vmem [#allocation2], %s3325
          %3327 = dma.done %s3324, 16
        $region104: #{encoder_forward.1} parent=99 // pred_fallthru
          _
      $region100: #{encoder_forward.1} parent=5 // pred_fallthru
        _
    $region6: #{encoder_forward.1} parent=1 // loop_footer
      %s31 = sadd.s32 1, %s27
    $region7: #{encoder_forward.1} parent=1 // loop_footer_branch
      %26 = sbr.rel target = $region3
    $region8: #{encoder_forward.1} parent=1 // loop_exit
      _
    %3328 = vsyncpa [#allocation3], 1
    %s3329 = scalar_lea.sflag [#allocation3], 1
    %3330 = vsyncpa %s3329, 1

</llo_original>
